<compile_context>
chip_gen: v7x
topology: tpu7x:2x2x1
jax: 0.10.0
libtpu: 0.0.40
codegen_flags: <defaults>
</compile_context>

<pallas_src>
import functools
import math

import jax
import jax.numpy as jnp
from jax import lax
from jax.experimental import pallas as pl
from jax.experimental.pallas import tpu as pltpu


_VMEM_LIMIT = 48 * 1024 * 1024   # raise scoped VMEM above the 16/32 MiB defaults; safe on v7x too


# ----------------------------- tile helpers -----------------------------

def _row_tile(m, target=512):
    """Sublane (second-to-last) tile: multiple of 8 or the full dim."""
    if m % 8 == 0:
        return min(m, target)
    return m


def _lane_tile(n, target=1024):
    """Lane (last) tile: multiple of 128 or the full dim."""
    if n % 128 == 0:
        return min(n, target)
    return n


def _k_tile(k, target=1024):
    """Reduction tile: must divide K exactly (avoid garbage in the accumulator)."""
    if k <= target:
        return k
    for cand in (target, 512, 256, 128):
        if cand <= target and k % cand == 0:
            return cand
    return k


def _pad_rows(x, mult=8):
    """Zero-pad the leading (row) dim up to a multiple of `mult` (rows are independent)."""
    m = x.shape[0]
    pad = (-m) % mult
    if pad:
        x = jnp.pad(x, ((0, pad),) + ((0, 0),) * (x.ndim - 1))
    return x


def _to_bf16(v):
    return v if v.dtype == jnp.bfloat16 else v.astype(jnp.bfloat16)


# ----------------------------- Pallas kernels -----------------------------

def _matmul_kernel(x_ref, w_ref, b_ref, *rest, activation, has_resid, nk):
    idx = 0
    r_ref = None
    if has_resid:
        r_ref = rest[idx]
        idx += 1
    o_ref = rest[idx]
    idx += 1
    acc_ref = rest[idx] if nk > 1 else None

    def finalize(acc):
        acc = acc + b_ref[...]
        if activation == "quick_gelu":            # CLIP QuickGELU: x * sigmoid(1.702 x)
            acc = acc * jax.nn.sigmoid(1.702 * acc)
        if r_ref is not None:
            acc = acc + r_ref[...].astype(jnp.float32)   # fused residual add
        o_ref[...] = acc.astype(o_ref.dtype)

    part = jnp.dot(_to_bf16(x_ref[...]), _to_bf16(w_ref[...]),
                   preferred_element_type=jnp.float32)
    if nk == 1:
        finalize(part)
    else:
        k = pl.program_id(2)

        @pl.when(k == 0)
        def _():
            acc_ref[...] = jnp.zeros_like(acc_ref)

        acc_ref[...] += part

        @pl.when(k == nk - 1)
        def _():
            finalize(acc_ref[...])


def matmul_bias(x, w, b=None, residual=None, activation=None, out_dtype=jnp.bfloat16,
                block_m=512, block_n=1024, block_k=1024):
    """out = activation(x @ w + b) [+ residual]; x:(M,K), w:(K,N) (bf16), b:(N,)."""
    M0, K = x.shape
    K2, N = w.shape
    assert K == K2
    if b is None:
        b = jnp.zeros((N,), jnp.float32)
    x = _pad_rows(x)
    if residual is not None:
        residual = _pad_rows(residual)
    M = x.shape[0]
    tm = _row_tile(M, block_m)
    tn = _lane_tile(N, block_n)
    tk = _k_tile(K, block_k)
    nk = pl.cdiv(K, tk)
    grid = (pl.cdiv(M, tm), pl.cdiv(N, tn), nk)

    in_specs = [pl.BlockSpec((tm, tk), lambda i, j, k: (i, k)),
                pl.BlockSpec((tk, tn), lambda i, j, k: (k, j)),
                pl.BlockSpec((1, tn), lambda i, j, k: (0, j))]
    args = [x, w, b.reshape(1, N)]
    if residual is not None:
        in_specs.append(pl.BlockSpec((tm, tn), lambda i, j, k: (i, j)))
        args.append(residual)

    out = pl.pallas_call(
        functools.partial(_matmul_kernel, activation=activation,
                          has_resid=residual is not None, nk=nk),
        out_shape=jax.ShapeDtypeStruct((M, N), out_dtype),
        grid=grid,
        in_specs=in_specs,
        out_specs=pl.BlockSpec((tm, tn), lambda i, j, k: (i, j)),
        scratch_shapes=[pltpu.VMEM((tm, tn), jnp.float32)] if nk > 1 else [],
        compiler_params=pltpu.CompilerParams(
            dimension_semantics=("parallel", "parallel", "arbitrary"),
            vmem_limit_bytes=_VMEM_LIMIT),
    )(*args)
    return out[:M0] if M != M0 else out


def _ln_matmul_kernel(x_ref, g_ref, bln_ref, w_ref, b_ref, o_ref, *scratch,
                      activation, eps, cache_ln):
    def compute_ln():
        x = x_ref[...].astype(jnp.float32)       # LN math in f32 regardless of stream dtype
        mean = jnp.mean(x, axis=-1, keepdims=True)
        c = x - mean
        var = jnp.mean(c * c, axis=-1, keepdims=True)
        return (c * lax.rsqrt(var + eps) * g_ref[...] + bln_ref[...]).astype(jnp.bfloat16)

    if cache_ln:
        # LN'd/bf16-cast row tile is computed once (j == 0) and reused for all N-tiles.
        y_ref, = scratch

        @pl.when(pl.program_id(1) == 0)
        def _():
            y_ref[...] = compute_ln()

        y = y_ref[...]
    else:
        y = compute_ln()

    acc = jnp.dot(y, _to_bf16(w_ref[...]), preferred_element_type=jnp.float32)
    acc = acc + b_ref[...]
    if activation == "quick_gelu":
        acc = acc * jax.nn.sigmoid(1.702 * acc)
    o_ref[...] = acc.astype(o_ref.dtype)


def ln_matmul_bias(x, g, bln, w, b=None, activation=None, eps=1e-5, out_dtype=jnp.bfloat16,
                   block_m=512, block_n=1024):
    """out = activation(layernorm(x; g, bln) @ w + b); x:(M,E), w:(E,N) (bf16)."""
    M0, E = x.shape
    E2, N = w.shape
    assert E == E2
    if b is None:
        b = jnp.zeros((N,), jnp.float32)
    x = _pad_rows(x)
    M = x.shape[0]
    tm = _row_tile(M, block_m)
    tn = _lane_tile(N, block_n)
    gm, gn = pl.cdiv(M, tm), pl.cdiv(N, tn)
    cache_ln = gn > 1
    out = pl.pallas_call(
        functools.partial(_ln_matmul_kernel, activation=activation, eps=eps,
                          cache_ln=cache_ln),
        out_shape=jax.ShapeDtypeStruct((M, N), out_dtype),
        grid=(gm, gn),
        in_specs=[pl.BlockSpec((tm, E), lambda i, j: (i, 0)),
                  pl.BlockSpec((1, E), lambda i, j: (0, 0)),
                  pl.BlockSpec((1, E), lambda i, j: (0, 0)),
                  pl.BlockSpec((E, tn), lambda i, j: (0, j)),
                  pl.BlockSpec((1, tn), lambda i, j: (0, j))],
        out_specs=pl.BlockSpec((tm, tn), lambda i, j: (i, j)),
        scratch_shapes=[pltpu.VMEM((tm, E), jnp.bfloat16)] if cache_ln else [],
        compiler_params=pltpu.CompilerParams(
            dimension_semantics=("parallel", "arbitrary") if cache_ln
            else ("parallel", "parallel"),
            vmem_limit_bytes=_VMEM_LIMIT),
    )(x, g.reshape(1, E), bln.reshape(1, E), w, b.reshape(1, N))
    return out[:M0] if M != M0 else out


def _pre_ln_kernel(x_ref, pos_ref, g_ref, b_ref, o_ref, *, eps):
    # pos-embed add fused into the pre-LN layernorm (one HBM pass instead of two).
    x = x_ref[0].astype(jnp.float32) + pos_ref[...]
    mean = jnp.mean(x, axis=-1, keepdims=True)
    c = x - mean
    var = jnp.mean(c * c, axis=-1, keepdims=True)
    o_ref[0] = (c * lax.rsqrt(var + eps) * g_ref[...] + b_ref[...]).astype(o_ref.dtype)


def pre_layernorm_add(h, pos, g, b, eps=1e-5):
    """out[b] = layernorm(h[b] + pos); h:(B,S,E), pos:(S,E)."""
    B, S, E = h.shape
    return pl.pallas_call(
        functools.partial(_pre_ln_kernel, eps=eps),
        out_shape=jax.ShapeDtypeStruct((B, S, E), jnp.bfloat16),
        grid=(B,),
        in_specs=[pl.BlockSpec((1, S, E), lambda i: (i, 0, 0)),
                  pl.BlockSpec((S, E), lambda i: (0, 0)),
                  pl.BlockSpec((1, E), lambda i: (0, 0)),
                  pl.BlockSpec((1, E), lambda i: (0, 0))],
        out_specs=pl.BlockSpec((1, S, E), lambda i: (i, 0, 0)),
        compiler_params=pltpu.CompilerParams(dimension_semantics=("parallel",),
                                             vmem_limit_bytes=_VMEM_LIMIT),
    )(h, pos, g.reshape(1, E), b.reshape(1, E))


def _attn_kernel(qkv_ref, o_ref, *, num_heads, scale, causal):
    qkv = qkv_ref[0]                       # (S, 3E), bf16, all heads lane-dense
    S = qkv.shape[0]
    E = qkv.shape[1] // 3
    D = E // num_heads
    if causal:
        row = lax.broadcasted_iota(jnp.int32, (S, S), 0)
        col = lax.broadcasted_iota(jnp.int32, (S, S), 1)
        keep = col <= row                  # causal mask built in-kernel (no mask DMA)
    for h in range(num_heads):             # static unroll over heads
        qh = qkv[:, h * D:(h + 1) * D]
        kh = qkv[:, E + h * D:E + (h + 1) * D]
        vh = qkv[:, 2 * E + h * D:2 * E + (h + 1) * D]
        s = lax.dot_general(qh, kh, (((1,), (1,)), ((), ())),
                            preferred_element_type=jnp.float32) * scale   # (S,S) = q @ k.T
        if causal:
            s = jnp.where(keep, s, -1e30)
        # TODO(synk): on v6e/v7x exp() on bf16 scores would double EUP throughput; kept f32
        # here so the same kernel is correct/fast on v5e (no bf16 EUP) as well.
        s = s - jnp.max(s, axis=-1, keepdims=True)
        p = jnp.exp(s)
        p = p * pl.reciprocal(jnp.sum(p, axis=-1, keepdims=True), approx=True)
        oh = jnp.dot(p.astype(jnp.bfloat16), vh, preferred_element_type=jnp.float32)
        # store each head directly into the lane-dense output block (no concatenate temp).
        o_ref[0, :, h * D:(h + 1) * D] = oh.astype(o_ref.dtype)


def mha_fused(qkv, num_heads, scale, causal):
    """qkv: (B, S, 3E) packed projections (bf16); one grid step per batch element."""
    B, S, E3 = qkv.shape
    E = E3 // 3
    return pl.pallas_call(
        functools.partial(_attn_kernel, num_heads=num_heads, scale=scale, causal=causal),
        out_shape=jax.ShapeDtypeStruct((B, S, E), jnp.bfloat16),
        grid=(B,),
        in_specs=[pl.BlockSpec((1, S, E3), lambda b: (b, 0, 0))],
        out_specs=pl.BlockSpec((1, S, E), lambda b: (b, 0, 0)),
        compiler_params=pltpu.CompilerParams(dimension_semantics=("parallel",),
                                             vmem_limit_bytes=_VMEM_LIMIT),
    )(qkv)


def _clip_logits_kernel(t_ref, i_ref, s_ref, lt_ref):
    t = t_ref[...]
    im = i_ref[...]
    tn = t * lax.rsqrt(jnp.sum(t * t, axis=-1, keepdims=True) + 1e-12)
    imn = im * lax.rsqrt(jnp.sum(im * im, axis=-1, keepdims=True) + 1e-12)
    logits = lax.dot_general(tn, imn, (((1,), (1,)), ((), ())),
                             preferred_element_type=jnp.float32)    # (Bt, Bi)
    lt_ref[...] = logits * jnp.exp(s_ref[...])


def clip_logits(text_embeds, image_embeds, logit_scale):
    """logits_per_text = exp(logit_scale) * normalize(text) @ normalize(image).T"""
    Bt, _ = text_embeds.shape
    Bi, _ = image_embeds.shape
    return pl.pallas_call(
        _clip_logits_kernel,
        out_shape=jax.ShapeDtypeStruct((Bt, Bi), jnp.float32),
        in_specs=[pl.BlockSpec(memory_space=pltpu.MemorySpace.VMEM),
                  pl.BlockSpec(memory_space=pltpu.MemorySpace.VMEM),
                  pl.BlockSpec(memory_space=pltpu.MemorySpace.VMEM)],
        out_specs=pl.BlockSpec(memory_space=pltpu.MemorySpace.VMEM),
    )(text_embeds, image_embeds, logit_scale.reshape(1, 1))


# ----------------------------- model (glue + kernels) -----------------------------

CLIP_MEAN = jnp.array([0.48145466, 0.4578275, 0.40821073], jnp.float32).reshape(1, 3, 1, 1)
CLIP_STD = jnp.array([0.26862954, 0.26130258, 0.27577711], jnp.float32).reshape(1, 3, 1, 1)


def preprocess(images, img_size):
    # TODO(synk): CLIPProcessor's resize-to-224 + center-crop + tokenization are host-side
    # preprocessing and are skipped; we keep the normalize step and the module's own
    # F.interpolate(..., size=(img_size, img_size)) (default 'nearest' mode).
    x = (images.astype(jnp.float32) - CLIP_MEAN) / CLIP_STD
    B, C, H, W = x.shape
    ih = (jnp.arange(img_size) * H // img_size).astype(jnp.int32)
    iw = (jnp.arange(img_size) * W // img_size).astype(jnp.int32)
    x = x[:, :, ih, :][:, :, :, iw]
    return x


def encoder_layer(h, lp, num_heads, causal):
    """HF CLIPEncoderLayer: pre-LN attention block + pre-LN QuickGELU MLP block (bf16 stream)."""
    B, S, E = h.shape
    D = E // num_heads
    scale = D ** -0.5
    h2d = h.reshape(B * S, E)

    # attention block: LN1 fused into the packed QKV matmul; residual fused into o-proj.
    qkv = ln_matmul_bias(h2d, lp["ln1_g"], lp["ln1_b"], lp["qkv_w"], lp["qkv_b"])
    attn = mha_fused(qkv.reshape(B, S, 3 * E), num_heads, scale, causal)
    h2d = matmul_bias(attn.reshape(B * S, E), lp["o_w"], lp["o_b"], residual=h2d)

    # MLP block: LN2 fused into FC1 (+QuickGELU); residual fused into FC2.
    x = ln_matmul_bias(h2d, lp["ln2_g"], lp["ln2_b"], lp["fc1_w"], lp["fc1_b"],
                       activation="quick_gelu")
    h2d = matmul_bias(x, lp["fc2_w"], lp["fc2_b"], residual=h2d)
    return h2d.reshape(B, S, E)


def vision_forward(params, config, pixel_values):
    vp = params["vision"]
    B, C, H, W = pixel_values.shape
    p = config["patch_size"]
    E = config["v_hidden"]
    gh, gw = H // p, W // p
    num_patches = gh * gw

    # Patch-embed conv (stride = kernel = p, no bias) as an im2col matmul (bf16 weight).
    x = pixel_values.reshape(B, C, gh, p, gw, p)
    x = x.transpose(0, 2, 4, 1, 3, 5).reshape(B * num_patches, C * p * p)
    patch_embeds = matmul_bias(x, vp["patch_embed_w"]).reshape(B, num_patches, E)

    cls = jnp.broadcast_to(vp["class_embed"].astype(jnp.bfloat16).reshape(1, 1, E), (B, 1, E))
    h = jnp.concatenate([cls, patch_embeds], axis=1)
    S = num_patches + 1
    # pos-embed add fused into the pre-LN kernel.
    h = pre_layernorm_add(h, vp["pos_embed"][:S], vp["pre_ln_g"], vp["pre_ln_b"])

    for lp in vp["layers"]:
        h = encoder_layer(h, lp, config["v_heads"], causal=False)   # no mask for vision

    pooled = h[:, 0, :]                                             # CLS pooling
    # post-layernorm fused with the (bias-free) visual projection; embeds stay f32.
    image_embeds = ln_matmul_bias(pooled, vp["post_ln_g"], vp["post_ln_b"],
                                  params["visual_projection"], None, out_dtype=jnp.float32)
    return image_embeds


def text_forward(params, config, input_embeds):
    tp = params["text"]
    B, S, E = input_embeds.shape
    # TODO(synk): tiny (B*S, E) pos-add kept in XLA; text tower has no pre-LN to fuse into.
    h = (input_embeds + tp["pos_embed"][:S][None, :, :]).astype(jnp.bfloat16)
    for lp in tp["layers"]:
        h = encoder_layer(h, lp, config["t_heads"], causal=True)
    # TODO(synk): HF pools at the EOS token via input_ids.argmax; with raw input_embeds and
    # an all-ones attention_mask (as this module builds) we pool the last sequence position.
    pooled = h[:, -1, :]
    # final layernorm is per-row, so applying it only to the pooled row is equivalent;
    # fuse it with the (bias-free) text projection.
    text_embeds = ln_matmul_bias(pooled, tp["final_ln_g"], tp["final_ln_b"],
                                 params["text_projection"], None, out_dtype=jnp.float32)
    return text_embeds


def clip_vitb16_forward(params, images, text_embeds_in, *, config,
                        for_training=False, disable_return_loss=False,
                        only_return_logits_per_text=False):
    pixel_values = preprocess(images, config["img_size"])
    image_embeds = vision_forward(params, config, pixel_values)
    text_embeds = text_forward(params, config, text_embeds_in)

    logits_per_text = clip_logits(text_embeds, image_embeds, params["logit_scale"])
    out = {"logits_per_text": logits_per_text}
    if only_return_logits_per_text:
        return out
    logits_per_image = logits_per_text.T
    out["logits_per_image"] = logits_per_image
    out["image_embeds"] = image_embeds
    out["text_embeds"] = text_embeds

    if for_training and not disable_return_loss:
        labels = jnp.arange(logits_per_text.shape[0])

        def ce(logits):
            logp = jax.nn.log_softmax(logits, axis=-1)
            return -jnp.mean(logp[jnp.arange(logits.shape[0]), labels])

        out["loss"] = 0.5 * (ce(logits_per_text) + ce(logits_per_image))
    return out


# ----------------------------- deterministic params -----------------------------

def init_params(key, config):
    def nrm(k, shape, dtype=jnp.float32, scale=0.02):
        return (scale * jax.random.normal(k, shape)).astype(dtype)

    keys = iter(jax.random.split(key, 512))
    bf16 = jnp.bfloat16

    def make_layer(E, mlp):
        return {
            "ln1_g": jnp.ones((E,), jnp.float32), "ln1_b": jnp.zeros((E,), jnp.float32),
            # q/k/v projections fused into one (E, 3E) bf16 weight (order: q, k, v).
            "qkv_w": nrm(next(keys), (E, 3 * E), bf16), "qkv_b": jnp.zeros((3 * E,), jnp.float32),
            "o_w": nrm(next(keys), (E, E), bf16), "o_b": jnp.zeros((E,), jnp.float32),
            "ln2_g": jnp.ones((E,), jnp.float32), "ln2_b": jnp.zeros((E,), jnp.float32),
            "fc1_w": nrm(next(keys), (E, mlp), bf16), "fc1_b": jnp.zeros((mlp,), jnp.float32),
            "fc2_w": nrm(next(keys), (mlp, E), bf16), "fc2_b": jnp.zeros((E,), jnp.float32),
        }

    Ev, Et = config["v_hidden"], config["t_hidden"]
    p, C = config["patch_size"], config["channels"]
    num_positions = (config["img_size"] // p) ** 2 + 1
    params = {
        "vision": {
            # stored directly in im2col layout (C*p*p, E), bf16.
            "patch_embed_w": nrm(next(keys), (C * p * p, Ev), bf16),
            "class_embed": nrm(next(keys), (Ev,)),
            "pos_embed": nrm(next(keys), (num_positions, Ev)),
            "pre_ln_g": jnp.ones((Ev,), jnp.float32), "pre_ln_b": jnp.zeros((Ev,), jnp.float32),
            "layers": [make_layer(Ev, config["v_mlp"]) for _ in range(config["v_layers"])],
            "post_ln_g": jnp.ones((Ev,), jnp.float32), "post_ln_b": jnp.zeros((Ev,), jnp.float32),
        },
        "text": {
            "pos_embed": nrm(next(keys), (config["max_text_pos"], Et)),
            "layers": [make_layer(Et, config["t_mlp"]) for _ in range(config["t_layers"])],
            "final_ln_g": jnp.ones((Et,), jnp.float32), "final_ln_b": jnp.zeros((Et,), jnp.float32),
        },
        "visual_projection": nrm(next(keys), (Ev, config["proj_dim"]), bf16),
        "text_projection": nrm(next(keys), (Et, config["proj_dim"]), bf16),
        "logit_scale": jnp.array(math.log(1.0 / 0.07), jnp.float32),
    }
    return params


# ----------------------------- main -----------------------------

if __name__ == "__main__":
    config = dict(
        img_size=16, patch_size=8, channels=3,
        v_hidden=32, v_layers=2, v_heads=4, v_mlp=64,
        t_hidden=32, t_layers=2, t_heads=4, t_mlp=64,
        proj_dim=16, max_text_pos=16,
    )

    key = jax.random.PRNGKey(0)
    kp, ki, kt = jax.random.split(key, 3)
    params = init_params(kp, config)

    # images: NCHW in [0,1] (as produced upstream of the processor); texts passed as
    # precomputed embeddings (the tensor branch of the module's forward).
    images = jax.random.uniform(ki, (2, 3, 32, 32), jnp.float32)
    text_embeds = 0.02 * jax.random.normal(kt, (2, 8, config["t_hidden"]), jnp.float32)

    fwd = jax.jit(functools.partial(clip_vitb16_forward, config=config,
                                    for_training=False))
    out = fwd(params, images, text_embeds)
    jax.block_until_ready(out["logits_per_image"])

    assert out["logits_per_text"].shape == (2, 2)
    assert out["logits_per_image"].shape == (2, 2)
    assert out["image_embeds"].shape == (2, config["proj_dim"])
    assert out["text_embeds"].shape == (2, config["proj_dim"])
    print("KERNEL_OK")
</pallas_src>

<mosaic_0001>
module attributes {stable_mosaic.version = 11 : i64} {
  func.func @_ln_matmul_kernel(%arg0: i32, %arg1: i32, %arg2: memref<16x32xbf16, #tpu.memory_space<vmem>>, %arg3: memref<1x32xf32, #tpu.memory_space<vmem>>, %arg4: memref<1x32xf32, #tpu.memory_space<vmem>>, %arg5: memref<32x96xbf16, #tpu.memory_space<vmem>>, %arg6: memref<1x96xf32, #tpu.memory_space<vmem>>, %arg7: memref<16x96xbf16, #tpu.memory_space<vmem>>) attributes {dimension_semantics = [#tpu.dimension_semantics<parallel>, #tpu.dimension_semantics<parallel>], iteration_bounds = array<i64: 1, 1>, scalar_prefetch = 0 : i64, scratch_operands = 0 : i64, tpu.core_type = #tpu.core_type<tc>, window_params = [{transform_indices = @transform_0, window_bounds = array<i64: 16, 32>}, {pipeline_mode = #tpu.pipeline_mode<synchronous>, transform_indices = @transform_1, window_bounds = array<i64: 1, 32>}, {pipeline_mode = #tpu.pipeline_mode<synchronous>, transform_indices = @transform_2, window_bounds = array<i64: 1, 32>}, {transform_indices = @transform_3, window_bounds = array<i64: 32, 96>}, {transform_indices = @transform_4, window_bounds = array<i64: 1, 96>}, {transform_indices = @transform_5, window_bounds = array<i64: 16, 96>}]} {
    %c0 = arith.constant 0 : index
    %c0_0 = arith.constant 0 : index
    %0 = vector.load %arg2[%c0, %c0_0] : memref<16x32xbf16, #tpu.memory_space<vmem>>, vector<16x32xbf16>
    %1 = arith.extf %0 : vector<16x32xbf16> to vector<16x32xf32>
    %cst = arith.constant dense<0.000000e+00> : vector<16xf32>
    %2 = vector.multi_reduction <add>, %1, %cst [1] : vector<16x32xf32> to vector<16xf32>
    %3 = vector.shape_cast %2 : vector<16xf32> to vector<16x1xf32>
    %cst_1 = arith.constant 3.200000e+01 : f32
    %4 = vector.broadcast %cst_1 : f32 to vector<16x1xf32>
    %5 = arith.divf %3, %4 : vector<16x1xf32>
    %6 = vector.broadcast %5 : vector<16x1xf32> to vector<16x32xf32>
    %7 = arith.subf %1, %6 : vector<16x32xf32>
    %8 = arith.mulf %7, %7 : vector<16x32xf32>
    %cst_2 = arith.constant dense<0.000000e+00> : vector<16xf32>
    %9 = vector.multi_reduction <add>, %8, %cst_2 [1] : vector<16x32xf32> to vector<16xf32>
    %10 = vector.shape_cast %9 : vector<16xf32> to vector<16x1xf32>
    %cst_3 = arith.constant 3.200000e+01 : f32
    %11 = vector.broadcast %cst_3 : f32 to vector<16x1xf32>
    %12 = arith.divf %10, %11 : vector<16x1xf32>
    %cst_4 = arith.constant 9.99999974E-6 : f32
    %13 = vector.broadcast %cst_4 : f32 to vector<16x1xf32>
    %14 = arith.addf %12, %13 : vector<16x1xf32>
    %15 = math.rsqrt %14 : vector<16x1xf32>
    %16 = vector.broadcast %15 : vector<16x1xf32> to vector<16x32xf32>
    %17 = arith.mulf %7, %16 : vector<16x32xf32>
    %c0_5 = arith.constant 0 : index
    %c0_6 = arith.constant 0 : index
    %18 = vector.load %arg3[%c0_5, %c0_6] : memref<1x32xf32, #tpu.memory_space<vmem>>, vector<1x32xf32>
    %19 = vector.broadcast %18 : vector<1x32xf32> to vector<16x32xf32>
    %20 = arith.mulf %17, %19 : vector<16x32xf32>
    %c0_7 = arith.constant 0 : index
    %c0_8 = arith.constant 0 : index
    %21 = vector.load %arg4[%c0_7, %c0_8] : memref<1x32xf32, #tpu.memory_space<vmem>>, vector<1x32xf32>
    %22 = vector.broadcast %21 : vector<1x32xf32> to vector<16x32xf32>
    %23 = arith.addf %20, %22 : vector<16x32xf32>
    %24 = arith.truncf %23 : vector<16x32xf32> to vector<16x32xbf16>
    %c0_9 = arith.constant 0 : index
    %c0_10 = arith.constant 0 : index
    %25 = vector.load %arg5[%c0_9, %c0_10] : memref<32x96xbf16, #tpu.memory_space<vmem>>, vector<32x96xbf16>
    %cst_11 = arith.constant dense<0.000000e+00> : vector<16x96xf32>
    %26 = tpu.matmul %24, %25, %cst_11 {dimension_numbers = #tpu.dot_dimension_numbers<[1], [0], [0], [1], [0, 0, 1, 1], [], []>} : vector<16x32xbf16>, vector<32x96xbf16>, vector<16x96xf32> -> vector<16x96xf32>
    %c0_12 = arith.constant 0 : index
    %c0_13 = arith.constant 0 : index
    %27 = vector.load %arg6[%c0_12, %c0_13] : memref<1x96xf32, #tpu.memory_space<vmem>>, vector<1x96xf32>
    %28 = vector.broadcast %27 : vector<1x96xf32> to vector<16x96xf32>
    %29 = arith.addf %26, %28 : vector<16x96xf32>
    %30 = arith.truncf %29 : vector<16x96xf32> to vector<16x96xbf16>
    %c0_14 = arith.constant 0 : index
    %c0_15 = arith.constant 0 : index
    %31 = vector.load %arg7[%c0_14, %c0_15] : memref<16x96xbf16, #tpu.memory_space<vmem>>, vector<16x96xbf16>
    tpu.vector_store %arg7[%c0_14, %c0_15], %30 {strides = array<i32>} : memref<16x96xbf16, #tpu.memory_space<vmem>>, vector<16x96xbf16>,
    return
  }
  func.func @transform_0(%arg0: i32, %arg1: i32) -> (i32, i32) {
    %c0_i32 = arith.constant 0 : i32
    %c0_i32_0 = arith.constant 0 : i32
    return %arg0, %c0_i32 : i32, i32
  }
  func.func @transform_1(%arg0: i32, %arg1: i32) -> (i32, i32) {
    %c0_i32 = arith.constant 0 : i32
    %c0_i32_0 = arith.constant 0 : i32
    %c0_i32_1 = arith.constant 0 : i32
    return %c0_i32, %c0_i32_0 : i32, i32
  }
  func.func @transform_2(%arg0: i32, %arg1: i32) -> (i32, i32) {
    %c0_i32 = arith.constant 0 : i32
    %c0_i32_0 = arith.constant 0 : i32
    %c0_i32_1 = arith.constant 0 : i32
    return %c0_i32, %c0_i32_0 : i32, i32
  }
  func.func @transform_3(%arg0: i32, %arg1: i32) -> (i32, i32) {
    %c0_i32 = arith.constant 0 : i32
    %c0_i32_0 = arith.constant 0 : i32
    return %c0_i32, %arg1 : i32, i32
  }
  func.func @transform_4(%arg0: i32, %arg1: i32) -> (i32, i32) {
    %c0_i32 = arith.constant 0 : i32
    %c0_i32_0 = arith.constant 0 : i32
    return %c0_i32, %arg1 : i32, i32
  }
  func.func @transform_5(%arg0: i32, %arg1: i32) -> (i32, i32) {
    %c0_i32 = arith.constant 0 : i32
    return %arg0, %arg1 : i32, i32
  }
}

module attributes {stable_mosaic.version = 11 : i64} {
  func.func @_pre_ln_kernel(%arg0: i32, %arg1: memref<1x5x32xbf16, #tpu.memory_space<vmem>>, %arg2: memref<5x32xf32, #tpu.memory_space<vmem>>, %arg3: memref<1x32xf32, #tpu.memory_space<vmem>>, %arg4: memref<1x32xf32, #tpu.memory_space<vmem>>, %arg5: memref<1x5x32xbf16, #tpu.memory_space<vmem>>) attributes {dimension_semantics = [#tpu.dimension_semantics<parallel>], iteration_bounds = array<i64: 2>, scalar_prefetch = 0 : i64, scratch_operands = 0 : i64, tpu.core_type = #tpu.core_type<tc>, window_params = [{transform_indices = @transform_0, window_bounds = array<i64: 1, 5, 32>}, {pipeline_mode = #tpu.pipeline_mode<synchronous>, transform_indices = @transform_1, window_bounds = array<i64: 5, 32>}, {pipeline_mode = #tpu.pipeline_mode<synchronous>, transform_indices = @transform_2, window_bounds = array<i64: 1, 32>}, {pipeline_mode = #tpu.pipeline_mode<synchronous>, transform_indices = @transform_3, window_bounds = array<i64: 1, 32>}, {transform_indices = @transform_4, window_bounds = array<i64: 1, 5, 32>}]} {
    %c0 = arith.constant 0 : index
    %c0_0 = arith.constant 0 : index
    %c0_1 = arith.constant 0 : index
    %0 = vector.load %arg1[%c0, %c0_0, %c0_1] : memref<1x5x32xbf16, #tpu.memory_space<vmem>>, vector<1x5x32xbf16>
    %1 = vector.shape_cast %0 : vector<1x5x32xbf16> to vector<5x32xbf16>
    %2 = arith.extf %1 : vector<5x32xbf16> to vector<5x32xf32>
    %c0_2 = arith.constant 0 : index
    %c0_3 = arith.constant 0 : index
    %3 = vector.load %arg2[%c0_2, %c0_3] : memref<5x32xf32, #tpu.memory_space<vmem>>, vector<5x32xf32>
    %4 = arith.addf %2, %3 : vector<5x32xf32>
    %cst = arith.constant dense<0.000000e+00> : vector<5xf32>
    %5 = vector.multi_reduction <add>, %4, %cst [1] : vector<5x32xf32> to vector<5xf32>
    %6 = vector.shape_cast %5 : vector<5xf32> to vector<5x1xf32>
    %cst_4 = arith.constant 3.200000e+01 : f32
    %7 = vector.broadcast %cst_4 : f32 to vector<5x1xf32>
    %8 = arith.divf %6, %7 : vector<5x1xf32>
    %9 = vector.broadcast %8 : vector<5x1xf32> to vector<5x32xf32>
    %10 = arith.subf %4, %9 : vector<5x32xf32>
    %11 = arith.mulf %10, %10 : vector<5x32xf32>
    %cst_5 = arith.constant dense<0.000000e+00> : vector<5xf32>
    %12 = vector.multi_reduction <add>, %11, %cst_5 [1] : vector<5x32xf32> to vector<5xf32>
    %13 = vector.shape_cast %12 : vector<5xf32> to vector<5x1xf32>
    %cst_6 = arith.constant 3.200000e+01 : f32
    %14 = vector.broadcast %cst_6 : f32 to vector<5x1xf32>
    %15 = arith.divf %13, %14 : vector<5x1xf32>
    %cst_7 = arith.constant 9.99999974E-6 : f32
    %16 = vector.broadcast %cst_7 : f32 to vector<5x1xf32>
    %17 = arith.addf %15, %16 : vector<5x1xf32>
    %18 = math.rsqrt %17 : vector<5x1xf32>
    %19 = vector.broadcast %18 : vector<5x1xf32> to vector<5x32xf32>
    %20 = arith.mulf %10, %19 : vector<5x32xf32>
    %c0_8 = arith.constant 0 : index
    %c0_9 = arith.constant 0 : index
    %21 = vector.load %arg3[%c0_8, %c0_9] : memref<1x32xf32, #tpu.memory_space<vmem>>, vector<1x32xf32>
    %22 = vector.broadcast %21 : vector<1x32xf32> to vector<5x32xf32>
    %23 = arith.mulf %20, %22 : vector<5x32xf32>
    %c0_10 = arith.constant 0 : index
    %c0_11 = arith.constant 0 : index
    %24 = vector.load %arg4[%c0_10, %c0_11] : memref<1x32xf32, #tpu.memory_space<vmem>>, vector<1x32xf32>
    %25 = vector.broadcast %24 : vector<1x32xf32> to vector<5x32xf32>
    %26 = arith.addf %23, %25 : vector<5x32xf32>
    %27 = arith.truncf %26 : vector<5x32xf32> to vector<5x32xbf16>
    %c0_12 = arith.constant 0 : index
    %c0_13 = arith.constant 0 : index
    %c0_14 = arith.constant 0 : index
    %28 = vector.load %arg5[%c0_12, %c0_13, %c0_14] : memref<1x5x32xbf16, #tpu.memory_space<vmem>>, vector<1x5x32xbf16>
    %29 = vector.shape_cast %28 : vector<1x5x32xbf16> to vector<5x32xbf16>
    %30 = vector.shape_cast %27 : vector<5x32xbf16> to vector<1x5x32xbf16>
    tpu.vector_store %arg5[%c0_12, %c0_13, %c0_14], %30 {strides = array<i32>} : memref<1x5x32xbf16, #tpu.memory_space<vmem>>, vector<1x5x32xbf16>,
    return
  }
  func.func @transform_0(%arg0: i32) -> (i32, i32, i32) {
    %c0_i32 = arith.constant 0 : i32
    %c0_i32_0 = arith.constant 0 : i32
    %c0_i32_1 = arith.constant 0 : i32
    return %arg0, %c0_i32, %c0_i32_0 : i32, i32, i32
  }
  func.func @transform_1(%arg0: i32) -> (i32, i32) {
    %c0_i32 = arith.constant 0 : i32
    %c0_i32_0 = arith.constant 0 : i32
    %c0_i32_1 = arith.constant 0 : i32
    return %c0_i32, %c0_i32_0 : i32, i32
  }
  func.func @transform_2(%arg0: i32) -> (i32, i32) {
    %c0_i32 = arith.constant 0 : i32
    %c0_i32_0 = arith.constant 0 : i32
    %c0_i32_1 = arith.constant 0 : i32
    return %c0_i32, %c0_i32_0 : i32, i32
  }
  func.func @transform_3(%arg0: i32) -> (i32, i32) {
    %c0_i32 = arith.constant 0 : i32
    %c0_i32_0 = arith.constant 0 : i32
    %c0_i32_1 = arith.constant 0 : i32
    return %c0_i32, %c0_i32_0 : i32, i32
  }
  func.func @transform_4(%arg0: i32) -> (i32, i32, i32) {
    %c0_i32 = arith.constant 0 : i32
    %c0_i32_0 = arith.constant 0 : i32
    %c0_i32_1 = arith.constant 0 : i32
    return %arg0, %c0_i32, %c0_i32_0 : i32, i32, i32
  }
}

module attributes {stable_mosaic.version = 11 : i64} {
  func.func @_matmul_kernel(%arg0: i32, %arg1: i32, %arg2: i32, %arg3: memref<8x192xf32, #tpu.memory_space<vmem>>, %arg4: memref<192x32xbf16, #tpu.memory_space<vmem>>, %arg5: memref<1x32xf32, #tpu.memory_space<vmem>>, %arg6: memref<8x32xbf16, #tpu.memory_space<vmem>>) attributes {dimension_semantics = [#tpu.dimension_semantics<parallel>, #tpu.dimension_semantics<parallel>, #tpu.dimension_semantics<arbitrary>], iteration_bounds = array<i64: 1, 1, 1>, scalar_prefetch = 0 : i64, scratch_operands = 0 : i64, tpu.core_type = #tpu.core_type<tc>, window_params = [{transform_indices = @transform_0, window_bounds = array<i64: 8, 192>}, {transform_indices = @transform_1, window_bounds = array<i64: 192, 32>}, {transform_indices = @transform_2, window_bounds = array<i64: 1, 32>}, {transform_indices = @transform_3, window_bounds = array<i64: 8, 32>}]} {
    %c0 = arith.constant 0 : index
    %c0_0 = arith.constant 0 : index
    %0 = vector.load %arg3[%c0, %c0_0] : memref<8x192xf32, #tpu.memory_space<vmem>>, vector<8x192xf32>
    %1 = arith.truncf %0 : vector<8x192xf32> to vector<8x192xbf16>
    %c0_1 = arith.constant 0 : index
    %c0_2 = arith.constant 0 : index
    %2 = vector.load %arg4[%c0_1, %c0_2] : memref<192x32xbf16, #tpu.memory_space<vmem>>, vector<192x32xbf16>
    %cst = arith.constant dense<0.000000e+00> : vector<8x32xf32>
    %3 = tpu.matmul %1, %2, %cst {dimension_numbers = #tpu.dot_dimension_numbers<[1], [0], [0], [1], [0, 0, 1, 1], [], []>} : vector<8x192xbf16>, vector<192x32xbf16>, vector<8x32xf32> -> vector<8x32xf32>
    %c0_3 = arith.constant 0 : index
    %c0_4 = arith.constant 0 : index
    %4 = vector.load %arg5[%c0_3, %c0_4] : memref<1x32xf32, #tpu.memory_space<vmem>>, vector<1x32xf32>
    %5 = vector.broadcast %4 : vector<1x32xf32> to vector<8x32xf32>
    %6 = arith.addf %3, %5 : vector<8x32xf32>
    %7 = arith.truncf %6 : vector<8x32xf32> to vector<8x32xbf16>
    %c0_5 = arith.constant 0 : index
    %c0_6 = arith.constant 0 : index
    %8 = vector.load %arg6[%c0_5, %c0_6] : memref<8x32xbf16, #tpu.memory_space<vmem>>, vector<8x32xbf16>
    tpu.vector_store %arg6[%c0_5, %c0_6], %7 {strides = array<i32>} : memref<8x32xbf16, #tpu.memory_space<vmem>>, vector<8x32xbf16>,
    return
  }
  func.func @transform_0(%arg0: i32, %arg1: i32, %arg2: i32) -> (i32, i32) {
    %c0_i32 = arith.constant 0 : i32
    return %arg0, %arg2 : i32, i32
  }
  func.func @transform_1(%arg0: i32, %arg1: i32, %arg2: i32) -> (i32, i32) {
    %c0_i32 = arith.constant 0 : i32
    return %arg2, %arg1 : i32, i32
  }
  func.func @transform_2(%arg0: i32, %arg1: i32, %arg2: i32) -> (i32, i32) {
    %c0_i32 = arith.constant 0 : i32
    %c0_i32_0 = arith.constant 0 : i32
    return %c0_i32, %arg1 : i32, i32
  }
  func.func @transform_3(%arg0: i32, %arg1: i32, %arg2: i32) -> (i32, i32) {
    %c0_i32 = arith.constant 0 : i32
    return %arg0, %arg1 : i32, i32
  }
}

module attributes {stable_mosaic.version = 11 : i64} {
  func.func @_attn_kernel(%arg0: i32, %arg1: memref<1x5x96xbf16, #tpu.memory_space<vmem>>, %arg2: memref<1x5x32xbf16, #tpu.memory_space<vmem>>) attributes {dimension_semantics = [#tpu.dimension_semantics<parallel>], iteration_bounds = array<i64: 2>, scalar_prefetch = 0 : i64, scratch_operands = 0 : i64, tpu.core_type = #tpu.core_type<tc>, window_params = [{transform_indices = @transform_0, window_bounds = array<i64: 1, 5, 96>}, {transform_indices = @transform_1, window_bounds = array<i64: 1, 5, 32>}]} {
    %c0 = arith.constant 0 : index
    %c0_0 = arith.constant 0 : index
    %c0_1 = arith.constant 0 : index
    %0 = vector.load %arg1[%c0, %c0_0, %c0_1] : memref<1x5x96xbf16, #tpu.memory_space<vmem>>, vector<1x5x96xbf16>
    %1 = vector.shape_cast %0 : vector<1x5x96xbf16> to vector<5x96xbf16>
    %2 = vector.extract_strided_slice %1 {offsets = [0, 0], sizes = [5, 8], strides = [1, 1]} : vector<5x96xbf16> to vector<5x8xbf16>
    %3 = vector.extract_strided_slice %1 {offsets = [0, 32], sizes = [5, 8], strides = [1, 1]} : vector<5x96xbf16> to vector<5x8xbf16>
    %4 = vector.extract_strided_slice %1 {offsets = [0, 64], sizes = [5, 8], strides = [1, 1]} : vector<5x96xbf16> to vector<5x8xbf16>
    %cst = arith.constant dense<0.000000e+00> : vector<5x5xf32>
    %5 = tpu.matmul %2, %3, %cst {dimension_numbers = #tpu.dot_dimension_numbers<[1], [1], [0], [0], [0, 0, 1, 0], [], []>} : vector<5x8xbf16>, vector<5x8xbf16>, vector<5x5xf32> -> vector<5x5xf32>
    %cst_2 = arith.constant 0.353553385 : f32
    %6 = vector.broadcast %cst_2 : f32 to vector<5x5xf32>
    %7 = arith.mulf %5, %6 : vector<5x5xf32>
    %cst_3 = arith.constant dense<0xFF800000> : vector<5xf32>
    %8 = vector.multi_reduction <maximumf>, %7, %cst_3 [1] : vector<5x5xf32> to vector<5xf32>
    %9 = vector.shape_cast %8 : vector<5xf32> to vector<5x1xf32>
    %10 = vector.broadcast %9 : vector<5x1xf32> to vector<5x5xf32>
    %11 = arith.subf %7, %10 : vector<5x5xf32>
    %12 = math.exp %11 : vector<5x5xf32>
    %cst_4 = arith.constant dense<0.000000e+00> : vector<5xf32>
    %13 = vector.multi_reduction <add>, %12, %cst_4 [1] : vector<5x5xf32> to vector<5xf32>
    %14 = vector.shape_cast %13 : vector<5xf32> to vector<5x1xf32>
    %15 = tpu.reciprocal %14 {approx = true} : vector<5x1xf32> -> vector<5x1xf32>
    %16 = vector.broadcast %15 : vector<5x1xf32> to vector<5x5xf32>
    %17 = arith.mulf %12, %16 : vector<5x5xf32>
    %18 = arith.truncf %17 : vector<5x5xf32> to vector<5x5xbf16>
    %cst_5 = arith.constant dense<0.000000e+00> : vector<5x8xf32>
    %19 = tpu.matmul %18, %4, %cst_5 {dimension_numbers = #tpu.dot_dimension_numbers<[1], [0], [0], [1], [0, 0, 1, 1], [], []>} : vector<5x5xbf16>, vector<5x8xbf16>, vector<5x8xf32> -> vector<5x8xf32>
    %20 = arith.truncf %19 : vector<5x8xf32> to vector<5x8xbf16>
    %c0_6 = arith.constant 0 : index
    %c0_7 = arith.constant 0 : index
    %c0_8 = arith.constant 0 : index
    %21 = vector.load %arg2[%c0_6, %c0_7, %c0_8] : memref<1x5x32xbf16, #tpu.memory_space<vmem>>, vector<1x5x8xbf16>
    %22 = vector.shape_cast %21 : vector<1x5x8xbf16> to vector<5x8xbf16>
    %23 = vector.shape_cast %20 : vector<5x8xbf16> to vector<1x5x8xbf16>
    tpu.vector_store %arg2[%c0_6, %c0_7, %c0_8], %23 {strides = array<i32>} : memref<1x5x32xbf16, #tpu.memory_space<vmem>>, vector<1x5x8xbf16>,
    %24 = vector.extract_strided_slice %1 {offsets = [0, 8], sizes = [5, 8], strides = [1, 1]} : vector<5x96xbf16> to vector<5x8xbf16>
    %25 = vector.extract_strided_slice %1 {offsets = [0, 40], sizes = [5, 8], strides = [1, 1]} : vector<5x96xbf16> to vector<5x8xbf16>
    %26 = vector.extract_strided_slice %1 {offsets = [0, 72], sizes = [5, 8], strides = [1, 1]} : vector<5x96xbf16> to vector<5x8xbf16>
    %cst_9 = arith.constant dense<0.000000e+00> : vector<5x5xf32>
    %27 = tpu.matmul %24, %25, %cst_9 {dimension_numbers = #tpu.dot_dimension_numbers<[1], [1], [0], [0], [0, 0, 1, 0], [], []>} : vector<5x8xbf16>, vector<5x8xbf16>, vector<5x5xf32> -> vector<5x5xf32>
    %cst_10 = arith.constant 0.353553385 : f32
    %28 = vector.broadcast %cst_10 : f32 to vector<5x5xf32>
    %29 = arith.mulf %27, %28 : vector<5x5xf32>
    %cst_11 = arith.constant dense<0xFF800000> : vector<5xf32>
    %30 = vector.multi_reduction <maximumf>, %29, %cst_11 [1] : vector<5x5xf32> to vector<5xf32>
    %31 = vector.shape_cast %30 : vector<5xf32> to vector<5x1xf32>
    %32 = vector.broadcast %31 : vector<5x1xf32> to vector<5x5xf32>
    %33 = arith.subf %29, %32 : vector<5x5xf32>
    %34 = math.exp %33 : vector<5x5xf32>
    %cst_12 = arith.constant dense<0.000000e+00> : vector<5xf32>
    %35 = vector.multi_reduction <add>, %34, %cst_12 [1] : vector<5x5xf32> to vector<5xf32>
    %36 = vector.shape_cast %35 : vector<5xf32> to vector<5x1xf32>
    %37 = tpu.reciprocal %36 {approx = true} : vector<5x1xf32> -> vector<5x1xf32>
    %38 = vector.broadcast %37 : vector<5x1xf32> to vector<5x5xf32>
    %39 = arith.mulf %34, %38 : vector<5x5xf32>
    %40 = arith.truncf %39 : vector<5x5xf32> to vector<5x5xbf16>
    %cst_13 = arith.constant dense<0.000000e+00> : vector<5x8xf32>
    %41 = tpu.matmul %40, %26, %cst_13 {dimension_numbers = #tpu.dot_dimension_numbers<[1], [0], [0], [1], [0, 0, 1, 1], [], []>} : vector<5x5xbf16>, vector<5x8xbf16>, vector<5x8xf32> -> vector<5x8xf32>
    %42 = arith.truncf %41 : vector<5x8xf32> to vector<5x8xbf16>
    %c0_14 = arith.constant 0 : index
    %c0_15 = arith.constant 0 : index
    %c8 = arith.constant 8 : index
    %43 = vector.load %arg2[%c0_14, %c0_15, %c8] : memref<1x5x32xbf16, #tpu.memory_space<vmem>>, vector<1x5x8xbf16>
    %44 = vector.shape_cast %43 : vector<1x5x8xbf16> to vector<5x8xbf16>
    %45 = vector.shape_cast %42 : vector<5x8xbf16> to vector<1x5x8xbf16>
    tpu.vector_store %arg2[%c0_14, %c0_15, %c8], %45 {strides = array<i32>} : memref<1x5x32xbf16, #tpu.memory_space<vmem>>, vector<1x5x8xbf16>,
    %46 = vector.extract_strided_slice %1 {offsets = [0, 16], sizes = [5, 8], strides = [1, 1]} : vector<5x96xbf16> to vector<5x8xbf16>
    %47 = vector.extract_strided_slice %1 {offsets = [0, 48], sizes = [5, 8], strides = [1, 1]} : vector<5x96xbf16> to vector<5x8xbf16>
    %48 = vector.extract_strided_slice %1 {offsets = [0, 80], sizes = [5, 8], strides = [1, 1]} : vector<5x96xbf16> to vector<5x8xbf16>
    %cst_16 = arith.constant dense<0.000000e+00> : vector<5x5xf32>
    %49 = tpu.matmul %46, %47, %cst_16 {dimension_numbers = #tpu.dot_dimension_numbers<[1], [1], [0], [0], [0, 0, 1, 0], [], []>} : vector<5x8xbf16>, vector<5x8xbf16>, vector<5x5xf32> -> vector<5x5xf32>
    %cst_17 = arith.constant 0.353553385 : f32
    %50 = vector.broadcast %cst_17 : f32 to vector<5x5xf32>
    %51 = arith.mulf %49, %50 : vector<5x5xf32>
    %cst_18 = arith.constant dense<0xFF800000> : vector<5xf32>
    %52 = vector.multi_reduction <maximumf>, %51, %cst_18 [1] : vector<5x5xf32> to vector<5xf32>
    %53 = vector.shape_cast %52 : vector<5xf32> to vector<5x1xf32>
    %54 = vector.broadcast %53 : vector<5x1xf32> to vector<5x5xf32>
    %55 = arith.subf %51, %54 : vector<5x5xf32>
    %56 = math.exp %55 : vector<5x5xf32>
    %cst_19 = arith.constant dense<0.000000e+00> : vector<5xf32>
    %57 = vector.multi_reduction <add>, %56, %cst_19 [1] : vector<5x5xf32> to vector<5xf32>
    %58 = vector.shape_cast %57 : vector<5xf32> to vector<5x1xf32>
    %59 = tpu.reciprocal %58 {approx = true} : vector<5x1xf32> -> vector<5x1xf32>
    %60 = vector.broadcast %59 : vector<5x1xf32> to vector<5x5xf32>
    %61 = arith.mulf %56, %60 : vector<5x5xf32>
    %62 = arith.truncf %61 : vector<5x5xf32> to vector<5x5xbf16>
    %cst_20 = arith.constant dense<0.000000e+00> : vector<5x8xf32>
    %63 = tpu.matmul %62, %48, %cst_20 {dimension_numbers = #tpu.dot_dimension_numbers<[1], [0], [0], [1], [0, 0, 1, 1], [], []>} : vector<5x5xbf16>, vector<5x8xbf16>, vector<5x8xf32> -> vector<5x8xf32>
    %64 = arith.truncf %63 : vector<5x8xf32> to vector<5x8xbf16>
    %c0_21 = arith.constant 0 : index
    %c0_22 = arith.constant 0 : index
    %c16 = arith.constant 16 : index
    %65 = vector.load %arg2[%c0_21, %c0_22, %c16] : memref<1x5x32xbf16, #tpu.memory_space<vmem>>, vector<1x5x8xbf16>
    %66 = vector.shape_cast %65 : vector<1x5x8xbf16> to vector<5x8xbf16>
    %67 = vector.shape_cast %64 : vector<5x8xbf16> to vector<1x5x8xbf16>
    tpu.vector_store %arg2[%c0_21, %c0_22, %c16], %67 {strides = array<i32>} : memref<1x5x32xbf16, #tpu.memory_space<vmem>>, vector<1x5x8xbf16>,
    %68 = vector.extract_strided_slice %1 {offsets = [0, 24], sizes = [5, 8], strides = [1, 1]} : vector<5x96xbf16> to vector<5x8xbf16>
    %69 = vector.extract_strided_slice %1 {offsets = [0, 56], sizes = [5, 8], strides = [1, 1]} : vector<5x96xbf16> to vector<5x8xbf16>
    %70 = vector.extract_strided_slice %1 {offsets = [0, 88], sizes = [5, 8], strides = [1, 1]} : vector<5x96xbf16> to vector<5x8xbf16>
    %cst_23 = arith.constant dense<0.000000e+00> : vector<5x5xf32>
    %71 = tpu.matmul %68, %69, %cst_23 {dimension_numbers = #tpu.dot_dimension_numbers<[1], [1], [0], [0], [0, 0, 1, 0], [], []>} : vector<5x8xbf16>, vector<5x8xbf16>, vector<5x5xf32> -> vector<5x5xf32>
    %cst_24 = arith.constant 0.353553385 : f32
    %72 = vector.broadcast %cst_24 : f32 to vector<5x5xf32>
    %73 = arith.mulf %71, %72 : vector<5x5xf32>
    %cst_25 = arith.constant dense<0xFF800000> : vector<5xf32>
    %74 = vector.multi_reduction <maximumf>, %73, %cst_25 [1] : vector<5x5xf32> to vector<5xf32>
    %75 = vector.shape_cast %74 : vector<5xf32> to vector<5x1xf32>
    %76 = vector.broadcast %75 : vector<5x1xf32> to vector<5x5xf32>
    %77 = arith.subf %73, %76 : vector<5x5xf32>
    %78 = math.exp %77 : vector<5x5xf32>
    %cst_26 = arith.constant dense<0.000000e+00> : vector<5xf32>
    %79 = vector.multi_reduction <add>, %78, %cst_26 [1] : vector<5x5xf32> to vector<5xf32>
    %80 = vector.shape_cast %79 : vector<5xf32> to vector<5x1xf32>
    %81 = tpu.reciprocal %80 {approx = true} : vector<5x1xf32> -> vector<5x1xf32>
    %82 = vector.broadcast %81 : vector<5x1xf32> to vector<5x5xf32>
    %83 = arith.mulf %78, %82 : vector<5x5xf32>
    %84 = arith.truncf %83 : vector<5x5xf32> to vector<5x5xbf16>
    %cst_27 = arith.constant dense<0.000000e+00> : vector<5x8xf32>
    %85 = tpu.matmul %84, %70, %cst_27 {dimension_numbers = #tpu.dot_dimension_numbers<[1], [0], [0], [1], [0, 0, 1, 1], [], []>} : vector<5x5xbf16>, vector<5x8xbf16>, vector<5x8xf32> -> vector<5x8xf32>
    %86 = arith.truncf %85 : vector<5x8xf32> to vector<5x8xbf16>
    %c0_28 = arith.constant 0 : index
    %c0_29 = arith.constant 0 : index
    %c24 = arith.constant 24 : index
    %87 = vector.load %arg2[%c0_28, %c0_29, %c24] : memref<1x5x32xbf16, #tpu.memory_space<vmem>>, vector<1x5x8xbf16>
    %88 = vector.shape_cast %87 : vector<1x5x8xbf16> to vector<5x8xbf16>
    %89 = vector.shape_cast %86 : vector<5x8xbf16> to vector<1x5x8xbf16>
    tpu.vector_store %arg2[%c0_28, %c0_29, %c24], %89 {strides = array<i32>} : memref<1x5x32xbf16, #tpu.memory_space<vmem>>, vector<1x5x8xbf16>,
    return
  }
  func.func @transform_0(%arg0: i32) -> (i32, i32, i32) {
    %c0_i32 = arith.constant 0 : i32
    %c0_i32_0 = arith.constant 0 : i32
    %c0_i32_1 = arith.constant 0 : i32
    return %arg0, %c0_i32, %c0_i32_0 : i32, i32, i32
  }
  func.func @transform_1(%arg0: i32) -> (i32, i32, i32) {
    %c0_i32 = arith.constant 0 : i32
    %c0_i32_0 = arith.constant 0 : i32
    %c0_i32_1 = arith.constant 0 : i32
    return %arg0, %c0_i32, %c0_i32_0 : i32, i32, i32
  }
}

module attributes {stable_mosaic.version = 11 : i64} {
  func.func @_ln_matmul_kernel(%arg0: i32, %arg1: i32, %arg2: memref<16x32xbf16, #tpu.memory_space<vmem>>, %arg3: memref<1x32xf32, #tpu.memory_space<vmem>>, %arg4: memref<1x32xf32, #tpu.memory_space<vmem>>, %arg5: memref<32x64xbf16, #tpu.memory_space<vmem>>, %arg6: memref<1x64xf32, #tpu.memory_space<vmem>>, %arg7: memref<16x64xbf16, #tpu.memory_space<vmem>>) attributes {dimension_semantics = [#tpu.dimension_semantics<parallel>, #tpu.dimension_semantics<parallel>], iteration_bounds = array<i64: 1, 1>, scalar_prefetch = 0 : i64, scratch_operands = 0 : i64, tpu.core_type = #tpu.core_type<tc>, window_params = [{transform_indices = @transform_0, window_bounds = array<i64: 16, 32>}, {pipeline_mode = #tpu.pipeline_mode<synchronous>, transform_indices = @transform_1, window_bounds = array<i64: 1, 32>}, {pipeline_mode = #tpu.pipeline_mode<synchronous>, transform_indices = @transform_2, window_bounds = array<i64: 1, 32>}, {transform_indices = @transform_3, window_bounds = array<i64: 32, 64>}, {transform_indices = @transform_4, window_bounds = array<i64: 1, 64>}, {transform_indices = @transform_5, window_bounds = array<i64: 16, 64>}]} {
    %c0 = arith.constant 0 : index
    %c0_0 = arith.constant 0 : index
    %0 = vector.load %arg2[%c0, %c0_0] : memref<16x32xbf16, #tpu.memory_space<vmem>>, vector<16x32xbf16>
    %1 = arith.extf %0 : vector<16x32xbf16> to vector<16x32xf32>
    %cst = arith.constant dense<0.000000e+00> : vector<16xf32>
    %2 = vector.multi_reduction <add>, %1, %cst [1] : vector<16x32xf32> to vector<16xf32>
    %3 = vector.shape_cast %2 : vector<16xf32> to vector<16x1xf32>
    %cst_1 = arith.constant 3.200000e+01 : f32
    %4 = vector.broadcast %cst_1 : f32 to vector<16x1xf32>
    %5 = arith.divf %3, %4 : vector<16x1xf32>
    %6 = vector.broadcast %5 : vector<16x1xf32> to vector<16x32xf32>
    %7 = arith.subf %1, %6 : vector<16x32xf32>
    %8 = arith.mulf %7, %7 : vector<16x32xf32>
    %cst_2 = arith.constant dense<0.000000e+00> : vector<16xf32>
    %9 = vector.multi_reduction <add>, %8, %cst_2 [1] : vector<16x32xf32> to vector<16xf32>
    %10 = vector.shape_cast %9 : vector<16xf32> to vector<16x1xf32>
    %cst_3 = arith.constant 3.200000e+01 : f32
    %11 = vector.broadcast %cst_3 : f32 to vector<16x1xf32>
    %12 = arith.divf %10, %11 : vector<16x1xf32>
    %cst_4 = arith.constant 9.99999974E-6 : f32
    %13 = vector.broadcast %cst_4 : f32 to vector<16x1xf32>
    %14 = arith.addf %12, %13 : vector<16x1xf32>
    %15 = math.rsqrt %14 : vector<16x1xf32>
    %16 = vector.broadcast %15 : vector<16x1xf32> to vector<16x32xf32>
    %17 = arith.mulf %7, %16 : vector<16x32xf32>
    %c0_5 = arith.constant 0 : index
    %c0_6 = arith.constant 0 : index
    %18 = vector.load %arg3[%c0_5, %c0_6] : memref<1x32xf32, #tpu.memory_space<vmem>>, vector<1x32xf32>
    %19 = vector.broadcast %18 : vector<1x32xf32> to vector<16x32xf32>
    %20 = arith.mulf %17, %19 : vector<16x32xf32>
    %c0_7 = arith.constant 0 : index
    %c0_8 = arith.constant 0 : index
    %21 = vector.load %arg4[%c0_7, %c0_8] : memref<1x32xf32, #tpu.memory_space<vmem>>, vector<1x32xf32>
    %22 = vector.broadcast %21 : vector<1x32xf32> to vector<16x32xf32>
    %23 = arith.addf %20, %22 : vector<16x32xf32>
    %24 = arith.truncf %23 : vector<16x32xf32> to vector<16x32xbf16>
    %c0_9 = arith.constant 0 : index
    %c0_10 = arith.constant 0 : index
    %25 = vector.load %arg5[%c0_9, %c0_10] : memref<32x64xbf16, #tpu.memory_space<vmem>>, vector<32x64xbf16>
    %cst_11 = arith.constant dense<0.000000e+00> : vector<16x64xf32>
    %26 = tpu.matmul %24, %25, %cst_11 {dimension_numbers = #tpu.dot_dimension_numbers<[1], [0], [0], [1], [0, 0, 1, 1], [], []>} : vector<16x32xbf16>, vector<32x64xbf16>, vector<16x64xf32> -> vector<16x64xf32>
    %c0_12 = arith.constant 0 : index
    %c0_13 = arith.constant 0 : index
    %27 = vector.load %arg6[%c0_12, %c0_13] : memref<1x64xf32, #tpu.memory_space<vmem>>, vector<1x64xf32>
    %28 = vector.broadcast %27 : vector<1x64xf32> to vector<16x64xf32>
    %29 = arith.addf %26, %28 : vector<16x64xf32>
    %cst_14 = arith.constant 1.702000e+00 : f32
    %30 = vector.broadcast %cst_14 : f32 to vector<16x64xf32>
    %31 = arith.mulf %30, %29 : vector<16x64xf32>
    %32 = arith.negf %31 : vector<16x64xf32>
    %33 = math.exp %32 : vector<16x64xf32>
    %cst_15 = arith.constant 1.000000e+00 : f32
    %34 = vector.broadcast %cst_15 : f32 to vector<16x64xf32>
    %35 = arith.addf %34, %33 : vector<16x64xf32>
    %36 = arith.divf %34, %35 : vector<16x64xf32>
    %37 = arith.mulf %29, %36 : vector<16x64xf32>
    %38 = arith.truncf %37 : vector<16x64xf32> to vector<16x64xbf16>
    %c0_16 = arith.constant 0 : index
    %c0_17 = arith.constant 0 : index
    %39 = vector.load %arg7[%c0_16, %c0_17] : memref<16x64xbf16, #tpu.memory_space<vmem>>, vector<16x64xbf16>
    tpu.vector_store %arg7[%c0_16, %c0_17], %38 {strides = array<i32>} : memref<16x64xbf16, #tpu.memory_space<vmem>>, vector<16x64xbf16>,
    return
  }
  func.func @transform_0(%arg0: i32, %arg1: i32) -> (i32, i32) {
    %c0_i32 = arith.constant 0 : i32
    %c0_i32_0 = arith.constant 0 : i32
    return %arg0, %c0_i32 : i32, i32
  }
  func.func @transform_1(%arg0: i32, %arg1: i32) -> (i32, i32) {
    %c0_i32 = arith.constant 0 : i32
    %c0_i32_0 = arith.constant 0 : i32
    %c0_i32_1 = arith.constant 0 : i32
    return %c0_i32, %c0_i32_0 : i32, i32
  }
  func.func @transform_2(%arg0: i32, %arg1: i32) -> (i32, i32) {
    %c0_i32 = arith.constant 0 : i32
    %c0_i32_0 = arith.constant 0 : i32
    %c0_i32_1 = arith.constant 0 : i32
    return %c0_i32, %c0_i32_0 : i32, i32
  }
  func.func @transform_3(%arg0: i32, %arg1: i32) -> (i32, i32) {
    %c0_i32 = arith.constant 0 : i32
    %c0_i32_0 = arith.constant 0 : i32
    return %c0_i32, %arg1 : i32, i32
  }
  func.func @transform_4(%arg0: i32, %arg1: i32) -> (i32, i32) {
    %c0_i32 = arith.constant 0 : i32
    %c0_i32_0 = arith.constant 0 : i32
    return %c0_i32, %arg1 : i32, i32
  }
  func.func @transform_5(%arg0: i32, %arg1: i32) -> (i32, i32) {
    %c0_i32 = arith.constant 0 : i32
    return %arg0, %arg1 : i32, i32
  }
}

module attributes {stable_mosaic.version = 11 : i64} {
  func.func @_matmul_kernel(%arg0: i32, %arg1: i32, %arg2: i32, %arg3: memref<16x64xbf16, #tpu.memory_space<vmem>>, %arg4: memref<64x32xbf16, #tpu.memory_space<vmem>>, %arg5: memref<1x32xf32, #tpu.memory_space<vmem>>, %arg6: memref<16x32xbf16, #tpu.memory_space<vmem>>, %arg7: memref<16x32xbf16, #tpu.memory_space<vmem>>) attributes {dimension_semantics = [#tpu.dimension_semantics<parallel>, #tpu.dimension_semantics<parallel>, #tpu.dimension_semantics<arbitrary>], iteration_bounds = array<i64: 1, 1, 1>, scalar_prefetch = 0 : i64, scratch_operands = 0 : i64, tpu.core_type = #tpu.core_type<tc>, window_params = [{transform_indices = @transform_0, window_bounds = array<i64: 16, 64>}, {transform_indices = @transform_1, window_bounds = array<i64: 64, 32>}, {transform_indices = @transform_2, window_bounds = array<i64: 1, 32>}, {transform_indices = @transform_3, window_bounds = array<i64: 16, 32>}, {transform_indices = @transform_4, window_bounds = array<i64: 16, 32>}]} {
    %c0 = arith.constant 0 : index
    %c0_0 = arith.constant 0 : index
    %0 = vector.load %arg3[%c0, %c0_0] : memref<16x64xbf16, #tpu.memory_space<vmem>>, vector<16x64xbf16>
    %c0_1 = arith.constant 0 : index
    %c0_2 = arith.constant 0 : index
    %1 = vector.load %arg4[%c0_1, %c0_2] : memref<64x32xbf16, #tpu.memory_space<vmem>>, vector<64x32xbf16>
    %cst = arith.constant dense<0.000000e+00> : vector<16x32xf32>
    %2 = tpu.matmul %0, %1, %cst {dimension_numbers = #tpu.dot_dimension_numbers<[1], [0], [0], [1], [0, 0, 1, 1], [], []>} : vector<16x64xbf16>, vector<64x32xbf16>, vector<16x32xf32> -> vector<16x32xf32>
    %c0_3 = arith.constant 0 : index
    %c0_4 = arith.constant 0 : index
    %3 = vector.load %arg5[%c0_3, %c0_4] : memref<1x32xf32, #tpu.memory_space<vmem>>, vector<1x32xf32>
    %4 = vector.broadcast %3 : vector<1x32xf32> to vector<16x32xf32>
    %5 = arith.addf %2, %4 : vector<16x32xf32>
    %c0_5 = arith.constant 0 : index
    %c0_6 = arith.constant 0 : index
    %6 = vector.load %arg6[%c0_5, %c0_6] : memref<16x32xbf16, #tpu.memory_space<vmem>>, vector<16x32xbf16>
    %7 = arith.extf %6 : vector<16x32xbf16> to vector<16x32xf32>
    %8 = arith.addf %5, %7 : vector<16x32xf32>
    %9 = arith.truncf %8 : vector<16x32xf32> to vector<16x32xbf16>
    %c0_7 = arith.constant 0 : index
    %c0_8 = arith.constant 0 : index
    %10 = vector.load %arg7[%c0_7, %c0_8] : memref<16x32xbf16, #tpu.memory_space<vmem>>, vector<16x32xbf16>
    tpu.vector_store %arg7[%c0_7, %c0_8], %9 {strides = array<i32>} : memref<16x32xbf16, #tpu.memory_space<vmem>>, vector<16x32xbf16>,
    return
  }
  func.func @transform_0(%arg0: i32, %arg1: i32, %arg2: i32) -> (i32, i32) {
    %c0_i32 = arith.constant 0 : i32
    return %arg0, %arg2 : i32, i32
  }
  func.func @transform_1(%arg0: i32, %arg1: i32, %arg2: i32) -> (i32, i32) {
    %c0_i32 = arith.constant 0 : i32
    return %arg2, %arg1 : i32, i32
  }
  func.func @transform_2(%arg0: i32, %arg1: i32, %arg2: i32) -> (i32, i32) {
    %c0_i32 = arith.constant 0 : i32
    %c0_i32_0 = arith.constant 0 : i32
    return %c0_i32, %arg1 : i32, i32
  }
  func.func @transform_3(%arg0: i32, %arg1: i32, %arg2: i32) -> (i32, i32) {
    %c0_i32 = arith.constant 0 : i32
    return %arg0, %arg1 : i32, i32
  }
  func.func @transform_4(%arg0: i32, %arg1: i32, %arg2: i32) -> (i32, i32) {
    %c0_i32 = arith.constant 0 : i32
    return %arg0, %arg1 : i32, i32
  }
}

module attributes {stable_mosaic.version = 11 : i64} {
  func.func @_matmul_kernel(%arg0: i32, %arg1: i32, %arg2: i32, %arg3: memref<16x32xbf16, #tpu.memory_space<vmem>>, %arg4: memref<32x32xbf16, #tpu.memory_space<vmem>>, %arg5: memref<1x32xf32, #tpu.memory_space<vmem>>, %arg6: memref<16x32xbf16, #tpu.memory_space<vmem>>, %arg7: memref<16x32xbf16, #tpu.memory_space<vmem>>) attributes {dimension_semantics = [#tpu.dimension_semantics<parallel>, #tpu.dimension_semantics<parallel>, #tpu.dimension_semantics<arbitrary>], iteration_bounds = array<i64: 1, 1, 1>, scalar_prefetch = 0 : i64, scratch_operands = 0 : i64, tpu.core_type = #tpu.core_type<tc>, window_params = [{transform_indices = @transform_0, window_bounds = array<i64: 16, 32>}, {transform_indices = @transform_1, window_bounds = array<i64: 32, 32>}, {transform_indices = @transform_2, window_bounds = array<i64: 1, 32>}, {transform_indices = @transform_3, window_bounds = array<i64: 16, 32>}, {transform_indices = @transform_4, window_bounds = array<i64: 16, 32>}]} {
    %c0 = arith.constant 0 : index
    %c0_0 = arith.constant 0 : index
    %0 = vector.load %arg3[%c0, %c0_0] : memref<16x32xbf16, #tpu.memory_space<vmem>>, vector<16x32xbf16>
    %c0_1 = arith.constant 0 : index
    %c0_2 = arith.constant 0 : index
    %1 = vector.load %arg4[%c0_1, %c0_2] : memref<32x32xbf16, #tpu.memory_space<vmem>>, vector<32x32xbf16>
    %cst = arith.constant dense<0.000000e+00> : vector<16x32xf32>
    %2 = tpu.matmul %0, %1, %cst {dimension_numbers = #tpu.dot_dimension_numbers<[1], [0], [0], [1], [0, 0, 1, 1], [], []>} : vector<16x32xbf16>, vector<32x32xbf16>, vector<16x32xf32> -> vector<16x32xf32>
    %c0_3 = arith.constant 0 : index
    %c0_4 = arith.constant 0 : index
    %3 = vector.load %arg5[%c0_3, %c0_4] : memref<1x32xf32, #tpu.memory_space<vmem>>, vector<1x32xf32>
    %4 = vector.broadcast %3 : vector<1x32xf32> to vector<16x32xf32>
    %5 = arith.addf %2, %4 : vector<16x32xf32>
    %c0_5 = arith.constant 0 : index
    %c0_6 = arith.constant 0 : index
    %6 = vector.load %arg6[%c0_5, %c0_6] : memref<16x32xbf16, #tpu.memory_space<vmem>>, vector<16x32xbf16>
    %7 = arith.extf %6 : vector<16x32xbf16> to vector<16x32xf32>
    %8 = arith.addf %5, %7 : vector<16x32xf32>
    %9 = arith.truncf %8 : vector<16x32xf32> to vector<16x32xbf16>
    %c0_7 = arith.constant 0 : index
    %c0_8 = arith.constant 0 : index
    %10 = vector.load %arg7[%c0_7, %c0_8] : memref<16x32xbf16, #tpu.memory_space<vmem>>, vector<16x32xbf16>
    tpu.vector_store %arg7[%c0_7, %c0_8], %9 {strides = array<i32>} : memref<16x32xbf16, #tpu.memory_space<vmem>>, vector<16x32xbf16>,
    return
  }
  func.func @transform_0(%arg0: i32, %arg1: i32, %arg2: i32) -> (i32, i32) {
    %c0_i32 = arith.constant 0 : i32
    return %arg0, %arg2 : i32, i32
  }
  func.func @transform_1(%arg0: i32, %arg1: i32, %arg2: i32) -> (i32, i32) {
    %c0_i32 = arith.constant 0 : i32
    return %arg2, %arg1 : i32, i32
  }
  func.func @transform_2(%arg0: i32, %arg1: i32, %arg2: i32) -> (i32, i32) {
    %c0_i32 = arith.constant 0 : i32
    %c0_i32_0 = arith.constant 0 : i32
    return %c0_i32, %arg1 : i32, i32
  }
  func.func @transform_3(%arg0: i32, %arg1: i32, %arg2: i32) -> (i32, i32) {
    %c0_i32 = arith.constant 0 : i32
    return %arg0, %arg1 : i32, i32
  }
  func.func @transform_4(%arg0: i32, %arg1: i32, %arg2: i32) -> (i32, i32) {
    %c0_i32 = arith.constant 0 : i32
    return %arg0, %arg1 : i32, i32
  }
}

module attributes {stable_mosaic.version = 11 : i64} {
  func.func @_clip_logits_kernel(%arg0: memref<2x16xf32, #tpu.memory_space<vmem>>, %arg1: memref<2x16xf32, #tpu.memory_space<vmem>>, %arg2: memref<1x1xf32, #tpu.memory_space<vmem>>, %arg3: memref<2x2xf32, #tpu.memory_space<vmem>>) attributes {dimension_semantics = [], scalar_prefetch = 0 : i64, scratch_operands = 0 : i64, tpu.core_type = #tpu.core_type<tc>} {
    %c0 = arith.constant 0 : index
    %c0_0 = arith.constant 0 : index
    %0 = vector.load %arg0[%c0, %c0_0] : memref<2x16xf32, #tpu.memory_space<vmem>>, vector<2x16xf32>
    %c0_1 = arith.constant 0 : index
    %c0_2 = arith.constant 0 : index
    %1 = vector.load %arg1[%c0_1, %c0_2] : memref<2x16xf32, #tpu.memory_space<vmem>>, vector<2x16xf32>
    %2 = arith.mulf %0, %0 : vector<2x16xf32>
    %cst = arith.constant dense<0.000000e+00> : vector<2xf32>
    %3 = vector.multi_reduction <add>, %2, %cst [1] : vector<2x16xf32> to vector<2xf32>
    %4 = vector.shape_cast %3 : vector<2xf32> to vector<2x1xf32>
    %cst_3 = arith.constant 9.99999996E-13 : f32
    %5 = vector.broadcast %cst_3 : f32 to vector<2x1xf32>
    %6 = arith.addf %4, %5 : vector<2x1xf32>
    %7 = math.rsqrt %6 : vector<2x1xf32>
    %8 = vector.broadcast %7 : vector<2x1xf32> to vector<2x16xf32>
    %9 = arith.mulf %0, %8 : vector<2x16xf32>
    %10 = arith.mulf %1, %1 : vector<2x16xf32>
    %cst_4 = arith.constant dense<0.000000e+00> : vector<2xf32>
    %11 = vector.multi_reduction <add>, %10, %cst_4 [1] : vector<2x16xf32> to vector<2xf32>
    %12 = vector.shape_cast %11 : vector<2xf32> to vector<2x1xf32>
    %cst_5 = arith.constant 9.99999996E-13 : f32
    %13 = vector.broadcast %cst_5 : f32 to vector<2x1xf32>
    %14 = arith.addf %12, %13 : vector<2x1xf32>
    %15 = math.rsqrt %14 : vector<2x1xf32>
    %16 = vector.broadcast %15 : vector<2x1xf32> to vector<2x16xf32>
    %17 = arith.mulf %1, %16 : vector<2x16xf32>
    %cst_6 = arith.constant dense<0.000000e+00> : vector<2x2xf32>
    %18 = tpu.matmul %9, %17, %cst_6 {dimension_numbers = #tpu.dot_dimension_numbers<[1], [1], [0], [0], [0, 0, 1, 0], [], []>} : vector<2x16xf32>, vector<2x16xf32>, vector<2x2xf32> -> vector<2x2xf32>
    %c0_7 = arith.constant 0 : index
    %c0_8 = arith.constant 0 : index
    %19 = vector.load %arg2[%c0_7, %c0_8] : memref<1x1xf32, #tpu.memory_space<vmem>>, vector<1x1xf32>
    %20 = math.exp %19 : vector<1x1xf32>
    %21 = vector.broadcast %20 : vector<1x1xf32> to vector<2x2xf32>
    %22 = arith.mulf %18, %21 : vector<2x2xf32>
    %c0_9 = arith.constant 0 : index
    %c0_10 = arith.constant 0 : index
    %23 = vector.load %arg3[%c0_9, %c0_10] : memref<2x2xf32, #tpu.memory_space<vmem>>, vector<2x2xf32>
    tpu.vector_store %arg3[%c0_9, %c0_10], %22 {strides = array<i32>} : memref<2x2xf32, #tpu.memory_space<vmem>>, vector<2x2xf32>,
    return
  }
}

module attributes {stable_mosaic.version = 11 : i64} {
  func.func @_ln_matmul_kernel(%arg0: i32, %arg1: i32, %arg2: memref<8x32xbf16, #tpu.memory_space<vmem>>, %arg3: memref<1x32xf32, #tpu.memory_space<vmem>>, %arg4: memref<1x32xf32, #tpu.memory_space<vmem>>, %arg5: memref<32x16xbf16, #tpu.memory_space<vmem>>, %arg6: memref<1x16xf32, #tpu.memory_space<vmem>>, %arg7: memref<8x16xf32, #tpu.memory_space<vmem>>) attributes {dimension_semantics = [#tpu.dimension_semantics<parallel>, #tpu.dimension_semantics<parallel>], iteration_bounds = array<i64: 1, 1>, scalar_prefetch = 0 : i64, scratch_operands = 0 : i64, tpu.core_type = #tpu.core_type<tc>, window_params = [{transform_indices = @transform_0, window_bounds = array<i64: 8, 32>}, {pipeline_mode = #tpu.pipeline_mode<synchronous>, transform_indices = @transform_1, window_bounds = array<i64: 1, 32>}, {pipeline_mode = #tpu.pipeline_mode<synchronous>, transform_indices = @transform_2, window_bounds = array<i64: 1, 32>}, {transform_indices = @transform_3, window_bounds = array<i64: 32, 16>}, {transform_indices = @transform_4, window_bounds = array<i64: 1, 16>}, {transform_indices = @transform_5, window_bounds = array<i64: 8, 16>}]} {
    %c0 = arith.constant 0 : index
    %c0_0 = arith.constant 0 : index
    %0 = vector.load %arg2[%c0, %c0_0] : memref<8x32xbf16, #tpu.memory_space<vmem>>, vector<8x32xbf16>
    %1 = arith.extf %0 : vector<8x32xbf16> to vector<8x32xf32>
    %cst = arith.constant dense<0.000000e+00> : vector<8xf32>
    %2 = vector.multi_reduction <add>, %1, %cst [1] : vector<8x32xf32> to vector<8xf32>
    %3 = vector.shape_cast %2 : vector<8xf32> to vector<8x1xf32>
    %cst_1 = arith.constant 3.200000e+01 : f32
    %4 = vector.broadcast %cst_1 : f32 to vector<8x1xf32>
    %5 = arith.divf %3, %4 : vector<8x1xf32>
    %6 = vector.broadcast %5 : vector<8x1xf32> to vector<8x32xf32>
    %7 = arith.subf %1, %6 : vector<8x32xf32>
    %8 = arith.mulf %7, %7 : vector<8x32xf32>
    %cst_2 = arith.constant dense<0.000000e+00> : vector<8xf32>
    %9 = vector.multi_reduction <add>, %8, %cst_2 [1] : vector<8x32xf32> to vector<8xf32>
    %10 = vector.shape_cast %9 : vector<8xf32> to vector<8x1xf32>
    %cst_3 = arith.constant 3.200000e+01 : f32
    %11 = vector.broadcast %cst_3 : f32 to vector<8x1xf32>
    %12 = arith.divf %10, %11 : vector<8x1xf32>
    %cst_4 = arith.constant 9.99999974E-6 : f32
    %13 = vector.broadcast %cst_4 : f32 to vector<8x1xf32>
    %14 = arith.addf %12, %13 : vector<8x1xf32>
    %15 = math.rsqrt %14 : vector<8x1xf32>
    %16 = vector.broadcast %15 : vector<8x1xf32> to vector<8x32xf32>
    %17 = arith.mulf %7, %16 : vector<8x32xf32>
    %c0_5 = arith.constant 0 : index
    %c0_6 = arith.constant 0 : index
    %18 = vector.load %arg3[%c0_5, %c0_6] : memref<1x32xf32, #tpu.memory_space<vmem>>, vector<1x32xf32>
    %19 = vector.broadcast %18 : vector<1x32xf32> to vector<8x32xf32>
    %20 = arith.mulf %17, %19 : vector<8x32xf32>
    %c0_7 = arith.constant 0 : index
    %c0_8 = arith.constant 0 : index
    %21 = vector.load %arg4[%c0_7, %c0_8] : memref<1x32xf32, #tpu.memory_space<vmem>>, vector<1x32xf32>
    %22 = vector.broadcast %21 : vector<1x32xf32> to vector<8x32xf32>
    %23 = arith.addf %20, %22 : vector<8x32xf32>
    %24 = arith.truncf %23 : vector<8x32xf32> to vector<8x32xbf16>
    %c0_9 = arith.constant 0 : index
    %c0_10 = arith.constant 0 : index
    %25 = vector.load %arg5[%c0_9, %c0_10] : memref<32x16xbf16, #tpu.memory_space<vmem>>, vector<32x16xbf16>
    %cst_11 = arith.constant dense<0.000000e+00> : vector<8x16xf32>
    %26 = tpu.matmul %24, %25, %cst_11 {dimension_numbers = #tpu.dot_dimension_numbers<[1], [0], [0], [1], [0, 0, 1, 1], [], []>} : vector<8x32xbf16>, vector<32x16xbf16>, vector<8x16xf32> -> vector<8x16xf32>
    %c0_12 = arith.constant 0 : index
    %c0_13 = arith.constant 0 : index
    %27 = vector.load %arg6[%c0_12, %c0_13] : memref<1x16xf32, #tpu.memory_space<vmem>>, vector<1x16xf32>
    %28 = vector.broadcast %27 : vector<1x16xf32> to vector<8x16xf32>
    %29 = arith.addf %26, %28 : vector<8x16xf32>
    %c0_14 = arith.constant 0 : index
    %c0_15 = arith.constant 0 : index
    %30 = vector.load %arg7[%c0_14, %c0_15] : memref<8x16xf32, #tpu.memory_space<vmem>>, vector<8x16xf32>
    tpu.vector_store %arg7[%c0_14, %c0_15], %29 {strides = array<i32>} : memref<8x16xf32, #tpu.memory_space<vmem>>, vector<8x16xf32>,
    return
  }
  func.func @transform_0(%arg0: i32, %arg1: i32) -> (i32, i32) {
    %c0_i32 = arith.constant 0 : i32
    %c0_i32_0 = arith.constant 0 : i32
    return %arg0, %c0_i32 : i32, i32
  }
  func.func @transform_1(%arg0: i32, %arg1: i32) -> (i32, i32) {
    %c0_i32 = arith.constant 0 : i32
    %c0_i32_0 = arith.constant 0 : i32
    %c0_i32_1 = arith.constant 0 : i32
    return %c0_i32, %c0_i32_0 : i32, i32
  }
  func.func @transform_2(%arg0: i32, %arg1: i32) -> (i32, i32) {
    %c0_i32 = arith.constant 0 : i32
    %c0_i32_0 = arith.constant 0 : i32
    %c0_i32_1 = arith.constant 0 : i32
    return %c0_i32, %c0_i32_0 : i32, i32
  }
  func.func @transform_3(%arg0: i32, %arg1: i32) -> (i32, i32) {
    %c0_i32 = arith.constant 0 : i32
    %c0_i32_0 = arith.constant 0 : i32
    return %c0_i32, %arg1 : i32, i32
  }
  func.func @transform_4(%arg0: i32, %arg1: i32) -> (i32, i32) {
    %c0_i32 = arith.constant 0 : i32
    %c0_i32_0 = arith.constant 0 : i32
    return %c0_i32, %arg1 : i32, i32
  }
  func.func @transform_5(%arg0: i32, %arg1: i32) -> (i32, i32) {
    %c0_i32 = arith.constant 0 : i32
    return %arg0, %arg1 : i32, i32
  }
}

module attributes {stable_mosaic.version = 11 : i64} {
  func.func @_attn_kernel(%arg0: i32, %arg1: memref<1x8x96xbf16, #tpu.memory_space<vmem>>, %arg2: memref<1x8x32xbf16, #tpu.memory_space<vmem>>) attributes {dimension_semantics = [#tpu.dimension_semantics<parallel>], iteration_bounds = array<i64: 2>, scalar_prefetch = 0 : i64, scratch_operands = 0 : i64, tpu.core_type = #tpu.core_type<tc>, window_params = [{transform_indices = @transform_0, window_bounds = array<i64: 1, 8, 96>}, {transform_indices = @transform_1, window_bounds = array<i64: 1, 8, 32>}]} {
    %c0 = arith.constant 0 : index
    %c0_0 = arith.constant 0 : index
    %c0_1 = arith.constant 0 : index
    %0 = vector.load %arg1[%c0, %c0_0, %c0_1] : memref<1x8x96xbf16, #tpu.memory_space<vmem>>, vector<1x8x96xbf16>
    %1 = vector.shape_cast %0 : vector<1x8x96xbf16> to vector<8x96xbf16>
    %2 = tpu.iota {dimensions = array<i32: 0>} : vector<8x8xi32>
    %3 = tpu.iota {dimensions = array<i32: 1>} : vector<8x8xi32>
    %4 = arith.cmpi sle, %3, %2 : vector<8x8xi32>
    %5 = vector.extract_strided_slice %1 {offsets = [0, 0], sizes = [8, 8], strides = [1, 1]} : vector<8x96xbf16> to vector<8x8xbf16>
    %6 = vector.extract_strided_slice %1 {offsets = [0, 32], sizes = [8, 8], strides = [1, 1]} : vector<8x96xbf16> to vector<8x8xbf16>
    %7 = vector.extract_strided_slice %1 {offsets = [0, 64], sizes = [8, 8], strides = [1, 1]} : vector<8x96xbf16> to vector<8x8xbf16>
    %cst = arith.constant dense<0.000000e+00> : vector<8x8xf32>
    %8 = tpu.matmul %5, %6, %cst {dimension_numbers = #tpu.dot_dimension_numbers<[1], [1], [0], [0], [0, 0, 1, 0], [], []>} : vector<8x8xbf16>, vector<8x8xbf16>, vector<8x8xf32> -> vector<8x8xf32>
    %cst_2 = arith.constant 0.353553385 : f32
    %9 = vector.broadcast %cst_2 : f32 to vector<8x8xf32>
    %10 = arith.mulf %8, %9 : vector<8x8xf32>
    %cst_3 = arith.constant -1.000000e+30 : f32
    %11 = vector.broadcast %cst_3 : f32 to vector<8x8xf32>
    %12 = arith.select %4, %10, %11 : vector<8x8xi1>, vector<8x8xf32>
    %cst_4 = arith.constant dense<0xFF800000> : vector<8xf32>
    %13 = vector.multi_reduction <maximumf>, %12, %cst_4 [1] : vector<8x8xf32> to vector<8xf32>
    %14 = vector.shape_cast %13 : vector<8xf32> to vector<8x1xf32>
    %15 = vector.broadcast %14 : vector<8x1xf32> to vector<8x8xf32>
    %16 = arith.subf %12, %15 : vector<8x8xf32>
    %17 = math.exp %16 : vector<8x8xf32>
    %cst_5 = arith.constant dense<0.000000e+00> : vector<8xf32>
    %18 = vector.multi_reduction <add>, %17, %cst_5 [1] : vector<8x8xf32> to vector<8xf32>
    %19 = vector.shape_cast %18 : vector<8xf32> to vector<8x1xf32>
    %20 = tpu.reciprocal %19 {approx = true} : vector<8x1xf32> -> vector<8x1xf32>
    %21 = vector.broadcast %20 : vector<8x1xf32> to vector<8x8xf32>
    %22 = arith.mulf %17, %21 : vector<8x8xf32>
    %23 = arith.truncf %22 : vector<8x8xf32> to vector<8x8xbf16>
    %cst_6 = arith.constant dense<0.000000e+00> : vector<8x8xf32>
    %24 = tpu.matmul %23, %7, %cst_6 {dimension_numbers = #tpu.dot_dimension_numbers<[1], [0], [0], [1], [0, 0, 1, 1], [], []>} : vector<8x8xbf16>, vector<8x8xbf16>, vector<8x8xf32> -> vector<8x8xf32>
    %25 = arith.truncf %24 : vector<8x8xf32> to vector<8x8xbf16>
    %c0_7 = arith.constant 0 : index
    %c0_8 = arith.constant 0 : index
    %c0_9 = arith.constant 0 : index
    %26 = vector.load %arg2[%c0_7, %c0_8, %c0_9] : memref<1x8x32xbf16, #tpu.memory_space<vmem>>, vector<1x8x8xbf16>
    %27 = vector.shape_cast %26 : vector<1x8x8xbf16> to vector<8x8xbf16>
    %28 = vector.shape_cast %25 : vector<8x8xbf16> to vector<1x8x8xbf16>
    tpu.vector_store %arg2[%c0_7, %c0_8, %c0_9], %28 {strides = array<i32>} : memref<1x8x32xbf16, #tpu.memory_space<vmem>>, vector<1x8x8xbf16>,
    %29 = vector.extract_strided_slice %1 {offsets = [0, 8], sizes = [8, 8], strides = [1, 1]} : vector<8x96xbf16> to vector<8x8xbf16>
    %30 = vector.extract_strided_slice %1 {offsets = [0, 40], sizes = [8, 8], strides = [1, 1]} : vector<8x96xbf16> to vector<8x8xbf16>
    %31 = vector.extract_strided_slice %1 {offsets = [0, 72], sizes = [8, 8], strides = [1, 1]} : vector<8x96xbf16> to vector<8x8xbf16>
    %cst_10 = arith.constant dense<0.000000e+00> : vector<8x8xf32>
    %32 = tpu.matmul %29, %30, %cst_10 {dimension_numbers = #tpu.dot_dimension_numbers<[1], [1], [0], [0], [0, 0, 1, 0], [], []>} : vector<8x8xbf16>, vector<8x8xbf16>, vector<8x8xf32> -> vector<8x8xf32>
    %cst_11 = arith.constant 0.353553385 : f32
    %33 = vector.broadcast %cst_11 : f32 to vector<8x8xf32>
    %34 = arith.mulf %32, %33 : vector<8x8xf32>
    %cst_12 = arith.constant -1.000000e+30 : f32
    %35 = vector.broadcast %cst_12 : f32 to vector<8x8xf32>
    %36 = arith.select %4, %34, %35 : vector<8x8xi1>, vector<8x8xf32>
    %cst_13 = arith.constant dense<0xFF800000> : vector<8xf32>
    %37 = vector.multi_reduction <maximumf>, %36, %cst_13 [1] : vector<8x8xf32> to vector<8xf32>
    %38 = vector.shape_cast %37 : vector<8xf32> to vector<8x1xf32>
    %39 = vector.broadcast %38 : vector<8x1xf32> to vector<8x8xf32>
    %40 = arith.subf %36, %39 : vector<8x8xf32>
    %41 = math.exp %40 : vector<8x8xf32>
    %cst_14 = arith.constant dense<0.000000e+00> : vector<8xf32>
    %42 = vector.multi_reduction <add>, %41, %cst_14 [1] : vector<8x8xf32> to vector<8xf32>
    %43 = vector.shape_cast %42 : vector<8xf32> to vector<8x1xf32>
    %44 = tpu.reciprocal %43 {approx = true} : vector<8x1xf32> -> vector<8x1xf32>
    %45 = vector.broadcast %44 : vector<8x1xf32> to vector<8x8xf32>
    %46 = arith.mulf %41, %45 : vector<8x8xf32>
    %47 = arith.truncf %46 : vector<8x8xf32> to vector<8x8xbf16>
    %cst_15 = arith.constant dense<0.000000e+00> : vector<8x8xf32>
    %48 = tpu.matmul %47, %31, %cst_15 {dimension_numbers = #tpu.dot_dimension_numbers<[1], [0], [0], [1], [0, 0, 1, 1], [], []>} : vector<8x8xbf16>, vector<8x8xbf16>, vector<8x8xf32> -> vector<8x8xf32>
    %49 = arith.truncf %48 : vector<8x8xf32> to vector<8x8xbf16>
    %c0_16 = arith.constant 0 : index
    %c0_17 = arith.constant 0 : index
    %c8 = arith.constant 8 : index
    %50 = vector.load %arg2[%c0_16, %c0_17, %c8] : memref<1x8x32xbf16, #tpu.memory_space<vmem>>, vector<1x8x8xbf16>
    %51 = vector.shape_cast %50 : vector<1x8x8xbf16> to vector<8x8xbf16>
    %52 = vector.shape_cast %49 : vector<8x8xbf16> to vector<1x8x8xbf16>
    tpu.vector_store %arg2[%c0_16, %c0_17, %c8], %52 {strides = array<i32>} : memref<1x8x32xbf16, #tpu.memory_space<vmem>>, vector<1x8x8xbf16>,
    %53 = vector.extract_strided_slice %1 {offsets = [0, 16], sizes = [8, 8], strides = [1, 1]} : vector<8x96xbf16> to vector<8x8xbf16>
    %54 = vector.extract_strided_slice %1 {offsets = [0, 48], sizes = [8, 8], strides = [1, 1]} : vector<8x96xbf16> to vector<8x8xbf16>
    %55 = vector.extract_strided_slice %1 {offsets = [0, 80], sizes = [8, 8], strides = [1, 1]} : vector<8x96xbf16> to vector<8x8xbf16>
    %cst_18 = arith.constant dense<0.000000e+00> : vector<8x8xf32>
    %56 = tpu.matmul %53, %54, %cst_18 {dimension_numbers = #tpu.dot_dimension_numbers<[1], [1], [0], [0], [0, 0, 1, 0], [], []>} : vector<8x8xbf16>, vector<8x8xbf16>, vector<8x8xf32> -> vector<8x8xf32>
    %cst_19 = arith.constant 0.353553385 : f32
    %57 = vector.broadcast %cst_19 : f32 to vector<8x8xf32>
    %58 = arith.mulf %56, %57 : vector<8x8xf32>
    %cst_20 = arith.constant -1.000000e+30 : f32
    %59 = vector.broadcast %cst_20 : f32 to vector<8x8xf32>
    %60 = arith.select %4, %58, %59 : vector<8x8xi1>, vector<8x8xf32>
    %cst_21 = arith.constant dense<0xFF800000> : vector<8xf32>
    %61 = vector.multi_reduction <maximumf>, %60, %cst_21 [1] : vector<8x8xf32> to vector<8xf32>
    %62 = vector.shape_cast %61 : vector<8xf32> to vector<8x1xf32>
    %63 = vector.broadcast %62 : vector<8x1xf32> to vector<8x8xf32>
    %64 = arith.subf %60, %63 : vector<8x8xf32>
    %65 = math.exp %64 : vector<8x8xf32>
    %cst_22 = arith.constant dense<0.000000e+00> : vector<8xf32>
    %66 = vector.multi_reduction <add>, %65, %cst_22 [1] : vector<8x8xf32> to vector<8xf32>
    %67 = vector.shape_cast %66 : vector<8xf32> to vector<8x1xf32>
    %68 = tpu.reciprocal %67 {approx = true} : vector<8x1xf32> -> vector<8x1xf32>
    %69 = vector.broadcast %68 : vector<8x1xf32> to vector<8x8xf32>
    %70 = arith.mulf %65, %69 : vector<8x8xf32>
    %71 = arith.truncf %70 : vector<8x8xf32> to vector<8x8xbf16>
    %cst_23 = arith.constant dense<0.000000e+00> : vector<8x8xf32>
    %72 = tpu.matmul %71, %55, %cst_23 {dimension_numbers = #tpu.dot_dimension_numbers<[1], [0], [0], [1], [0, 0, 1, 1], [], []>} : vector<8x8xbf16>, vector<8x8xbf16>, vector<8x8xf32> -> vector<8x8xf32>
    %73 = arith.truncf %72 : vector<8x8xf32> to vector<8x8xbf16>
    %c0_24 = arith.constant 0 : index
    %c0_25 = arith.constant 0 : index
    %c16 = arith.constant 16 : index
    %74 = vector.load %arg2[%c0_24, %c0_25, %c16] : memref<1x8x32xbf16, #tpu.memory_space<vmem>>, vector<1x8x8xbf16>
    %75 = vector.shape_cast %74 : vector<1x8x8xbf16> to vector<8x8xbf16>
    %76 = vector.shape_cast %73 : vector<8x8xbf16> to vector<1x8x8xbf16>
    tpu.vector_store %arg2[%c0_24, %c0_25, %c16], %76 {strides = array<i32>} : memref<1x8x32xbf16, #tpu.memory_space<vmem>>, vector<1x8x8xbf16>,
    %77 = vector.extract_strided_slice %1 {offsets = [0, 24], sizes = [8, 8], strides = [1, 1]} : vector<8x96xbf16> to vector<8x8xbf16>
    %78 = vector.extract_strided_slice %1 {offsets = [0, 56], sizes = [8, 8], strides = [1, 1]} : vector<8x96xbf16> to vector<8x8xbf16>
    %79 = vector.extract_strided_slice %1 {offsets = [0, 88], sizes = [8, 8], strides = [1, 1]} : vector<8x96xbf16> to vector<8x8xbf16>
    %cst_26 = arith.constant dense<0.000000e+00> : vector<8x8xf32>
    %80 = tpu.matmul %77, %78, %cst_26 {dimension_numbers = #tpu.dot_dimension_numbers<[1], [1], [0], [0], [0, 0, 1, 0], [], []>} : vector<8x8xbf16>, vector<8x8xbf16>, vector<8x8xf32> -> vector<8x8xf32>
    %cst_27 = arith.constant 0.353553385 : f32
    %81 = vector.broadcast %cst_27 : f32 to vector<8x8xf32>
    %82 = arith.mulf %80, %81 : vector<8x8xf32>
    %cst_28 = arith.constant -1.000000e+30 : f32
    %83 = vector.broadcast %cst_28 : f32 to vector<8x8xf32>
    %84 = arith.select %4, %82, %83 : vector<8x8xi1>, vector<8x8xf32>
    %cst_29 = arith.constant dense<0xFF800000> : vector<8xf32>
    %85 = vector.multi_reduction <maximumf>, %84, %cst_29 [1] : vector<8x8xf32> to vector<8xf32>
    %86 = vector.shape_cast %85 : vector<8xf32> to vector<8x1xf32>
    %87 = vector.broadcast %86 : vector<8x1xf32> to vector<8x8xf32>
    %88 = arith.subf %84, %87 : vector<8x8xf32>
    %89 = math.exp %88 : vector<8x8xf32>
    %cst_30 = arith.constant dense<0.000000e+00> : vector<8xf32>
    %90 = vector.multi_reduction <add>, %89, %cst_30 [1] : vector<8x8xf32> to vector<8xf32>
    %91 = vector.shape_cast %90 : vector<8xf32> to vector<8x1xf32>
    %92 = tpu.reciprocal %91 {approx = true} : vector<8x1xf32> -> vector<8x1xf32>
    %93 = vector.broadcast %92 : vector<8x1xf32> to vector<8x8xf32>
    %94 = arith.mulf %89, %93 : vector<8x8xf32>
    %95 = arith.truncf %94 : vector<8x8xf32> to vector<8x8xbf16>
    %cst_31 = arith.constant dense<0.000000e+00> : vector<8x8xf32>
    %96 = tpu.matmul %95, %79, %cst_31 {dimension_numbers = #tpu.dot_dimension_numbers<[1], [0], [0], [1], [0, 0, 1, 1], [], []>} : vector<8x8xbf16>, vector<8x8xbf16>, vector<8x8xf32> -> vector<8x8xf32>
    %97 = arith.truncf %96 : vector<8x8xf32> to vector<8x8xbf16>
    %c0_32 = arith.constant 0 : index
    %c0_33 = arith.constant 0 : index
    %c24 = arith.constant 24 : index
    %98 = vector.load %arg2[%c0_32, %c0_33, %c24] : memref<1x8x32xbf16, #tpu.memory_space<vmem>>, vector<1x8x8xbf16>
    %99 = vector.shape_cast %98 : vector<1x8x8xbf16> to vector<8x8xbf16>
    %100 = vector.shape_cast %97 : vector<8x8xbf16> to vector<1x8x8xbf16>
    tpu.vector_store %arg2[%c0_32, %c0_33, %c24], %100 {strides = array<i32>} : memref<1x8x32xbf16, #tpu.memory_space<vmem>>, vector<1x8x8xbf16>,
    return
  }
  func.func @transform_0(%arg0: i32) -> (i32, i32, i32) {
    %c0_i32 = arith.constant 0 : i32
    %c0_i32_0 = arith.constant 0 : i32
    %c0_i32_1 = arith.constant 0 : i32
    return %arg0, %c0_i32, %c0_i32_0 : i32, i32, i32
  }
  func.func @transform_1(%arg0: i32) -> (i32, i32, i32) {
    %c0_i32 = arith.constant 0 : i32
    %c0_i32_0 = arith.constant 0 : i32
    %c0_i32_1 = arith.constant 0 : i32
    return %arg0, %c0_i32, %c0_i32_0 : i32, i32, i32
  }
}

</mosaic_0001>

<llo_original>
// kernel: clip_vitb16_forward.26
$region0: #{clip_vitb16_forward.26}
  #allocation0 [shape = 'u32[]', space=smem, size = 0x4, offset = 0x4, fixed_abs, tag = 'smem constant byte address 0x4 - core index']
  #allocation1 [shape = 'u32[144,128]{1,0:T(1,128)}', space=vmem, size = 0x12000, scoped, tag = 'internal scratch']
  %s0 = inlined_call_operand.vmem [shape: bf16[2,5,32], index: 0, kind: input, shape index: {}]
  %s1 = inlined_call_operand.vmem [shape: f32[5,32], index: 1, kind: input, shape index: {}]
  %s2 = inlined_call_operand.vmem [shape: f32[1,32], index: 2, kind: input, shape index: {}]
  %s3 = inlined_call_operand.vmem [shape: f32[1,32], index: 3, kind: input, shape index: {}]
  %s4 = inlined_call_operand.vmem [shape: bf16[2,5,32], index: 4, kind: output, shape index: {}]
  %s5 = sld [smem:[#allocation0]]
  $region49: #{clip_vitb16_forward.26} parent=0
    _
  %s7 = ssub.s32 1, %s5
  %s8 = scalar_select 0, %s7, %s5
  loop: start=0, step=1, limit=4
  $region2: #{clip_vitb16_forward.26} parent=0 // loop_pre_header
    _
  $region3: #{clip_vitb16_forward.26} parent=0 // loop_header
    %s10 = sphi 0, %s14
    %p11 = scmp.ge.s32.totalorder %s10, 4
    %s20 = sphi 0, %s22
    %s23 = sphi 0, %s20
    %s24 = sphi 0, %s23
    %s40 = sphi 0, %s24
    %s44 = sphi 0, %s44
    %s46 = sphi 0, %s44
    %s47 = sphi 0, %s46
    %s61 = sphi 0, %s47
    %s65 = sphi 0, %s65
    %s67 = sphi 0, %s65
    %s68 = sphi 0, %s67
    %s82 = sphi 0, %s68
    %s86 = sphi 0, %s86
    %s88 = sphi 0, %s86
    %s89 = sphi 0, %s88
    %s103 = sphi 0, %s89
    %s109 = sphi 0, %s111
    %s112 = sphi 0, %s109
    %s113 = sphi 0, %s112
    %s129 = sphi 0, %s113
  $region4: #{clip_vitb16_forward.26} parent=0 // loop_header_branch
    %13 = sbr.rel (%p11) target = $region8
  $region5: #{clip_vitb16_forward.26} parent=0 // loop_body
    %s15 = ssub.s32 %s10, 1
    %s16 = ssub.s32 %s10, 2
    %s17 = sadd.s32 %s10, 1
    %s18 = ssub.s32 %s10, %s17
    %p19 = scmp.eq.s32.totalorder %s18, 0
    %s21 = sadd.s32 %s20, 1
    %s22 = scalar_select %p19, %s20, %s21
    %p25 = pneg %p19
    %p26 = scmp.eq.s32.totalorder %s10, 1
    %p27 = por %p25, %p26
    %p28 = scmp.ne.s32.totalorder %s20, %s23
    %p29 = scmp.eq.s32.totalorder %s10, 0
    %p30 = por %p28, %p29
    %p31 = scmp.ne.s32.totalorder %s20, %s23
    %p32 = scmp.eq.s32.totalorder %s15, 1
    %p33 = por %p31, %p32
    %p34 = scmp.ne.s32.totalorder %s23, %s24
    %p35 = scmp.eq.s32.totalorder %s15, 0
    %p36 = por %p34, %p35
    %p37 = scmp.ne.s32.totalorder %s23, %s24
    %p38 = scmp.eq.s32.totalorder %s16, 1
    %p39 = por %p37, %p38
    %p41 = scmp.ne.s32.totalorder %s24, %s40
    %p42 = scmp.eq.s32.totalorder %s16, 0
    %p43 = por %p41, %p42
    %s45 = sadd.s32 %s44, 1
    %p48 = scmp.eq.s32.totalorder %s10, 1
    %p49 = scmp.ne.s32.totalorder %s44, %s46
    %p50 = scmp.eq.s32.totalorder %s10, 0
    %p51 = por %p49, %p50
    %p52 = scmp.ne.s32.totalorder %s44, %s46
    %p53 = scmp.eq.s32.totalorder %s15, 1
    %p54 = por %p52, %p53
    %p55 = scmp.ne.s32.totalorder %s46, %s47
    %p56 = scmp.eq.s32.totalorder %s15, 0
    %p57 = por %p55, %p56
    %p58 = scmp.ne.s32.totalorder %s46, %s47
    %p59 = scmp.eq.s32.totalorder %s16, 1
    %p60 = por %p58, %p59
    %p62 = scmp.ne.s32.totalorder %s47, %s61
    %p63 = scmp.eq.s32.totalorder %s16, 0
    %p64 = por %p62, %p63
    %s66 = sadd.s32 %s65, 1
    %p69 = scmp.eq.s32.totalorder %s10, 1
    %p70 = scmp.ne.s32.totalorder %s65, %s67
    %p71 = scmp.eq.s32.totalorder %s10, 0
    %p72 = por %p70, %p71
    %p73 = scmp.ne.s32.totalorder %s65, %s67
    %p74 = scmp.eq.s32.totalorder %s15, 1
    %p75 = por %p73, %p74
    %p76 = scmp.ne.s32.totalorder %s67, %s68
    %p77 = scmp.eq.s32.totalorder %s15, 0
    %p78 = por %p76, %p77
    %p79 = scmp.ne.s32.totalorder %s67, %s68
    %p80 = scmp.eq.s32.totalorder %s16, 1
    %p81 = por %p79, %p80
    %p83 = scmp.ne.s32.totalorder %s68, %s82
    %p84 = scmp.eq.s32.totalorder %s16, 0
    %p85 = por %p83, %p84
    %s87 = sadd.s32 %s86, 1
    %p90 = scmp.eq.s32.totalorder %s10, 1
    %p91 = scmp.ne.s32.totalorder %s86, %s88
    %p92 = scmp.eq.s32.totalorder %s10, 0
    %p93 = por %p91, %p92
    %p94 = scmp.ne.s32.totalorder %s86, %s88
    %p95 = scmp.eq.s32.totalorder %s15, 1
    %p96 = por %p94, %p95
    %p97 = scmp.ne.s32.totalorder %s88, %s89
    %p98 = scmp.eq.s32.totalorder %s15, 0
    %p99 = por %p97, %p98
    %p100 = scmp.ne.s32.totalorder %s88, %s89
    %p101 = scmp.eq.s32.totalorder %s16, 1
    %p102 = por %p100, %p101
    %p104 = scmp.ne.s32.totalorder %s89, %s103
    %p105 = scmp.eq.s32.totalorder %s16, 0
    %p106 = por %p104, %p105
    %s107 = ssub.s32 %s10, %s17
    %p108 = scmp.eq.s32.totalorder %s107, 0
    %s110 = sadd.s32 %s109, 1
    %s111 = scalar_select %p108, %s109, %s110
    %p114 = pneg %p108
    %p115 = scmp.eq.s32.totalorder %s10, 1
    %p116 = por %p114, %p115
    %p117 = scmp.ne.s32.totalorder %s109, %s112
    %p118 = scmp.eq.s32.totalorder %s10, 0
    %p119 = por %p117, %p118
    %p120 = scmp.ne.s32.totalorder %s109, %s112
    %p121 = scmp.eq.s32.totalorder %s15, 1
    %p122 = por %p120, %p121
    %p123 = scmp.ne.s32.totalorder %s112, %s113
    %p124 = scmp.eq.s32.totalorder %s15, 0
    %p125 = por %p123, %p124
    %p126 = scmp.ne.s32.totalorder %s112, %s113
    %p127 = scmp.eq.s32.totalorder %s16, 1
    %p128 = por %p126, %p127
    %p130 = scmp.ne.s32.totalorder %s113, %s129
    %p131 = scmp.eq.s32.totalorder %s16, 0
    %p132 = por %p130, %p131
    %p133 = scmp.le.s32.totalorder 1, %s10
    %p134 = scmp.lt.s32.totalorder %s10, 3
    %p135 = pnand %p133, %p134
    %p136 = pneg %p135
    // Predicated region
    $region9: #{clip_vitb16_forward.26} parent=5 // pred_check
      _
    $region10: #{clip_vitb16_forward.26} parent=5 // pred_check_branch
      %138 = sbr.rel (%p135) target = $region12
    $region11: #{clip_vitb16_forward.26} parent=5 // pred_region
      %s139 = ssub.s32 %s10, 1
      // Predicated region
      $region13: #{clip_vitb16_forward.26} parent=11 // pred_check
        %p140 = pneg %p57
      $region14: #{clip_vitb16_forward.26} parent=11 // pred_check_branch
        %142 = sbr.rel (%p140) target = $region16
      $region15: #{clip_vitb16_forward.26} parent=11 // pred_region
        _
      $region16: #{clip_vitb16_forward.26} parent=11 // pred_fallthru
        _
      // Predicated region
      $region17: #{clip_vitb16_forward.26} parent=11 // pred_check
        %p143 = pneg %p78
      $region18: #{clip_vitb16_forward.26} parent=11 // pred_check_branch
        %145 = sbr.rel (%p143) target = $region20
      $region19: #{clip_vitb16_forward.26} parent=11 // pred_region
        _
      $region20: #{clip_vitb16_forward.26} parent=11 // pred_fallthru
        _
      // Predicated region
      $region21: #{clip_vitb16_forward.26} parent=11 // pred_check
        %p146 = pneg %p99
      $region22: #{clip_vitb16_forward.26} parent=11 // pred_check_branch
        %148 = sbr.rel (%p146) target = $region24
      $region23: #{clip_vitb16_forward.26} parent=11 // pred_region
        _
      $region24: #{clip_vitb16_forward.26} parent=11 // pred_fallthru
        _
    $region12: #{clip_vitb16_forward.26} parent=5 // pred_fallthru
      _
    %p149 = scmp.lt.s32.totalorder %s10, 2
    // Predicated region
    $region25: #{clip_vitb16_forward.26} parent=5 // pred_check
      %p150 = pneg %p149
    $region26: #{clip_vitb16_forward.26} parent=5 // pred_check_branch
      %152 = sbr.rel (%p150) target = $region28
    $region27: #{clip_vitb16_forward.26} parent=5 // pred_region
      // Predicated region
      $region29: #{clip_vitb16_forward.26} parent=27 // pred_check
        %p153 = pneg %p30
      $region30: #{clip_vitb16_forward.26} parent=27 // pred_check_branch
        %155 = sbr.rel (%p153) target = $region32
      $region31: #{clip_vitb16_forward.26} parent=27 // pred_region
        %p156 = scmp.lt.s32.totalorder %s10, 1
        %s157 = scalar_select %p156, %s10, 1
        %s158 = smul.addr %s157, 4
        %s159 = scalar_lea.vmem %s0, %s158
      $region32: #{clip_vitb16_forward.26} parent=27 // pred_fallthru
        _
    $region28: #{clip_vitb16_forward.26} parent=5 // pred_fallthru
      _
    %p160 = scmp.le.s32.totalorder 1, %s10
    %p161 = scmp.lt.s32.totalorder %s10, 3
    %p162 = pnand %p160, %p161
    %p163 = pneg %p162
    // Predicated region
    $region33: #{clip_vitb16_forward.26} parent=5 // pred_check
      _
    $region34: #{clip_vitb16_forward.26} parent=5 // pred_check_branch
      %165 = sbr.rel (%p162) target = $region36
    $region35: #{clip_vitb16_forward.26} parent=5 // pred_region
      %s166 = ssub.s32 %s10, 1
      %p167 = scmp.lt.s32.totalorder %s15, 1
      %s168 = scalar_select %p167, %s15, 1
      %s169 = smul.addr %s168, 4
      %s170 = scalar_lea.vmem %s0, %s169
      %p171 = pneg %p36
      %p172 = pneg %p33
      %p173 = pneg %p57
      %p174 = pneg %p54
      %p175 = pneg %p78
      %p176 = pneg %p75
      %p177 = pneg %p99
      %p178 = pneg %p96
      %p179 = pneg %p125
      %p180 = pneg %p122
      %p181 = scmp.lt.s32.totalorder %s15, 1
      %s182 = scalar_select %p181, %s15, 1
      %s183 = smul.addr %s182, 4
      %s184 = scalar_lea.vmem %s4, %s183
      %p185 = scmp.lt.s32.totalorder %s15, 1
      %s186 = scalar_select %p185, %s15, 1
      %s187 = smul.addr %s186, 4
      %s188 = scalar_lea.vmem %s0, %s187
      %p189 = scmp.lt.s32.totalorder %s15, 1
      %s190 = scalar_select %p189, %s15, 1
      %s191 = smul.addr %s190, 4
      %s192 = scalar_lea.vmem %s4, %s191
      %v193 = vld [vmem:[%s188] sm:$0x7]
      %v194 = vunpack.c.l.bf16 %v193
      %v195 = vld [vmem:[%s1] sm:$0x1f]
      %v196 = vadd.f32 %v194, %v195
      %vm197 = vcmask 258048
      %v198 = vsel %vm197, %v196, 0.0
      %199 = vadd.xlane.f32.xlu0 %v198
      %v200 = vpop.xlane.xlu0 %199
      %v201 = vrcp.pop 32.0
      %v202 = vmul.f32 %v200, %v201
      %v203 = vsub.f32 %v196, %v202
      %v204 = vmul.f32 %v203, %v203
      %v205 = vsel %vm197, %v204, 0.0
      %206 = vadd.xlane.f32.xlu0 %v205
      %v207 = vpop.xlane.xlu0 %206
      %v208 = vmul.f32 %v207, %v201
      %v209 = vadd.f32 %v208, 1e-05
      %v210 = vrsqrt.pop %v209
      %v211 = vmul.f32 %v203, %v210
      %v212 = vld [vmem:[%s2] sm:$0x1]
      %v214 = vlaneseq
      %v215 = vshrl.u32 %v214, 7
      %v216 = vsub.s32 0, %v215
      %v217 = vrot.slane %v212, %v216
      %v219 = vmul.f32 %v211, %v217
      %v220 = vld [vmem:[%s3] sm:$0x1]
      %v222 = vlaneseq
      %v223 = vshrl.u32 %v222, 7
      %v224 = vsub.s32 0, %v223
      %v225 = vrot.slane %v220, %v224
      %v227 = vadd.f32 %v219, %v225
      %v228 = vpack.c.bf16 %v227, %v227
      %vm229 = vcmask 256000
      %vm230 = vsmask.f32 2304
      %vm231 = vmand %vm229, %vm230
      %v232 = vld [vmem:[%s192] sm:$0x7]
      %v233 = vsel %vm231, %v228, %v232
      %234 = vst [vmem:[%s192] sm:$0x7] %v233
      %p235 = scmp.lt.s32.totalorder %s15, 1
      %s236 = scalar_select %p235, %s15, 1
      %s237 = smul.addr %s236, 4
      %s238 = scalar_lea.vmem %s4, %s237
      // Predicated region
      $region37: #{clip_vitb16_forward.26} parent=35 // pred_check
        %p239 = pneg %p122
      $region38: #{clip_vitb16_forward.26} parent=35 // pred_check_branch
        %241 = sbr.rel (%p239) target = $region40
      $region39: #{clip_vitb16_forward.26} parent=35 // pred_region
        _
      $region40: #{clip_vitb16_forward.26} parent=35 // pred_fallthru
        _
    $region36: #{clip_vitb16_forward.26} parent=5 // pred_fallthru
      _
    %p242 = scmp.le.s32.totalorder 2, %s10
    // Predicated region
    $region41: #{clip_vitb16_forward.26} parent=5 // pred_check
      %p243 = pneg %p242
    $region42: #{clip_vitb16_forward.26} parent=5 // pred_check_branch
      %245 = sbr.rel (%p243) target = $region44
    $region43: #{clip_vitb16_forward.26} parent=5 // pred_region
      %s246 = ssub.s32 %s10, 2
      // Predicated region
      $region45: #{clip_vitb16_forward.26} parent=43 // pred_check
        %p247 = pneg %p128
      $region46: #{clip_vitb16_forward.26} parent=43 // pred_check_branch
        %249 = sbr.rel (%p247) target = $region48
      $region47: #{clip_vitb16_forward.26} parent=43 // pred_region
        %p250 = scmp.lt.s32.totalorder %s16, 1
        %s251 = scalar_select %p250, %s16, 1
        %s252 = smul.addr %s251, 4
        %s253 = scalar_lea.vmem %s4, %s252
      $region48: #{clip_vitb16_forward.26} parent=43 // pred_fallthru
        _
    $region44: #{clip_vitb16_forward.26} parent=5 // pred_fallthru
      _
  $region6: #{clip_vitb16_forward.26} parent=0 // loop_footer
    %s14 = sadd.s32 1, %s10
  $region7: #{clip_vitb16_forward.26} parent=0 // loop_footer_branch
    %9 = sbr.rel target = $region3
  $region8: #{clip_vitb16_forward.26} parent=0 // loop_exit
    _

// kernel: clip_vitb16_forward.25
$region0: #{clip_vitb16_forward.25}
  #allocation0 [shape = 'u32[]', space=smem, size = 0x4, offset = 0x4, fixed_abs, tag = 'smem constant byte address 0x4 - core index']
  #allocation1 [shape = 'u32[144,128]{1,0:T(1,128)}', space=vmem, size = 0x12000, scoped, tag = 'internal scratch']
  %s0 = inlined_call_operand.vmem [shape: f32[8,192], index: 0, kind: input, shape index: {}]
  %s1 = inlined_call_operand.vmem [shape: bf16[192,32], index: 1, kind: input, shape index: {}]
  %s2 = inlined_call_operand.vmem [shape: f32[1,32], index: 2, kind: input, shape index: {}]
  %s3 = inlined_call_operand.vmem [shape: bf16[8,32], index: 3, kind: output, shape index: {}]
  %s4 = sld [smem:[#allocation0]]
  $region22: #{clip_vitb16_forward.25} parent=0
    _
  %s6 = ssub.s32 1, %s4
  %s7 = scalar_select 0, %s6, %s4
  // Predicated region
  $region2: #{clip_vitb16_forward.25} parent=0 // pred_check
    _
  $region3: #{clip_vitb16_forward.25} parent=0 // pred_check_branch
    %9 = sbr.rel (0) target = $region5
  $region4: #{clip_vitb16_forward.25} parent=0 // pred_region
    _
  $region5: #{clip_vitb16_forward.25} parent=0 // pred_fallthru
    _
  // Predicated region
  $region6: #{clip_vitb16_forward.25} parent=0 // pred_check
    _
  $region7: #{clip_vitb16_forward.25} parent=0 // pred_check_branch
    %11 = sbr.rel (0) target = $region9
  $region8: #{clip_vitb16_forward.25} parent=0 // pred_region
    _
  $region9: #{clip_vitb16_forward.25} parent=0 // pred_fallthru
    _
  // Predicated region
  $region10: #{clip_vitb16_forward.25} parent=0 // pred_check
    _
  $region11: #{clip_vitb16_forward.25} parent=0 // pred_check_branch
    %13 = sbr.rel (0) target = $region13
  $region12: #{clip_vitb16_forward.25} parent=0 // pred_region
    _
  $region13: #{clip_vitb16_forward.25} parent=0 // pred_fallthru
    _
  %v15 = vld [vmem:[%s0] sm:$0xff]
  %v16 = vld [vmem:[%s0 + $0x8] sm:$0xff]
  %v17 = vpack.c.bf16 %v15, %v15
  %v18 = vpack.c.bf16 %v16, %v16
  %v19 = vld [vmem:[%s1] sm:$0xf]
  %v20 = vld [vmem:[%s1 + $0x4] sm:$0xf]
  %v21 = vld [vmem:[%s1 + $0x8] sm:$0xf]
  %v22 = vld [vmem:[%s1 + $0xc] sm:$0xf]
  %v23 = vld [vmem:[%s1 + $0x10] sm:$0xf]
  %v24 = vld [vmem:[%s1 + $0x14] sm:$0xf]
  %v25 = vld [vmem:[%s1 + $0x18] sm:$0xf]
  %v26 = vld [vmem:[%s1 + $0x1c] sm:$0xf]
  %v27 = vld [vmem:[%s1 + $0x20] sm:$0xf]
  %v28 = vld [vmem:[%s1 + $0x24] sm:$0xf]
  %v29 = vld [vmem:[%s1 + $0x28] sm:$0xf]
  %v30 = vld [vmem:[%s1 + $0x2c] sm:$0xf]
  %v31 = vld [vmem:[%s1 + $0x30] sm:$0xf]
  %v32 = vld [vmem:[%s1 + $0x34] sm:$0xf]
  %v33 = vld [vmem:[%s1 + $0x38] sm:$0xf]
  %v34 = vld [vmem:[%s1 + $0x3c] sm:$0xf]
  %v35 = vld [vmem:[%s1 + $0x40] sm:$0xf]
  %v36 = vld [vmem:[%s1 + $0x44] sm:$0xf]
  %v37 = vld [vmem:[%s1 + $0x48] sm:$0xf]
  %v38 = vld [vmem:[%s1 + $0x4c] sm:$0xf]
  %v39 = vld [vmem:[%s1 + $0x50] sm:$0xf]
  %v40 = vld [vmem:[%s1 + $0x54] sm:$0xf]
  %v41 = vld [vmem:[%s1 + $0x58] sm:$0xf]
  %v42 = vld [vmem:[%s1 + $0x5c] sm:$0xf]
  %v43 = vld [vmem:[%s2] sm:$0x1]
  %v45 = vlaneseq
  %v46 = vshrl.u32 %v45, 7
  %v47 = vsub.s32 0, %v46
  %v48 = vrot.slane %v43, %v47
  %v74 = vunpack.c.l.b16 %v19
  %v75 = vunpack.c.l.b16 %v20
  %v76 = vunpack.c.l.b16 %v21
  %v77 = vunpack.c.l.b16 %v22
  %v78 = vunpack.c.l.b16 %v23
  %v79 = vunpack.c.l.b16 %v24
  %v80 = vunpack.c.l.b16 %v25
  %v81 = vunpack.c.l.b16 %v26
  %v82 = vunpack.c.l.b16 %v27
  %v83 = vunpack.c.l.b16 %v28
  %v84 = vunpack.c.l.b16 %v29
  %v85 = vunpack.c.l.b16 %v30
  %v86 = vunpack.c.l.b16 %v31
  %v87 = vunpack.c.l.b16 %v32
  %v88 = vunpack.c.l.b16 %v33
  %v89 = vunpack.c.l.b16 %v34
  %v90 = vunpack.c.l.b16 %v35
  %v91 = vunpack.c.l.b16 %v36
  %v92 = vunpack.c.l.b16 %v37
  %v93 = vunpack.c.l.b16 %v38
  %v94 = vunpack.c.l.b16 %v39
  %v95 = vunpack.c.l.b16 %v40
  %v96 = vunpack.c.l.b16 %v41
  %v97 = vunpack.c.l.b16 %v42
  %v98 = vpack.c.b16 %v75, %v74
  %v99 = vpack.c.b16 %v77, %v76
  %v100 = vpack.c.b16 %v79, %v78
  %v101 = vpack.c.b16 %v81, %v80
  %v102 = vpack.c.b16 %v83, %v82
  %v103 = vpack.c.b16 %v85, %v84
  %v104 = vpack.c.b16 %v87, %v86
  %v105 = vpack.c.b16 %v89, %v88
  %v106 = vpack.c.b16 %v91, %v90
  %v107 = vpack.c.b16 %v93, %v92
  %v108 = vpack.c.b16 %v95, %v94
  %v109 = vpack.c.b16 %v97, %v96
  %vm122 = vcmask 523264
  %v124 = vsel %vm122, %v18, 0
  %126 = vmatprep.subr.bf16.mxu0 0
  %127 = vmatpush1.bf16.msra.mxu0 %v98
  %128 = vmatprep.subr.bf16.mxu0 0
  %129 = vmatpush1.bf16.msra.mxu0 %v99
  %130 = vmatprep.subr.bf16.mxu0 0
  %131 = vmatpush1.bf16.msra.mxu0 %v100
  %132 = vmatprep.subr.bf16.mxu0 0
  %133 = vmatpush1.bf16.msra.mxu0 %v101
  %134 = vmatprep.subr.bf16.mxu0 0
  %135 = vmatpush1.bf16.msra.mxu0 %v102
  %136 = vmatprep.subr.bf16.mxu0 0
  %137 = vmatpush1.bf16.msra.mxu0 %v103
  %138 = vmatprep.subr.bf16.mxu0 0
  %139 = vmatpush1.bf16.msra.mxu0 %v104
  %140 = vmatprep.subr.bf16.mxu0 0
  %141 = vmatpush1.bf16.msra.mxu0 %v105
  %142 = vmatprep.subr.bf16.mxu0 0
  %143 = vmatpush1.bf16.msra.mxu0 %v106
  %144 = vmatprep.subr.bf16.mxu0 0
  %145 = vmatpush1.bf16.msra.mxu0 %v107
  %146 = vmatprep.subr.bf16.mxu0 0
  %147 = vmatpush1.bf16.msra.mxu0 %v108
  %148 = vmatprep.subr.bf16.mxu0 0
  %149 = vmatpush1.bf16.msra.mxu0 %v109
  %150 = vmatprep.subr.bf16.mxu0 0
  %151 = vmatpush1.bf16.msra.mxu0 0
  %152 = vmatprep.subr.bf16.mxu0 0
  %153 = vmatpush1.bf16.msra.mxu0 0
  %154 = vmatprep.subr.bf16.mxu0 0
  %155 = vmatpush1.bf16.msra.mxu0 0
  %156 = vmatprep.subr.bf16.mxu0 0
  %157 = vmatpush1.bf16.msra.mxu0 0
  %158 = vmatprep.mubr.bf16.mxu0 %v124
  %159 = vmatmul.mubr.bf16.gmra.mrb[0].mxu0 %v17
  %v160 = vpop.f32.mrb[0].mxu0
  %v161 = vadd.f32 %v48, %v160
  %v162 = vpop.f32.mrb[0].mxu0
  %v163 = vpop.f32.mrb[0].mxu0
  %v164 = vpop.f32.mrb[0].mxu0
  %165 = vdwg.mxu0
  %v166 = vpack.c.bf16 %v161, %v161
  %vm167 = vcmask 257024
  %168 = vst.msk [vmem:[%s3] sm:$0xf] %vm167, %v166
  // Predicated region
  $region14: #{clip_vitb16_forward.25} parent=0 // pred_check
    _
  $region15: #{clip_vitb16_forward.25} parent=0 // pred_check_branch
    %170 = sbr.rel (0) target = $region17
  $region16: #{clip_vitb16_forward.25} parent=0 // pred_region
    _
  $region17: #{clip_vitb16_forward.25} parent=0 // pred_fallthru
    _
  // Predicated region
  $region18: #{clip_vitb16_forward.25} parent=0 // pred_check
    _
  $region19: #{clip_vitb16_forward.25} parent=0 // pred_check_branch
    %172 = sbr.rel (0) target = $region21
  $region20: #{clip_vitb16_forward.25} parent=0 // pred_region
    _
  $region21: #{clip_vitb16_forward.25} parent=0 // pred_fallthru
    _

// kernel: clip_vitb16_forward.27
$region0: #{clip_vitb16_forward.27}
  #allocation0 [shape = 'u32[]', space=smem, size = 0x4, offset = 0x4, fixed_abs, tag = 'smem constant byte address 0x4 - core index']
  #allocation1 [shape = 'u32[144,128]{1,0:T(1,128)}', space=vmem, size = 0x12000, scoped, tag = 'internal scratch']
  %s0 = inlined_call_operand.vmem [shape: bf16[16,32], index: 0, kind: input, shape index: {}]
  %s1 = inlined_call_operand.vmem [shape: f32[1,32], index: 1, kind: input, shape index: {}]
  %s2 = inlined_call_operand.vmem [shape: f32[1,32], index: 2, kind: input, shape index: {}]
  %s3 = inlined_call_operand.vmem [shape: bf16[32,96], index: 3, kind: input, shape index: {}]
  %s4 = inlined_call_operand.vmem [shape: f32[1,96], index: 4, kind: input, shape index: {}]
  %s5 = inlined_call_operand.vmem [shape: bf16[16,96], index: 5, kind: output, shape index: {}]
  %s6 = sld [smem:[#allocation0]]
  $region30: #{clip_vitb16_forward.27} parent=0
    _
  %s8 = ssub.s32 1, %s6
  %s9 = scalar_select 0, %s8, %s6
  // Predicated region
  $region2: #{clip_vitb16_forward.27} parent=0 // pred_check
    _
  $region3: #{clip_vitb16_forward.27} parent=0 // pred_check_branch
    %11 = sbr.rel (0) target = $region5
  $region4: #{clip_vitb16_forward.27} parent=0 // pred_region
    _
  $region5: #{clip_vitb16_forward.27} parent=0 // pred_fallthru
    _
  // Predicated region
  $region6: #{clip_vitb16_forward.27} parent=0 // pred_check
    _
  $region7: #{clip_vitb16_forward.27} parent=0 // pred_check_branch
    %13 = sbr.rel (0) target = $region9
  $region8: #{clip_vitb16_forward.27} parent=0 // pred_region
    _
  $region9: #{clip_vitb16_forward.27} parent=0 // pred_fallthru
    _
  // Predicated region
  $region10: #{clip_vitb16_forward.27} parent=0 // pred_check
    _
  $region11: #{clip_vitb16_forward.27} parent=0 // pred_check_branch
    %15 = sbr.rel (0) target = $region13
  $region12: #{clip_vitb16_forward.27} parent=0 // pred_region
    _
  $region13: #{clip_vitb16_forward.27} parent=0 // pred_fallthru
    _
  // Predicated region
  $region14: #{clip_vitb16_forward.27} parent=0 // pred_check
    _
  $region15: #{clip_vitb16_forward.27} parent=0 // pred_check_branch
    %17 = sbr.rel (0) target = $region17
  $region16: #{clip_vitb16_forward.27} parent=0 // pred_region
    _
  $region17: #{clip_vitb16_forward.27} parent=0 // pred_fallthru
    _
  // Predicated region
  $region18: #{clip_vitb16_forward.27} parent=0 // pred_check
    _
  $region19: #{clip_vitb16_forward.27} parent=0 // pred_check_branch
    %19 = sbr.rel (0) target = $region21
  $region20: #{clip_vitb16_forward.27} parent=0 // pred_region
    _
  $region21: #{clip_vitb16_forward.27} parent=0 // pred_fallthru
    _
  %v21 = vld [vmem:[%s0] sm:$0xf]
  %v22 = vld [vmem:[%s0 + $0x4] sm:$0xf]
  %v23 = vunpack.c.l.bf16 %v21
  %v24 = vunpack.c.l.bf16 %v22
  %vm25 = vcmask 261120
  %v26 = vsel %vm25, %v23, 0.0
  %27 = vadd.xlane.f32.xlu0 %v26
  %v28 = vpop.xlane.xlu0 %27
  %v29 = vsel %vm25, %v24, 0.0
  %30 = vadd.xlane.f32.xlu0 %v29
  %v31 = vpop.xlane.xlu0 %30
  %v32 = vrcp.pop 32.0
  %v33 = vmul.f32 %v28, %v32
  %v34 = vmul.f32 %v31, %v32
  %v35 = vsub.f32 %v23, %v33
  %v36 = vsub.f32 %v24, %v34
  %v37 = vmul.f32 %v35, %v35
  %v38 = vmul.f32 %v36, %v36
  %v39 = vsel %vm25, %v37, 0.0
  %40 = vadd.xlane.f32.xlu0 %v39
  %v41 = vpop.xlane.xlu0 %40
  %v42 = vsel %vm25, %v38, 0.0
  %43 = vadd.xlane.f32.xlu0 %v42
  %v44 = vpop.xlane.xlu0 %43
  %v45 = vmul.f32 %v41, %v32
  %v46 = vmul.f32 %v44, %v32
  %v47 = vadd.f32 %v45, 1e-05
  %v48 = vadd.f32 %v46, 1e-05
  %v49 = vrsqrt.pop %v47
  %v50 = vrsqrt.pop %v48
  %v51 = vmul.f32 %v35, %v49
  %v52 = vmul.f32 %v36, %v50
  %v53 = vld [vmem:[%s1] sm:$0x1]
  %v55 = vlaneseq
  %v56 = vshrl.u32 %v55, 7
  %v57 = vsub.s32 0, %v56
  %v58 = vrot.slane %v53, %v57
  %v60 = vmul.f32 %v51, %v58
  %v61 = vmul.f32 %v52, %v58
  %v62 = vld [vmem:[%s2] sm:$0x1]
  %v64 = vlaneseq
  %v65 = vshrl.u32 %v64, 7
  %v66 = vsub.s32 0, %v65
  %v67 = vrot.slane %v62, %v66
  %v69 = vadd.f32 %v60, %v67
  %v70 = vadd.f32 %v61, %v67
  %v71 = vpack.c.bf16 %v70, %v69
  %v72 = vld [vmem:[%s3] sm:$0xf]
  %v73 = vld [vmem:[%s3 + $0x4] sm:$0xf]
  %v74 = vld [vmem:[%s3 + $0x8] sm:$0xf]
  %v75 = vld [vmem:[%s3 + $0xc] sm:$0xf]
  %v76 = vld [vmem:[%s4] sm:$0x1]
  %v78 = vlaneseq
  %v79 = vshrl.u32 %v78, 7
  %v80 = vsub.s32 0, %v79
  %v81 = vrot.slane %v76, %v80
  %v87 = vunpack.c.l.b16 %v72
  %v88 = vunpack.c.l.b16 %v73
  %v89 = vunpack.c.l.b16 %v74
  %v90 = vunpack.c.l.b16 %v75
  %v91 = vpack.c.b16 %v88, %v87
  %v92 = vpack.c.b16 %v90, %v89
  %v96 = vsel %vm25, %v71, 0
  %98 = vmatprep.subr.bf16.mxu0 0
  %99 = vmatpush1.bf16.msra.mxu0 %v91
  %100 = vmatprep.subr.bf16.mxu0 0
  %101 = vmatpush1.bf16.msra.mxu0 %v92
  %102 = vmatprep.subr.bf16.mxu0 0
  %103 = vmatpush1.bf16.msra.mxu0 0
  %104 = vmatprep.subr.bf16.mxu0 0
  %105 = vmatpush1.bf16.msra.mxu0 0
  %106 = vmatprep.subr.bf16.mxu0 0
  %107 = vmatpush1.bf16.msra.mxu0 0
  %108 = vmatprep.subr.bf16.mxu0 0
  %109 = vmatpush1.bf16.msra.mxu0 0
  %110 = vmatprep.subr.bf16.mxu0 0
  %111 = vmatpush1.bf16.msra.mxu0 0
  %112 = vmatprep.subr.bf16.mxu0 0
  %113 = vmatpush1.bf16.msra.mxu0 0
  %114 = vmatprep.subr.bf16.mxu0 0
  %115 = vmatpush1.bf16.msra.mxu0 0
  %116 = vmatprep.subr.bf16.mxu0 0
  %117 = vmatpush1.bf16.msra.mxu0 0
  %118 = vmatprep.subr.bf16.mxu0 0
  %119 = vmatpush1.bf16.msra.mxu0 0
  %120 = vmatprep.subr.bf16.mxu0 0
  %121 = vmatpush1.bf16.msra.mxu0 0
  %122 = vmatprep.subr.bf16.mxu0 0
  %123 = vmatpush1.bf16.msra.mxu0 0
  %124 = vmatprep.subr.bf16.mxu0 0
  %125 = vmatpush1.bf16.msra.mxu0 0
  %126 = vmatprep.subr.bf16.mxu0 0
  %127 = vmatpush1.bf16.msra.mxu0 0
  %128 = vmatprep.subr.bf16.mxu0 0
  %129 = vmatpush1.bf16.msra.mxu0 0
  %130 = vmatprep.mubr.bf16.mxu0 0
  %131 = vmatmul.mubr.bf16.gmra.mrb[0].mxu0 %v96
  %v132 = vpop.f32.mrb[0].mxu0
  %v133 = vadd.f32 %v81, %v132
  %v134 = vpop.f32.mrb[0].mxu0
  %v135 = vpop.f32.mrb[0].mxu0
  %v136 = vadd.f32 %v81, %v135
  %v137 = vpop.f32.mrb[0].mxu0
  %138 = vdwg.mxu0
  %v139 = vpack.c.bf16 %v136, %v133
  %v141 = vunpack.c.l.b16 %v139
  %v142 = vunpack.c.h.b16 %v139
  %v143 = vpack.c.b16 %v141, %v141
  %v144 = vpack.c.b16 %v142, %v142
  %vm147 = vcmask 781312
  %148 = vst.msk [vmem:[%s5] sm:$0xf] %vm147, %v143
  %149 = vst.msk [vmem:[%s5 + $0x4] sm:$0xf] %vm147, %v144
  // Predicated region
  $region22: #{clip_vitb16_forward.27} parent=0 // pred_check
    _
  $region23: #{clip_vitb16_forward.27} parent=0 // pred_check_branch
    %151 = sbr.rel (0) target = $region25
  $region24: #{clip_vitb16_forward.27} parent=0 // pred_region
    _
  $region25: #{clip_vitb16_forward.27} parent=0 // pred_fallthru
    _
  // Predicated region
  $region26: #{clip_vitb16_forward.27} parent=0 // pred_check
    _
  $region27: #{clip_vitb16_forward.27} parent=0 // pred_check_branch
    %153 = sbr.rel (0) target = $region29
  $region28: #{clip_vitb16_forward.27} parent=0 // pred_region
    _
  $region29: #{clip_vitb16_forward.27} parent=0 // pred_fallthru
    _

// kernel: clip_vitb16_forward.28
$region0: #{clip_vitb16_forward.28}
  #allocation0 [shape = 'u32[]', space=smem, size = 0x4, offset = 0x4, fixed_abs, tag = 'smem constant byte address 0x4 - core index']
  #allocation1 [shape = 'u32[144,128]{1,0:T(1,128)}', space=vmem, size = 0x12000, scoped, tag = 'internal scratch']
  %s0 = inlined_call_operand.vmem [shape: bf16[2,5,96], index: 0, kind: input, shape index: {}]
  %s1 = inlined_call_operand.vmem [shape: bf16[2,5,32], index: 1, kind: output, shape index: {}]
  %s2 = sld [smem:[#allocation0]]
  $region37: #{clip_vitb16_forward.28} parent=0
    _
  %s4 = ssub.s32 1, %s2
  %s5 = scalar_select 0, %s4, %s2
  loop: start=0, step=1, limit=4
  $region2: #{clip_vitb16_forward.28} parent=0 // loop_pre_header
    _
  $region3: #{clip_vitb16_forward.28} parent=0 // loop_header
    %s7 = sphi 0, %s11
    %p8 = scmp.ge.s32.totalorder %s7, 4
    %s17 = sphi 0, %s19
    %s20 = sphi 0, %s17
    %s21 = sphi 0, %s20
    %s37 = sphi 0, %s21
    %s43 = sphi 0, %s45
    %s46 = sphi 0, %s43
    %s47 = sphi 0, %s46
    %s63 = sphi 0, %s47
  $region4: #{clip_vitb16_forward.28} parent=0 // loop_header_branch
    %10 = sbr.rel (%p8) target = $region8
  $region5: #{clip_vitb16_forward.28} parent=0 // loop_body
    %s12 = ssub.s32 %s7, 1
    %s13 = ssub.s32 %s7, 2
    %s14 = sadd.s32 %s7, 1
    %s15 = ssub.s32 %s7, %s14
    %p16 = scmp.eq.s32.totalorder %s15, 0
    %s18 = sadd.s32 %s17, 1
    %s19 = scalar_select %p16, %s17, %s18
    %p22 = pneg %p16
    %p23 = scmp.eq.s32.totalorder %s7, 1
    %p24 = por %p22, %p23
    %p25 = scmp.ne.s32.totalorder %s17, %s20
    %p26 = scmp.eq.s32.totalorder %s7, 0
    %p27 = por %p25, %p26
    %p28 = scmp.ne.s32.totalorder %s17, %s20
    %p29 = scmp.eq.s32.totalorder %s12, 1
    %p30 = por %p28, %p29
    %p31 = scmp.ne.s32.totalorder %s20, %s21
    %p32 = scmp.eq.s32.totalorder %s12, 0
    %p33 = por %p31, %p32
    %p34 = scmp.ne.s32.totalorder %s20, %s21
    %p35 = scmp.eq.s32.totalorder %s13, 1
    %p36 = por %p34, %p35
    %p38 = scmp.ne.s32.totalorder %s21, %s37
    %p39 = scmp.eq.s32.totalorder %s13, 0
    %p40 = por %p38, %p39
    %s41 = ssub.s32 %s7, %s14
    %p42 = scmp.eq.s32.totalorder %s41, 0
    %s44 = sadd.s32 %s43, 1
    %s45 = scalar_select %p42, %s43, %s44
    %p48 = pneg %p42
    %p49 = scmp.eq.s32.totalorder %s7, 1
    %p50 = por %p48, %p49
    %p51 = scmp.ne.s32.totalorder %s43, %s46
    %p52 = scmp.eq.s32.totalorder %s7, 0
    %p53 = por %p51, %p52
    %p54 = scmp.ne.s32.totalorder %s43, %s46
    %p55 = scmp.eq.s32.totalorder %s12, 1
    %p56 = por %p54, %p55
    %p57 = scmp.ne.s32.totalorder %s46, %s47
    %p58 = scmp.eq.s32.totalorder %s12, 0
    %p59 = por %p57, %p58
    %p60 = scmp.ne.s32.totalorder %s46, %s47
    %p61 = scmp.eq.s32.totalorder %s13, 1
    %p62 = por %p60, %p61
    %p64 = scmp.ne.s32.totalorder %s47, %s63
    %p65 = scmp.eq.s32.totalorder %s13, 0
    %p66 = por %p64, %p65
    %p67 = scmp.le.s32.totalorder 1, %s7
    %p68 = scmp.lt.s32.totalorder %s7, 3
    %p69 = pnand %p67, %p68
    %p70 = pneg %p69
    // Predicated region
    $region9: #{clip_vitb16_forward.28} parent=5 // pred_check
      _
    $region10: #{clip_vitb16_forward.28} parent=5 // pred_check_branch
      %72 = sbr.rel (%p69) target = $region12
    $region11: #{clip_vitb16_forward.28} parent=5 // pred_region
      %s73 = ssub.s32 %s7, 1
    $region12: #{clip_vitb16_forward.28} parent=5 // pred_fallthru
      _
    %p74 = scmp.lt.s32.totalorder %s7, 2
    // Predicated region
    $region13: #{clip_vitb16_forward.28} parent=5 // pred_check
      %p75 = pneg %p74
    $region14: #{clip_vitb16_forward.28} parent=5 // pred_check_branch
      %77 = sbr.rel (%p75) target = $region16
    $region15: #{clip_vitb16_forward.28} parent=5 // pred_region
      // Predicated region
      $region17: #{clip_vitb16_forward.28} parent=15 // pred_check
        %p78 = pneg %p27
      $region18: #{clip_vitb16_forward.28} parent=15 // pred_check_branch
        %80 = sbr.rel (%p78) target = $region20
      $region19: #{clip_vitb16_forward.28} parent=15 // pred_region
        %p81 = scmp.lt.s32.totalorder %s7, 1
        %s82 = scalar_select %p81, %s7, 1
        %s83 = smul.addr %s82, 4
        %s84 = scalar_lea.vmem %s0, %s83
      $region20: #{clip_vitb16_forward.28} parent=15 // pred_fallthru
        _
    $region16: #{clip_vitb16_forward.28} parent=5 // pred_fallthru
      _
    %p85 = scmp.le.s32.totalorder 1, %s7
    %p86 = scmp.lt.s32.totalorder %s7, 3
    %p87 = pnand %p85, %p86
    %p88 = pneg %p87
    // Predicated region
    $region21: #{clip_vitb16_forward.28} parent=5 // pred_check
      _
    $region22: #{clip_vitb16_forward.28} parent=5 // pred_check_branch
      %90 = sbr.rel (%p87) target = $region24
    $region23: #{clip_vitb16_forward.28} parent=5 // pred_region
      %s91 = ssub.s32 %s7, 1
      %p92 = scmp.lt.s32.totalorder %s12, 1
      %s93 = scalar_select %p92, %s12, 1
      %s94 = smul.addr %s93, 4
      %s95 = scalar_lea.vmem %s0, %s94
      %p96 = pneg %p33
      %p97 = pneg %p30
      %p98 = pneg %p59
      %p99 = pneg %p56
      %p100 = scmp.lt.s32.totalorder %s12, 1
      %s101 = scalar_select %p100, %s12, 1
      %s102 = smul.addr %s101, 4
      %s103 = scalar_lea.vmem %s1, %s102
      %p104 = scmp.lt.s32.totalorder %s12, 1
      %s105 = scalar_select %p104, %s12, 1
      %s106 = smul.addr %s105, 4
      %s107 = scalar_lea.vmem %s0, %s106
      %p108 = scmp.lt.s32.totalorder %s12, 1
      %s109 = scalar_select %p108, %s12, 1
      %s110 = smul.addr %s109, 4
      %s111 = scalar_lea.vmem %s1, %s110
      %v113 = vld [vmem:[%s107] sm:$0x7]
      %v115 = vunpack.c.l.b16 %v113
      %v116 = vpack.c.b16 %v115, %v115
      %117 = vrot.lane.b32.xlu0 %v116, 96
      %v118 = vpop.permute.xlu0 %117
      %vm119 = vcmask 64512
      %v121 = vsel %vm119, %v113, 0
      %v124 = vsel %vm119, %v118, 0
      %126 = vmatprep.subr.bf16.mxu0 0
      %127 = vmatpush1.bf16.xpose.msra.mxu0 %v124
      %128 = vmatprep.subr.bf16.mxu0 0
      %129 = vmatpush1.bf16.xpose.msra.mxu0 0
      %130 = vmatprep.subr.bf16.mxu0 0
      %131 = vmatpush1.bf16.xpose.msra.mxu0 0
      %132 = vmatprep.subr.bf16.mxu0 0
      %133 = vmatpush1.bf16.xpose.msra.mxu0 0
      %134 = vmatprep.subr.bf16.mxu0 0
      %135 = vmatpush1.bf16.xpose.msra.mxu0 0
      %136 = vmatprep.subr.bf16.mxu0 0
      %137 = vmatpush1.bf16.xpose.msra.mxu0 0
      %138 = vmatprep.subr.bf16.mxu0 0
      %139 = vmatpush1.bf16.xpose.msra.mxu0 0
      %140 = vmatprep.subr.bf16.mxu0 0
      %141 = vmatpush1.bf16.xpose.msra.mxu0 0
      %142 = vmatprep.subr.bf16.mxu0 0
      %143 = vmatpush1.bf16.xpose.msra.mxu0 0
      %144 = vmatprep.subr.bf16.mxu0 0
      %145 = vmatpush1.bf16.xpose.msra.mxu0 0
      %146 = vmatprep.subr.bf16.mxu0 0
      %147 = vmatpush1.bf16.xpose.msra.mxu0 0
      %148 = vmatprep.subr.bf16.mxu0 0
      %149 = vmatpush1.bf16.xpose.msra.mxu0 0
      %150 = vmatprep.subr.bf16.mxu0 0
      %151 = vmatpush1.bf16.xpose.msra.mxu0 0
      %152 = vmatprep.subr.bf16.mxu0 0
      %153 = vmatpush1.bf16.xpose.msra.mxu0 0
      %154 = vmatprep.subr.bf16.mxu0 0
      %155 = vmatpush1.bf16.xpose.msra.mxu0 0
      %156 = vmatprep.subr.bf16.mxu0 0
      %157 = vmatpush1.bf16.xpose.msra.mxu0 0
      %158 = vmatprep.mubr.bf16.mxu0 0
      %159 = vmatmul.mubr.bf16.gmra.mrb[0].mxu0 %v121
      %v160 = vpop.f32.mrb[0].mxu0
      %v161 = vadd.f32 0.0, %v160
      %v162 = vpop.f32.mrb[0].mxu0
      %v163 = vpop.f32.mrb[0].mxu0
      %v164 = vpop.f32.mrb[0].mxu0
      %165 = vdwg.mxu0
      %v166 = vmul.f32 %v161, 0.35355338
      %vm167 = vcmask 36864
      %v168 = vsel %vm167, %v166, -inf
      %169 = vmax.xlane.f32.xlu0 %v168
      %v170 = vpop.xlane.xlu0 %169
      %v171 = vsub.f32 %v166, %v170
      %v172 = vmul.f32 %v171, 1.442695
      %v173 = vpow.pop %v172
      %v174 = vsel %vm167, %v173, 0.0
      %175 = vadd.xlane.f32.xlu0 %v174
      %v176 = vpop.xlane.xlu0 %175
      %v177 = vrcp.pop %v176
      %v178 = vmul.f32 %v173, %v177
      %v179 = vpack.c.bf16 %v178, %v178
      %180 = vrot.lane.b32.xlu0 %v116, 64
      %v181 = vpop.permute.xlu0 %180
      %vm182 = vcmask 39936
      %v184 = vsel %vm182, %v179, 0
      %vm186 = vcmask 1041408
      %vm187 = vcmask 1042432
      %v188 = vsel %vm186, 4294967295, 65535
      %v189 = vsel %vm187, %v188, 0
      %v191 = vand.u32 %v181, %v189
      %193 = vmatprep.subr.bf16.mxu0 0
      %194 = vmatpush1.bf16.msra.mxu0 %v191
      %195 = vmatprep.subr.bf16.mxu0 0
      %196 = vmatpush1.bf16.msra.mxu0 0
      %197 = vmatprep.subr.bf16.mxu0 0
      %198 = vmatpush1.bf16.msra.mxu0 0
      %199 = vmatprep.subr.bf16.mxu0 0
      %200 = vmatpush1.bf16.msra.mxu0 0
      %201 = vmatprep.subr.bf16.mxu0 0
      %202 = vmatpush1.bf16.msra.mxu0 0
      %203 = vmatprep.subr.bf16.mxu0 0
      %204 = vmatpush1.bf16.msra.mxu0 0
      %205 = vmatprep.subr.bf16.mxu0 0
      %206 = vmatpush1.bf16.msra.mxu0 0
      %207 = vmatprep.subr.bf16.mxu0 0
      %208 = vmatpush1.bf16.msra.mxu0 0
      %209 = vmatprep.subr.bf16.mxu0 0
      %210 = vmatpush1.bf16.msra.mxu0 0
      %211 = vmatprep.subr.bf16.mxu0 0
      %212 = vmatpush1.bf16.msra.mxu0 0
      %213 = vmatprep.subr.bf16.mxu0 0
      %214 = vmatpush1.bf16.msra.mxu0 0
      %215 = vmatprep.subr.bf16.mxu0 0
      %216 = vmatpush1.bf16.msra.mxu0 0
      %217 = vmatprep.subr.bf16.mxu0 0
      %218 = vmatpush1.bf16.msra.mxu0 0
      %219 = vmatprep.subr.bf16.mxu0 0
      %220 = vmatpush1.bf16.msra.mxu0 0
      %221 = vmatprep.subr.bf16.mxu0 0
      %222 = vmatpush1.bf16.msra.mxu0 0
      %223 = vmatprep.subr.bf16.mxu0 0
      %224 = vmatpush1.bf16.msra.mxu0 0
      %225 = vmatprep.mubr.bf16.mxu0 0
      %226 = vmatmul.mubr.bf16.gmra.mrb[0].mxu0 %v184
      %v227 = vpop.f32.mrb[0].mxu0
      %v228 = vadd.f32 0.0, %v227
      %v229 = vpop.f32.mrb[0].mxu0
      %v230 = vpop.f32.mrb[0].mxu0
      %v231 = vpop.f32.mrb[0].mxu0
      %232 = vdwg.mxu0
      %v233 = vpack.c.bf16 %v228, %v228
      %vm234 = vcmask 59392
      %vm235 = vsmask.f32 2304
      %vm236 = vmand %vm234, %vm235
      %v237 = vld [vmem:[%s111] sm:$0x7]
      %v238 = vsel %vm236, %v233, %v237
      %239 = vst [vmem:[%s111] sm:$0x7] %v238
      %240 = vrot.lane.b32.xlu0 %v116, 120
      %v241 = vpop.permute.xlu0 %240
      %242 = vrot.lane.b32.xlu0 %v116, 88
      %v243 = vpop.permute.xlu0 %242
      %v245 = vsel %vm119, %v241, 0
      %v248 = vsel %vm119, %v243, 0
      %250 = vmatprep.subr.bf16.mxu0 0
      %251 = vmatpush1.bf16.xpose.msra.mxu0 %v248
      %252 = vmatprep.subr.bf16.mxu0 0
      %253 = vmatpush1.bf16.xpose.msra.mxu0 0
      %254 = vmatprep.subr.bf16.mxu0 0
      %255 = vmatpush1.bf16.xpose.msra.mxu0 0
      %256 = vmatprep.subr.bf16.mxu0 0
      %257 = vmatpush1.bf16.xpose.msra.mxu0 0
      %258 = vmatprep.subr.bf16.mxu0 0
      %259 = vmatpush1.bf16.xpose.msra.mxu0 0
      %260 = vmatprep.subr.bf16.mxu0 0
      %261 = vmatpush1.bf16.xpose.msra.mxu0 0
      %262 = vmatprep.subr.bf16.mxu0 0
      %263 = vmatpush1.bf16.xpose.msra.mxu0 0
      %264 = vmatprep.subr.bf16.mxu0 0
      %265 = vmatpush1.bf16.xpose.msra.mxu0 0
      %266 = vmatprep.subr.bf16.mxu0 0
      %267 = vmatpush1.bf16.xpose.msra.mxu0 0
      %268 = vmatprep.subr.bf16.mxu0 0
      %269 = vmatpush1.bf16.xpose.msra.mxu0 0
      %270 = vmatprep.subr.bf16.mxu0 0
      %271 = vmatpush1.bf16.xpose.msra.mxu0 0
      %272 = vmatprep.subr.bf16.mxu0 0
      %273 = vmatpush1.bf16.xpose.msra.mxu0 0
      %274 = vmatprep.subr.bf16.mxu0 0
      %275 = vmatpush1.bf16.xpose.msra.mxu0 0
      %276 = vmatprep.subr.bf16.mxu0 0
      %277 = vmatpush1.bf16.xpose.msra.mxu0 0
      %278 = vmatprep.subr.bf16.mxu0 0
      %279 = vmatpush1.bf16.xpose.msra.mxu0 0
      %280 = vmatprep.subr.bf16.mxu0 0
      %281 = vmatpush1.bf16.xpose.msra.mxu0 0
      %282 = vmatprep.mubr.bf16.mxu0 0
      %283 = vmatmul.mubr.bf16.gmra.mrb[0].mxu0 %v245
      %v284 = vpop.f32.mrb[0].mxu0
      %v285 = vadd.f32 0.0, %v284
      %v286 = vpop.f32.mrb[0].mxu0
      %v287 = vpop.f32.mrb[0].mxu0
      %v288 = vpop.f32.mrb[0].mxu0
      %289 = vdwg.mxu0
      %v290 = vmul.f32 %v285, 0.35355338
      %v291 = vsel %vm167, %v290, -inf
      %292 = vmax.xlane.f32.xlu0 %v291
      %v293 = vpop.xlane.xlu0 %292
      %v294 = vsub.f32 %v290, %v293
      %v295 = vmul.f32 %v294, 1.442695
      %v296 = vpow.pop %v295
      %v297 = vsel %vm167, %v296, 0.0
      %298 = vadd.xlane.f32.xlu0 %v297
      %v299 = vpop.xlane.xlu0 %298
      %v300 = vrcp.pop %v299
      %v301 = vmul.f32 %v296, %v300
      %v302 = vpack.c.bf16 %v301, %v301
      %303 = vrot.lane.b32.xlu0 %v116, 56
      %v304 = vpop.permute.xlu0 %303
      %v306 = vsel %vm182, %v302, 0
      %v309 = vand.u32 %v304, %v189
      %311 = vmatprep.subr.bf16.mxu0 0
      %312 = vmatpush1.bf16.msra.mxu0 %v309
      %313 = vmatprep.subr.bf16.mxu0 0
      %314 = vmatpush1.bf16.msra.mxu0 0
      %315 = vmatprep.subr.bf16.mxu0 0
      %316 = vmatpush1.bf16.msra.mxu0 0
      %317 = vmatprep.subr.bf16.mxu0 0
      %318 = vmatpush1.bf16.msra.mxu0 0
      %319 = vmatprep.subr.bf16.mxu0 0
      %320 = vmatpush1.bf16.msra.mxu0 0
      %321 = vmatprep.subr.bf16.mxu0 0
      %322 = vmatpush1.bf16.msra.mxu0 0
      %323 = vmatprep.subr.bf16.mxu0 0
      %324 = vmatpush1.bf16.msra.mxu0 0
      %325 = vmatprep.subr.bf16.mxu0 0
      %326 = vmatpush1.bf16.msra.mxu0 0
      %327 = vmatprep.subr.bf16.mxu0 0
      %328 = vmatpush1.bf16.msra.mxu0 0
      %329 = vmatprep.subr.bf16.mxu0 0
      %330 = vmatpush1.bf16.msra.mxu0 0
      %331 = vmatprep.subr.bf16.mxu0 0
      %332 = vmatpush1.bf16.msra.mxu0 0
      %333 = vmatprep.subr.bf16.mxu0 0
      %334 = vmatpush1.bf16.msra.mxu0 0
      %335 = vmatprep.subr.bf16.mxu0 0
      %336 = vmatpush1.bf16.msra.mxu0 0
      %337 = vmatprep.subr.bf16.mxu0 0
      %338 = vmatpush1.bf16.msra.mxu0 0
      %339 = vmatprep.subr.bf16.mxu0 0
      %340 = vmatpush1.bf16.msra.mxu0 0
      %341 = vmatprep.subr.bf16.mxu0 0
      %342 = vmatpush1.bf16.msra.mxu0 0
      %343 = vmatprep.mubr.bf16.mxu0 0
      %344 = vmatmul.mubr.bf16.gmra.mrb[0].mxu0 %v306
      %v345 = vpop.f32.mrb[0].mxu0
      %v346 = vadd.f32 0.0, %v345
      %v347 = vpop.f32.mrb[0].mxu0
      %v348 = vpop.f32.mrb[0].mxu0
      %v349 = vpop.f32.mrb[0].mxu0
      %350 = vdwg.mxu0
      %v351 = vpack.c.bf16 %v346, %v346
      %v353 = vunpack.c.l.b16 %v351
      %v354 = vpack.c.b16 %v353, %v353
      %355 = vrot.lane.b32.xlu0 %v354, 8
      %v356 = vpop.permute.xlu0 %355
      %vm358 = vcmask 124992
      %vm359 = vmand %vm358, %vm235
      %v360 = vld [vmem:[%s111] sm:$0x7]
      %v361 = vsel %vm359, %v356, %v360
      %362 = vst [vmem:[%s111] sm:$0x7] %v361
      %363 = vrot.lane.b32.xlu0 %v116, 112
      %v364 = vpop.permute.xlu0 %363
      %365 = vrot.lane.b32.xlu0 %v116, 80
      %v366 = vpop.permute.xlu0 %365
      %v368 = vsel %vm119, %v364, 0
      %v371 = vsel %vm119, %v366, 0
      %373 = vmatprep.subr.bf16.mxu0 0
      %374 = vmatpush1.bf16.xpose.msra.mxu0 %v371
      %375 = vmatprep.subr.bf16.mxu0 0
      %376 = vmatpush1.bf16.xpose.msra.mxu0 0
      %377 = vmatprep.subr.bf16.mxu0 0
      %378 = vmatpush1.bf16.xpose.msra.mxu0 0
      %379 = vmatprep.subr.bf16.mxu0 0
      %380 = vmatpush1.bf16.xpose.msra.mxu0 0
      %381 = vmatprep.subr.bf16.mxu0 0
      %382 = vmatpush1.bf16.xpose.msra.mxu0 0
      %383 = vmatprep.subr.bf16.mxu0 0
      %384 = vmatpush1.bf16.xpose.msra.mxu0 0
      %385 = vmatprep.subr.bf16.mxu0 0
      %386 = vmatpush1.bf16.xpose.msra.mxu0 0
      %387 = vmatprep.subr.bf16.mxu0 0
      %388 = vmatpush1.bf16.xpose.msra.mxu0 0
      %389 = vmatprep.subr.bf16.mxu0 0
      %390 = vmatpush1.bf16.xpose.msra.mxu0 0
      %391 = vmatprep.subr.bf16.mxu0 0
      %392 = vmatpush1.bf16.xpose.msra.mxu0 0
      %393 = vmatprep.subr.bf16.mxu0 0
      %394 = vmatpush1.bf16.xpose.msra.mxu0 0
      %395 = vmatprep.subr.bf16.mxu0 0
      %396 = vmatpush1.bf16.xpose.msra.mxu0 0
      %397 = vmatprep.subr.bf16.mxu0 0
      %398 = vmatpush1.bf16.xpose.msra.mxu0 0
      %399 = vmatprep.subr.bf16.mxu0 0
      %400 = vmatpush1.bf16.xpose.msra.mxu0 0
      %401 = vmatprep.subr.bf16.mxu0 0
      %402 = vmatpush1.bf16.xpose.msra.mxu0 0
      %403 = vmatprep.subr.bf16.mxu0 0
      %404 = vmatpush1.bf16.xpose.msra.mxu0 0
      %405 = vmatprep.mubr.bf16.mxu0 0
      %406 = vmatmul.mubr.bf16.gmra.mrb[0].mxu0 %v368
      %v407 = vpop.f32.mrb[0].mxu0
      %v408 = vadd.f32 0.0, %v407
      %v409 = vpop.f32.mrb[0].mxu0
      %v410 = vpop.f32.mrb[0].mxu0
      %v411 = vpop.f32.mrb[0].mxu0
      %412 = vdwg.mxu0
      %v413 = vmul.f32 %v408, 0.35355338
      %v414 = vsel %vm167, %v413, -inf
      %415 = vmax.xlane.f32.xlu0 %v414
      %v416 = vpop.xlane.xlu0 %415
      %v417 = vsub.f32 %v413, %v416
      %v418 = vmul.f32 %v417, 1.442695
      %v419 = vpow.pop %v418
      %v420 = vsel %vm167, %v419, 0.0
      %421 = vadd.xlane.f32.xlu0 %v420
      %v422 = vpop.xlane.xlu0 %421
      %v423 = vrcp.pop %v422
      %v424 = vmul.f32 %v419, %v423
      %v425 = vpack.c.bf16 %v424, %v424
      %426 = vrot.lane.b32.xlu0 %v116, 48
      %v427 = vpop.permute.xlu0 %426
      %v429 = vsel %vm182, %v425, 0
      %v432 = vand.u32 %v427, %v189
      %434 = vmatprep.subr.bf16.mxu0 0
      %435 = vmatpush1.bf16.msra.mxu0 %v432
      %436 = vmatprep.subr.bf16.mxu0 0
      %437 = vmatpush1.bf16.msra.mxu0 0
      %438 = vmatprep.subr.bf16.mxu0 0
      %439 = vmatpush1.bf16.msra.mxu0 0
      %440 = vmatprep.subr.bf16.mxu0 0
      %441 = vmatpush1.bf16.msra.mxu0 0
      %442 = vmatprep.subr.bf16.mxu0 0
      %443 = vmatpush1.bf16.msra.mxu0 0
      %444 = vmatprep.subr.bf16.mxu0 0
      %445 = vmatpush1.bf16.msra.mxu0 0
      %446 = vmatprep.subr.bf16.mxu0 0
      %447 = vmatpush1.bf16.msra.mxu0 0
      %448 = vmatprep.subr.bf16.mxu0 0
      %449 = vmatpush1.bf16.msra.mxu0 0
      %450 = vmatprep.subr.bf16.mxu0 0
      %451 = vmatpush1.bf16.msra.mxu0 0
      %452 = vmatprep.subr.bf16.mxu0 0
      %453 = vmatpush1.bf16.msra.mxu0 0
      %454 = vmatprep.subr.bf16.mxu0 0
      %455 = vmatpush1.bf16.msra.mxu0 0
      %456 = vmatprep.subr.bf16.mxu0 0
      %457 = vmatpush1.bf16.msra.mxu0 0
      %458 = vmatprep.subr.bf16.mxu0 0
      %459 = vmatpush1.bf16.msra.mxu0 0
      %460 = vmatprep.subr.bf16.mxu0 0
      %461 = vmatpush1.bf16.msra.mxu0 0
      %462 = vmatprep.subr.bf16.mxu0 0
      %463 = vmatpush1.bf16.msra.mxu0 0
      %464 = vmatprep.subr.bf16.mxu0 0
      %465 = vmatpush1.bf16.msra.mxu0 0
      %466 = vmatprep.mubr.bf16.mxu0 0
      %467 = vmatmul.mubr.bf16.gmra.mrb[0].mxu0 %v429
      %v468 = vpop.f32.mrb[0].mxu0
      %v469 = vadd.f32 0.0, %v468
      %v470 = vpop.f32.mrb[0].mxu0
      %v471 = vpop.f32.mrb[0].mxu0
      %v472 = vpop.f32.mrb[0].mxu0
      %473 = vdwg.mxu0
      %v474 = vpack.c.bf16 %v469, %v469
      %v476 = vunpack.c.l.b16 %v474
      %v477 = vpack.c.b16 %v476, %v476
      %478 = vrot.lane.b32.xlu0 %v477, 16
      %v479 = vpop.permute.xlu0 %478
      %vm481 = vcmask 190592
      %vm482 = vmand %vm481, %vm235
      %v483 = vld [vmem:[%s111] sm:$0x7]
      %v484 = vsel %vm482, %v479, %v483
      %485 = vst [vmem:[%s111] sm:$0x7] %v484
      %486 = vrot.lane.b32.xlu0 %v116, 104
      %v487 = vpop.permute.xlu0 %486
      %488 = vrot.lane.b32.xlu0 %v116, 72
      %v489 = vpop.permute.xlu0 %488
      %v491 = vsel %vm119, %v487, 0
      %v494 = vsel %vm119, %v489, 0
      %496 = vmatprep.subr.bf16.mxu0 0
      %497 = vmatpush1.bf16.xpose.msra.mxu0 %v494
      %498 = vmatprep.subr.bf16.mxu0 0
      %499 = vmatpush1.bf16.xpose.msra.mxu0 0
      %500 = vmatprep.subr.bf16.mxu0 0
      %501 = vmatpush1.bf16.xpose.msra.mxu0 0
      %502 = vmatprep.subr.bf16.mxu0 0
      %503 = vmatpush1.bf16.xpose.msra.mxu0 0
      %504 = vmatprep.subr.bf16.mxu0 0
      %505 = vmatpush1.bf16.xpose.msra.mxu0 0
      %506 = vmatprep.subr.bf16.mxu0 0
      %507 = vmatpush1.bf16.xpose.msra.mxu0 0
      %508 = vmatprep.subr.bf16.mxu0 0
      %509 = vmatpush1.bf16.xpose.msra.mxu0 0
      %510 = vmatprep.subr.bf16.mxu0 0
      %511 = vmatpush1.bf16.xpose.msra.mxu0 0
      %512 = vmatprep.subr.bf16.mxu0 0
      %513 = vmatpush1.bf16.xpose.msra.mxu0 0
      %514 = vmatprep.subr.bf16.mxu0 0
      %515 = vmatpush1.bf16.xpose.msra.mxu0 0
      %516 = vmatprep.subr.bf16.mxu0 0
      %517 = vmatpush1.bf16.xpose.msra.mxu0 0
      %518 = vmatprep.subr.bf16.mxu0 0
      %519 = vmatpush1.bf16.xpose.msra.mxu0 0
      %520 = vmatprep.subr.bf16.mxu0 0
      %521 = vmatpush1.bf16.xpose.msra.mxu0 0
      %522 = vmatprep.subr.bf16.mxu0 0
      %523 = vmatpush1.bf16.xpose.msra.mxu0 0
      %524 = vmatprep.subr.bf16.mxu0 0
      %525 = vmatpush1.bf16.xpose.msra.mxu0 0
      %526 = vmatprep.subr.bf16.mxu0 0
      %527 = vmatpush1.bf16.xpose.msra.mxu0 0
      %528 = vmatprep.mubr.bf16.mxu0 0
      %529 = vmatmul.mubr.bf16.gmra.mrb[0].mxu0 %v491
      %v530 = vpop.f32.mrb[0].mxu0
      %v531 = vadd.f32 0.0, %v530
      %v532 = vpop.f32.mrb[0].mxu0
      %v533 = vpop.f32.mrb[0].mxu0
      %v534 = vpop.f32.mrb[0].mxu0
      %535 = vdwg.mxu0
      %v536 = vmul.f32 %v531, 0.35355338
      %v537 = vsel %vm167, %v536, -inf
      %538 = vmax.xlane.f32.xlu0 %v537
      %v539 = vpop.xlane.xlu0 %538
      %v540 = vsub.f32 %v536, %v539
      %v541 = vmul.f32 %v540, 1.442695
      %v542 = vpow.pop %v541
      %v543 = vsel %vm167, %v542, 0.0
      %544 = vadd.xlane.f32.xlu0 %v543
      %v545 = vpop.xlane.xlu0 %544
      %v546 = vrcp.pop %v545
      %v547 = vmul.f32 %v542, %v546
      %v548 = vpack.c.bf16 %v547, %v547
      %549 = vrot.lane.b32.xlu0 %v116, 40
      %v550 = vpop.permute.xlu0 %549
      %v552 = vsel %vm182, %v548, 0
      %v555 = vand.u32 %v550, %v189
      %557 = vmatprep.subr.bf16.mxu0 0
      %558 = vmatpush1.bf16.msra.mxu0 %v555
      %559 = vmatprep.subr.bf16.mxu0 0
      %560 = vmatpush1.bf16.msra.mxu0 0
      %561 = vmatprep.subr.bf16.mxu0 0
      %562 = vmatpush1.bf16.msra.mxu0 0
      %563 = vmatprep.subr.bf16.mxu0 0
      %564 = vmatpush1.bf16.msra.mxu0 0
      %565 = vmatprep.subr.bf16.mxu0 0
      %566 = vmatpush1.bf16.msra.mxu0 0
      %567 = vmatprep.subr.bf16.mxu0 0
      %568 = vmatpush1.bf16.msra.mxu0 0
      %569 = vmatprep.subr.bf16.mxu0 0
      %570 = vmatpush1.bf16.msra.mxu0 0
      %571 = vmatprep.subr.bf16.mxu0 0
      %572 = vmatpush1.bf16.msra.mxu0 0
      %573 = vmatprep.subr.bf16.mxu0 0
      %574 = vmatpush1.bf16.msra.mxu0 0
      %575 = vmatprep.subr.bf16.mxu0 0
      %576 = vmatpush1.bf16.msra.mxu0 0
      %577 = vmatprep.subr.bf16.mxu0 0
      %578 = vmatpush1.bf16.msra.mxu0 0
      %579 = vmatprep.subr.bf16.mxu0 0
      %580 = vmatpush1.bf16.msra.mxu0 0
      %581 = vmatprep.subr.bf16.mxu0 0
      %582 = vmatpush1.bf16.msra.mxu0 0
      %583 = vmatprep.subr.bf16.mxu0 0
      %584 = vmatpush1.bf16.msra.mxu0 0
      %585 = vmatprep.subr.bf16.mxu0 0
      %586 = vmatpush1.bf16.msra.mxu0 0
      %587 = vmatprep.subr.bf16.mxu0 0
      %588 = vmatpush1.bf16.msra.mxu0 0
      %589 = vmatprep.mubr.bf16.mxu0 0
      %590 = vmatmul.mubr.bf16.gmra.mrb[0].mxu0 %v552
      %v591 = vpop.f32.mrb[0].mxu0
      %v592 = vadd.f32 0.0, %v591
      %v593 = vpop.f32.mrb[0].mxu0
      %v594 = vpop.f32.mrb[0].mxu0
      %v595 = vpop.f32.mrb[0].mxu0
      %596 = vdwg.mxu0
      %v597 = vpack.c.bf16 %v592, %v592
      %v599 = vunpack.c.l.b16 %v597
      %v600 = vpack.c.b16 %v599, %v599
      %601 = vrot.lane.b32.xlu0 %v600, 24
      %v602 = vpop.permute.xlu0 %601
      %vm604 = vcmask 256192
      %vm605 = vmand %vm604, %vm235
      %v606 = vld [vmem:[%s111] sm:$0x7]
      %v607 = vsel %vm605, %v602, %v606
      %608 = vst [vmem:[%s111] sm:$0x7] %v607
      %p609 = scmp.lt.s32.totalorder %s12, 1
      %s610 = scalar_select %p609, %s12, 1
      %s611 = smul.addr %s610, 4
      %s612 = scalar_lea.vmem %s1, %s611
      // Predicated region
      $region25: #{clip_vitb16_forward.28} parent=23 // pred_check
        %p613 = pneg %p56
      $region26: #{clip_vitb16_forward.28} parent=23 // pred_check_branch
        %615 = sbr.rel (%p613) target = $region28
      $region27: #{clip_vitb16_forward.28} parent=23 // pred_region
        _
      $region28: #{clip_vitb16_forward.28} parent=23 // pred_fallthru
        _
    $region24: #{clip_vitb16_forward.28} parent=5 // pred_fallthru
      _
    %p616 = scmp.le.s32.totalorder 2, %s7
    // Predicated region
    $region29: #{clip_vitb16_forward.28} parent=5 // pred_check
      %p617 = pneg %p616
    $region30: #{clip_vitb16_forward.28} parent=5 // pred_check_branch
      %619 = sbr.rel (%p617) target = $region32
    $region31: #{clip_vitb16_forward.28} parent=5 // pred_region
      %s620 = ssub.s32 %s7, 2
      // Predicated region
      $region33: #{clip_vitb16_forward.28} parent=31 // pred_check
        %p621 = pneg %p62
      $region34: #{clip_vitb16_forward.28} parent=31 // pred_check_branch
        %623 = sbr.rel (%p621) target = $region36
      $region35: #{clip_vitb16_forward.28} parent=31 // pred_region
        %p624 = scmp.lt.s32.totalorder %s13, 1
        %s625 = scalar_select %p624, %s13, 1
        %s626 = smul.addr %s625, 4
        %s627 = scalar_lea.vmem %s1, %s626
      $region36: #{clip_vitb16_forward.28} parent=31 // pred_fallthru
        _
    $region32: #{clip_vitb16_forward.28} parent=5 // pred_fallthru
      _
  $region6: #{clip_vitb16_forward.28} parent=0 // loop_footer
    %s11 = sadd.s32 1, %s7
  $region7: #{clip_vitb16_forward.28} parent=0 // loop_footer_branch
    %6 = sbr.rel target = $region3
  $region8: #{clip_vitb16_forward.28} parent=0 // loop_exit
    _

// kernel: clip_vitb16_forward.30
$region0: #{clip_vitb16_forward.30}
  #allocation0 [shape = 'u32[]', space=smem, size = 0x4, offset = 0x4, fixed_abs, tag = 'smem constant byte address 0x4 - core index']
  #allocation1 [shape = 'u32[144,128]{1,0:T(1,128)}', space=vmem, size = 0x12000, scoped, tag = 'internal scratch']
  %s0 = inlined_call_operand.vmem [shape: bf16[16,32], index: 0, kind: input, shape index: {}]
  %s1 = inlined_call_operand.vmem [shape: f32[1,32], index: 1, kind: input, shape index: {}]
  %s2 = inlined_call_operand.vmem [shape: f32[1,32], index: 2, kind: input, shape index: {}]
  %s3 = inlined_call_operand.vmem [shape: bf16[32,64], index: 3, kind: input, shape index: {}]
  %s4 = inlined_call_operand.vmem [shape: f32[1,64], index: 4, kind: input, shape index: {}]
  %s5 = inlined_call_operand.vmem [shape: bf16[16,64], index: 5, kind: output, shape index: {}]
  %s6 = sld [smem:[#allocation0]]
  $region30: #{clip_vitb16_forward.30} parent=0
    _
  %s8 = ssub.s32 1, %s6
  %s9 = scalar_select 0, %s8, %s6
  // Predicated region
  $region2: #{clip_vitb16_forward.30} parent=0 // pred_check
    _
  $region3: #{clip_vitb16_forward.30} parent=0 // pred_check_branch
    %11 = sbr.rel (0) target = $region5
  $region4: #{clip_vitb16_forward.30} parent=0 // pred_region
    _
  $region5: #{clip_vitb16_forward.30} parent=0 // pred_fallthru
    _
  // Predicated region
  $region6: #{clip_vitb16_forward.30} parent=0 // pred_check
    _
  $region7: #{clip_vitb16_forward.30} parent=0 // pred_check_branch
    %13 = sbr.rel (0) target = $region9
  $region8: #{clip_vitb16_forward.30} parent=0 // pred_region
    _
  $region9: #{clip_vitb16_forward.30} parent=0 // pred_fallthru
    _
  // Predicated region
  $region10: #{clip_vitb16_forward.30} parent=0 // pred_check
    _
  $region11: #{clip_vitb16_forward.30} parent=0 // pred_check_branch
    %15 = sbr.rel (0) target = $region13
  $region12: #{clip_vitb16_forward.30} parent=0 // pred_region
    _
  $region13: #{clip_vitb16_forward.30} parent=0 // pred_fallthru
    _
  // Predicated region
  $region14: #{clip_vitb16_forward.30} parent=0 // pred_check
    _
  $region15: #{clip_vitb16_forward.30} parent=0 // pred_check_branch
    %17 = sbr.rel (0) target = $region17
  $region16: #{clip_vitb16_forward.30} parent=0 // pred_region
    _
  $region17: #{clip_vitb16_forward.30} parent=0 // pred_fallthru
    _
  // Predicated region
  $region18: #{clip_vitb16_forward.30} parent=0 // pred_check
    _
  $region19: #{clip_vitb16_forward.30} parent=0 // pred_check_branch
    %19 = sbr.rel (0) target = $region21
  $region20: #{clip_vitb16_forward.30} parent=0 // pred_region
    _
  $region21: #{clip_vitb16_forward.30} parent=0 // pred_fallthru
    _
  %v21 = vld [vmem:[%s0] sm:$0xf]
  %v22 = vld [vmem:[%s0 + $0x4] sm:$0xf]
  %v23 = vunpack.c.l.bf16 %v21
  %v24 = vunpack.c.l.bf16 %v22
  %vm25 = vcmask 261120
  %v26 = vsel %vm25, %v23, 0.0
  %27 = vadd.xlane.f32.xlu0 %v26
  %v28 = vpop.xlane.xlu0 %27
  %v29 = vsel %vm25, %v24, 0.0
  %30 = vadd.xlane.f32.xlu0 %v29
  %v31 = vpop.xlane.xlu0 %30
  %v32 = vrcp.pop 32.0
  %v33 = vmul.f32 %v28, %v32
  %v34 = vmul.f32 %v31, %v32
  %v35 = vsub.f32 %v23, %v33
  %v36 = vsub.f32 %v24, %v34
  %v37 = vmul.f32 %v35, %v35
  %v38 = vmul.f32 %v36, %v36
  %v39 = vsel %vm25, %v37, 0.0
  %40 = vadd.xlane.f32.xlu0 %v39
  %v41 = vpop.xlane.xlu0 %40
  %v42 = vsel %vm25, %v38, 0.0
  %43 = vadd.xlane.f32.xlu0 %v42
  %v44 = vpop.xlane.xlu0 %43
  %v45 = vmul.f32 %v41, %v32
  %v46 = vmul.f32 %v44, %v32
  %v47 = vadd.f32 %v45, 1e-05
  %v48 = vadd.f32 %v46, 1e-05
  %v49 = vrsqrt.pop %v47
  %v50 = vrsqrt.pop %v48
  %v51 = vmul.f32 %v35, %v49
  %v52 = vmul.f32 %v36, %v50
  %v53 = vld [vmem:[%s1] sm:$0x1]
  %v55 = vlaneseq
  %v56 = vshrl.u32 %v55, 7
  %v57 = vsub.s32 0, %v56
  %v58 = vrot.slane %v53, %v57
  %v60 = vmul.f32 %v51, %v58
  %v61 = vmul.f32 %v52, %v58
  %v62 = vld [vmem:[%s2] sm:$0x1]
  %v64 = vlaneseq
  %v65 = vshrl.u32 %v64, 7
  %v66 = vsub.s32 0, %v65
  %v67 = vrot.slane %v62, %v66
  %v69 = vadd.f32 %v60, %v67
  %v70 = vadd.f32 %v61, %v67
  %v71 = vpack.c.bf16 %v70, %v69
  %v72 = vld [vmem:[%s3] sm:$0xf]
  %v73 = vld [vmem:[%s3 + $0x4] sm:$0xf]
  %v74 = vld [vmem:[%s3 + $0x8] sm:$0xf]
  %v75 = vld [vmem:[%s3 + $0xc] sm:$0xf]
  %v76 = vld [vmem:[%s4] sm:$0x1]
  %v78 = vlaneseq
  %v79 = vshrl.u32 %v78, 7
  %v80 = vsub.s32 0, %v79
  %v81 = vrot.slane %v76, %v80
  %v87 = vunpack.c.l.b16 %v72
  %v88 = vunpack.c.l.b16 %v73
  %v89 = vunpack.c.l.b16 %v74
  %v90 = vunpack.c.l.b16 %v75
  %v91 = vpack.c.b16 %v88, %v87
  %v92 = vpack.c.b16 %v90, %v89
  %v96 = vsel %vm25, %v71, 0
  %98 = vmatprep.subr.bf16.mxu0 0
  %99 = vmatpush1.bf16.msra.mxu0 %v91
  %100 = vmatprep.subr.bf16.mxu0 0
  %101 = vmatpush1.bf16.msra.mxu0 %v92
  %102 = vmatprep.subr.bf16.mxu0 0
  %103 = vmatpush1.bf16.msra.mxu0 0
  %104 = vmatprep.subr.bf16.mxu0 0
  %105 = vmatpush1.bf16.msra.mxu0 0
  %106 = vmatprep.subr.bf16.mxu0 0
  %107 = vmatpush1.bf16.msra.mxu0 0
  %108 = vmatprep.subr.bf16.mxu0 0
  %109 = vmatpush1.bf16.msra.mxu0 0
  %110 = vmatprep.subr.bf16.mxu0 0
  %111 = vmatpush1.bf16.msra.mxu0 0
  %112 = vmatprep.subr.bf16.mxu0 0
  %113 = vmatpush1.bf16.msra.mxu0 0
  %114 = vmatprep.subr.bf16.mxu0 0
  %115 = vmatpush1.bf16.msra.mxu0 0
  %116 = vmatprep.subr.bf16.mxu0 0
  %117 = vmatpush1.bf16.msra.mxu0 0
  %118 = vmatprep.subr.bf16.mxu0 0
  %119 = vmatpush1.bf16.msra.mxu0 0
  %120 = vmatprep.subr.bf16.mxu0 0
  %121 = vmatpush1.bf16.msra.mxu0 0
  %122 = vmatprep.subr.bf16.mxu0 0
  %123 = vmatpush1.bf16.msra.mxu0 0
  %124 = vmatprep.subr.bf16.mxu0 0
  %125 = vmatpush1.bf16.msra.mxu0 0
  %126 = vmatprep.subr.bf16.mxu0 0
  %127 = vmatpush1.bf16.msra.mxu0 0
  %128 = vmatprep.subr.bf16.mxu0 0
  %129 = vmatpush1.bf16.msra.mxu0 0
  %130 = vmatprep.mubr.bf16.mxu0 0
  %131 = vmatmul.mubr.bf16.gmra.mrb[0].mxu0 %v96
  %v132 = vpop.f32.mrb[0].mxu0
  %v133 = vadd.f32 %v81, %v132
  %v134 = vpop.f32.mrb[0].mxu0
  %v135 = vpop.f32.mrb[0].mxu0
  %v136 = vadd.f32 %v81, %v135
  %v137 = vpop.f32.mrb[0].mxu0
  %138 = vdwg.mxu0
  %v139 = vmul.f32 %v133, 1.702
  %v140 = vmul.f32 %v136, 1.702
  %v141 = vxor.u32 %v139, 2147483648
  %v142 = vxor.u32 %v140, 2147483648
  %v143 = vmul.f32 %v141, 1.442695
  %v144 = vpow.pop %v143
  %v145 = vmul.f32 %v142, 1.442695
  %v146 = vpow.pop %v145
  %v147 = vadd.f32 %v144, 1.0
  %v148 = vadd.f32 %v146, 1.0
  %v149 = vrcp.pop %v147
  %v150 = vmul.f32 1.0, %v149
  %v151 = vrcp.pop %v148
  %v152 = vmul.f32 1.0, %v151
  %v153 = vmul.f32 %v133, %v150
  %v154 = vmul.f32 %v136, %v152
  %v155 = vpack.c.bf16 %v154, %v153
  %v157 = vunpack.c.l.b16 %v155
  %v158 = vunpack.c.h.b16 %v155
  %v159 = vpack.c.b16 %v157, %v157
  %v160 = vpack.c.b16 %v158, %v158
  %vm163 = vcmask 519168
  %164 = vst.msk [vmem:[%s5] sm:$0xf] %vm163, %v159
  %165 = vst.msk [vmem:[%s5 + $0x4] sm:$0xf] %vm163, %v160
  // Predicated region
  $region22: #{clip_vitb16_forward.30} parent=0 // pred_check
    _
  $region23: #{clip_vitb16_forward.30} parent=0 // pred_check_branch
    %167 = sbr.rel (0) target = $region25
  $region24: #{clip_vitb16_forward.30} parent=0 // pred_region
    _
  $region25: #{clip_vitb16_forward.30} parent=0 // pred_fallthru
    _
  // Predicated region
  $region26: #{clip_vitb16_forward.30} parent=0 // pred_check
    _
  $region27: #{clip_vitb16_forward.30} parent=0 // pred_check_branch
    %169 = sbr.rel (0) target = $region29
  $region28: #{clip_vitb16_forward.30} parent=0 // pred_region
    _
  $region29: #{clip_vitb16_forward.30} parent=0 // pred_fallthru
    _

// kernel: clip_vitb16_forward.31
$region0: #{clip_vitb16_forward.31}
  #allocation0 [shape = 'u32[]', space=smem, size = 0x4, offset = 0x4, fixed_abs, tag = 'smem constant byte address 0x4 - core index']
  #allocation1 [shape = 'u32[144,128]{1,0:T(1,128)}', space=vmem, size = 0x12000, scoped, tag = 'internal scratch']
  %s0 = inlined_call_operand.vmem [shape: bf16[16,64], index: 0, kind: input, shape index: {}]
  %s1 = inlined_call_operand.vmem [shape: bf16[64,32], index: 1, kind: input, shape index: {}]
  %s2 = inlined_call_operand.vmem [shape: f32[1,32], index: 2, kind: input, shape index: {}]
  %s3 = inlined_call_operand.vmem [shape: bf16[16,32], index: 3, kind: input, shape index: {}]
  %s4 = inlined_call_operand.vmem [shape: bf16[16,32], index: 4, kind: output, shape index: {}]
  %s5 = sld [smem:[#allocation0]]
  $region26: #{clip_vitb16_forward.31} parent=0
    _
  %s7 = ssub.s32 1, %s5
  %s8 = scalar_select 0, %s7, %s5
  // Predicated region
  $region2: #{clip_vitb16_forward.31} parent=0 // pred_check
    _
  $region3: #{clip_vitb16_forward.31} parent=0 // pred_check_branch
    %10 = sbr.rel (0) target = $region5
  $region4: #{clip_vitb16_forward.31} parent=0 // pred_region
    _
  $region5: #{clip_vitb16_forward.31} parent=0 // pred_fallthru
    _
  // Predicated region
  $region6: #{clip_vitb16_forward.31} parent=0 // pred_check
    _
  $region7: #{clip_vitb16_forward.31} parent=0 // pred_check_branch
    %12 = sbr.rel (0) target = $region9
  $region8: #{clip_vitb16_forward.31} parent=0 // pred_region
    _
  $region9: #{clip_vitb16_forward.31} parent=0 // pred_fallthru
    _
  // Predicated region
  $region10: #{clip_vitb16_forward.31} parent=0 // pred_check
    _
  $region11: #{clip_vitb16_forward.31} parent=0 // pred_check_branch
    %14 = sbr.rel (0) target = $region13
  $region12: #{clip_vitb16_forward.31} parent=0 // pred_region
    _
  $region13: #{clip_vitb16_forward.31} parent=0 // pred_fallthru
    _
  // Predicated region
  $region14: #{clip_vitb16_forward.31} parent=0 // pred_check
    _
  $region15: #{clip_vitb16_forward.31} parent=0 // pred_check_branch
    %16 = sbr.rel (0) target = $region17
  $region16: #{clip_vitb16_forward.31} parent=0 // pred_region
    _
  $region17: #{clip_vitb16_forward.31} parent=0 // pred_fallthru
    _
  %v18 = vld [vmem:[%s0] sm:$0xf]
  %v19 = vld [vmem:[%s0 + $0x4] sm:$0xf]
  %v20 = vld [vmem:[%s1] sm:$0xf]
  %v21 = vld [vmem:[%s1 + $0x4] sm:$0xf]
  %v22 = vld [vmem:[%s1 + $0x8] sm:$0xf]
  %v23 = vld [vmem:[%s1 + $0xc] sm:$0xf]
  %v24 = vld [vmem:[%s1 + $0x10] sm:$0xf]
  %v25 = vld [vmem:[%s1 + $0x14] sm:$0xf]
  %v26 = vld [vmem:[%s1 + $0x18] sm:$0xf]
  %v27 = vld [vmem:[%s1 + $0x1c] sm:$0xf]
  %v28 = vld [vmem:[%s2] sm:$0x1]
  %v30 = vlaneseq
  %v31 = vshrl.u32 %v30, 7
  %v32 = vsub.s32 0, %v31
  %v33 = vrot.slane %v28, %v32
  %v37 = vunpack.c.l.b16 %v18
  %v38 = vunpack.c.l.b16 %v19
  %v39 = vpack.c.b16 %v38, %v37
  %v48 = vunpack.c.l.b16 %v20
  %v49 = vunpack.c.l.b16 %v21
  %v50 = vunpack.c.l.b16 %v22
  %v51 = vunpack.c.l.b16 %v23
  %v52 = vunpack.c.l.b16 %v24
  %v53 = vunpack.c.l.b16 %v25
  %v54 = vunpack.c.l.b16 %v26
  %v55 = vunpack.c.l.b16 %v27
  %v56 = vpack.c.b16 %v49, %v48
  %v57 = vpack.c.b16 %v51, %v50
  %v58 = vpack.c.b16 %v53, %v52
  %v59 = vpack.c.b16 %v55, %v54
  %vm64 = vcmask 523264
  %v66 = vsel %vm64, %v39, 0
  %68 = vmatprep.subr.bf16.mxu0 0
  %69 = vmatpush1.bf16.msra.mxu0 %v56
  %70 = vmatprep.subr.bf16.mxu0 0
  %71 = vmatpush1.bf16.msra.mxu0 %v57
  %72 = vmatprep.subr.bf16.mxu0 0
  %73 = vmatpush1.bf16.msra.mxu0 %v58
  %74 = vmatprep.subr.bf16.mxu0 0
  %75 = vmatpush1.bf16.msra.mxu0 %v59
  %76 = vmatprep.subr.bf16.mxu0 0
  %77 = vmatpush1.bf16.msra.mxu0 0
  %78 = vmatprep.subr.bf16.mxu0 0
  %79 = vmatpush1.bf16.msra.mxu0 0
  %80 = vmatprep.subr.bf16.mxu0 0
  %81 = vmatpush1.bf16.msra.mxu0 0
  %82 = vmatprep.subr.bf16.mxu0 0
  %83 = vmatpush1.bf16.msra.mxu0 0
  %84 = vmatprep.subr.bf16.mxu0 0
  %85 = vmatpush1.bf16.msra.mxu0 0
  %86 = vmatprep.subr.bf16.mxu0 0
  %87 = vmatpush1.bf16.msra.mxu0 0
  %88 = vmatprep.subr.bf16.mxu0 0
  %89 = vmatpush1.bf16.msra.mxu0 0
  %90 = vmatprep.subr.bf16.mxu0 0
  %91 = vmatpush1.bf16.msra.mxu0 0
  %92 = vmatprep.subr.bf16.mxu0 0
  %93 = vmatpush1.bf16.msra.mxu0 0
  %94 = vmatprep.subr.bf16.mxu0 0
  %95 = vmatpush1.bf16.msra.mxu0 0
  %96 = vmatprep.subr.bf16.mxu0 0
  %97 = vmatpush1.bf16.msra.mxu0 0
  %98 = vmatprep.subr.bf16.mxu0 0
  %99 = vmatpush1.bf16.msra.mxu0 0
  %100 = vmatprep.mubr.bf16.mxu0 0
  %101 = vmatmul.mubr.bf16.gmra.mrb[0].mxu0 %v66
  %v102 = vpop.f32.mrb[0].mxu0
  %v103 = vadd.f32 %v33, %v102
  %v104 = vpop.f32.mrb[0].mxu0
  %v105 = vpop.f32.mrb[0].mxu0
  %v106 = vadd.f32 %v33, %v105
  %v107 = vpop.f32.mrb[0].mxu0
  %108 = vdwg.mxu0
  %v109 = vld [vmem:[%s3] sm:$0xf]
  %v110 = vld [vmem:[%s3 + $0x4] sm:$0xf]
  %v111 = vunpack.c.l.bf16 %v109
  %v112 = vunpack.c.l.bf16 %v110
  %v113 = vadd.f32 %v103, %v111
  %v114 = vadd.f32 %v106, %v112
  %v115 = vpack.c.bf16 %v114, %v113
  %v117 = vunpack.c.l.b16 %v115
  %v118 = vunpack.c.h.b16 %v115
  %v119 = vpack.c.b16 %v117, %v117
  %v120 = vpack.c.b16 %v118, %v118
  %vm123 = vcmask 257024
  %124 = vst.msk [vmem:[%s4] sm:$0xf] %vm123, %v119
  %125 = vst.msk [vmem:[%s4 + $0x4] sm:$0xf] %vm123, %v120
  // Predicated region
  $region18: #{clip_vitb16_forward.31} parent=0 // pred_check
    _
  $region19: #{clip_vitb16_forward.31} parent=0 // pred_check_branch
    %127 = sbr.rel (0) target = $region21
  $region20: #{clip_vitb16_forward.31} parent=0 // pred_region
    _
  $region21: #{clip_vitb16_forward.31} parent=0 // pred_fallthru
    _
  // Predicated region
  $region22: #{clip_vitb16_forward.31} parent=0 // pred_check
    _
  $region23: #{clip_vitb16_forward.31} parent=0 // pred_check_branch
    %129 = sbr.rel (0) target = $region25
  $region24: #{clip_vitb16_forward.31} parent=0 // pred_region
    _
  $region25: #{clip_vitb16_forward.31} parent=0 // pred_fallthru
    _

// kernel: clip_vitb16_forward.29
$region0: #{clip_vitb16_forward.29}
  #allocation0 [shape = 'u32[]', space=smem, size = 0x4, offset = 0x4, fixed_abs, tag = 'smem constant byte address 0x4 - core index']
  #allocation1 [shape = 'u32[144,128]{1,0:T(1,128)}', space=vmem, size = 0x12000, scoped, tag = 'internal scratch']
  %s0 = inlined_call_operand.vmem [shape: bf16[16,32], index: 0, kind: input, shape index: {}]
  %s1 = inlined_call_operand.vmem [shape: bf16[32,32], index: 1, kind: input, shape index: {}]
  %s2 = inlined_call_operand.vmem [shape: f32[1,32], index: 2, kind: input, shape index: {}]
  %s3 = inlined_call_operand.vmem [shape: bf16[16,32], index: 3, kind: input, shape index: {}]
  %s4 = inlined_call_operand.vmem [shape: bf16[16,32], index: 4, kind: output, shape index: {}]
  %s5 = sld [smem:[#allocation0]]
  $region26: #{clip_vitb16_forward.29} parent=0
    _
  %s7 = ssub.s32 1, %s5
  %s8 = scalar_select 0, %s7, %s5
  // Predicated region
  $region2: #{clip_vitb16_forward.29} parent=0 // pred_check
    _
  $region3: #{clip_vitb16_forward.29} parent=0 // pred_check_branch
    %10 = sbr.rel (0) target = $region5
  $region4: #{clip_vitb16_forward.29} parent=0 // pred_region
    _
  $region5: #{clip_vitb16_forward.29} parent=0 // pred_fallthru
    _
  // Predicated region
  $region6: #{clip_vitb16_forward.29} parent=0 // pred_check
    _
  $region7: #{clip_vitb16_forward.29} parent=0 // pred_check_branch
    %12 = sbr.rel (0) target = $region9
  $region8: #{clip_vitb16_forward.29} parent=0 // pred_region
    _
  $region9: #{clip_vitb16_forward.29} parent=0 // pred_fallthru
    _
  // Predicated region
  $region10: #{clip_vitb16_forward.29} parent=0 // pred_check
    _
  $region11: #{clip_vitb16_forward.29} parent=0 // pred_check_branch
    %14 = sbr.rel (0) target = $region13
  $region12: #{clip_vitb16_forward.29} parent=0 // pred_region
    _
  $region13: #{clip_vitb16_forward.29} parent=0 // pred_fallthru
    _
  // Predicated region
  $region14: #{clip_vitb16_forward.29} parent=0 // pred_check
    _
  $region15: #{clip_vitb16_forward.29} parent=0 // pred_check_branch
    %16 = sbr.rel (0) target = $region17
  $region16: #{clip_vitb16_forward.29} parent=0 // pred_region
    _
  $region17: #{clip_vitb16_forward.29} parent=0 // pred_fallthru
    _
  %v18 = vld [vmem:[%s0] sm:$0xf]
  %v19 = vld [vmem:[%s0 + $0x4] sm:$0xf]
  %v20 = vld [vmem:[%s1] sm:$0xf]
  %v21 = vld [vmem:[%s1 + $0x4] sm:$0xf]
  %v22 = vld [vmem:[%s1 + $0x8] sm:$0xf]
  %v23 = vld [vmem:[%s1 + $0xc] sm:$0xf]
  %v24 = vld [vmem:[%s2] sm:$0x1]
  %v26 = vlaneseq
  %v27 = vshrl.u32 %v26, 7
  %v28 = vsub.s32 0, %v27
  %v29 = vrot.slane %v24, %v28
  %v33 = vunpack.c.l.b16 %v18
  %v34 = vunpack.c.l.b16 %v19
  %v35 = vpack.c.b16 %v34, %v33
  %v40 = vunpack.c.l.b16 %v20
  %v41 = vunpack.c.l.b16 %v21
  %v42 = vunpack.c.l.b16 %v22
  %v43 = vunpack.c.l.b16 %v23
  %v44 = vpack.c.b16 %v41, %v40
  %v45 = vpack.c.b16 %v43, %v42
  %vm48 = vcmask 261120
  %v50 = vsel %vm48, %v35, 0
  %52 = vmatprep.subr.bf16.mxu0 0
  %53 = vmatpush1.bf16.msra.mxu0 %v44
  %54 = vmatprep.subr.bf16.mxu0 0
  %55 = vmatpush1.bf16.msra.mxu0 %v45
  %56 = vmatprep.subr.bf16.mxu0 0
  %57 = vmatpush1.bf16.msra.mxu0 0
  %58 = vmatprep.subr.bf16.mxu0 0
  %59 = vmatpush1.bf16.msra.mxu0 0
  %60 = vmatprep.subr.bf16.mxu0 0
  %61 = vmatpush1.bf16.msra.mxu0 0
  %62 = vmatprep.subr.bf16.mxu0 0
  %63 = vmatpush1.bf16.msra.mxu0 0
  %64 = vmatprep.subr.bf16.mxu0 0
  %65 = vmatpush1.bf16.msra.mxu0 0
  %66 = vmatprep.subr.bf16.mxu0 0
  %67 = vmatpush1.bf16.msra.mxu0 0
  %68 = vmatprep.subr.bf16.mxu0 0
  %69 = vmatpush1.bf16.msra.mxu0 0
  %70 = vmatprep.subr.bf16.mxu0 0
  %71 = vmatpush1.bf16.msra.mxu0 0
  %72 = vmatprep.subr.bf16.mxu0 0
  %73 = vmatpush1.bf16.msra.mxu0 0
  %74 = vmatprep.subr.bf16.mxu0 0
  %75 = vmatpush1.bf16.msra.mxu0 0
  %76 = vmatprep.subr.bf16.mxu0 0
  %77 = vmatpush1.bf16.msra.mxu0 0
  %78 = vmatprep.subr.bf16.mxu0 0
  %79 = vmatpush1.bf16.msra.mxu0 0
  %80 = vmatprep.subr.bf16.mxu0 0
  %81 = vmatpush1.bf16.msra.mxu0 0
  %82 = vmatprep.subr.bf16.mxu0 0
  %83 = vmatpush1.bf16.msra.mxu0 0
  %84 = vmatprep.mubr.bf16.mxu0 0
  %85 = vmatmul.mubr.bf16.gmra.mrb[0].mxu0 %v50
  %v86 = vpop.f32.mrb[0].mxu0
  %v87 = vadd.f32 %v29, %v86
  %v88 = vpop.f32.mrb[0].mxu0
  %v89 = vpop.f32.mrb[0].mxu0
  %v90 = vadd.f32 %v29, %v89
  %v91 = vpop.f32.mrb[0].mxu0
  %92 = vdwg.mxu0
  %v93 = vld [vmem:[%s3] sm:$0xf]
  %v94 = vld [vmem:[%s3 + $0x4] sm:$0xf]
  %v95 = vunpack.c.l.bf16 %v93
  %v96 = vunpack.c.l.bf16 %v94
  %v97 = vadd.f32 %v87, %v95
  %v98 = vadd.f32 %v90, %v96
  %v99 = vpack.c.bf16 %v98, %v97
  %v101 = vunpack.c.l.b16 %v99
  %v102 = vunpack.c.h.b16 %v99
  %v103 = vpack.c.b16 %v101, %v101
  %v104 = vpack.c.b16 %v102, %v102
  %vm107 = vcmask 257024
  %108 = vst.msk [vmem:[%s4] sm:$0xf] %vm107, %v103
  %109 = vst.msk [vmem:[%s4 + $0x4] sm:$0xf] %vm107, %v104
  // Predicated region
  $region18: #{clip_vitb16_forward.29} parent=0 // pred_check
    _
  $region19: #{clip_vitb16_forward.29} parent=0 // pred_check_branch
    %111 = sbr.rel (0) target = $region21
  $region20: #{clip_vitb16_forward.29} parent=0 // pred_region
    _
  $region21: #{clip_vitb16_forward.29} parent=0 // pred_fallthru
    _
  // Predicated region
  $region22: #{clip_vitb16_forward.29} parent=0 // pred_check
    _
  $region23: #{clip_vitb16_forward.29} parent=0 // pred_check_branch
    %113 = sbr.rel (0) target = $region25
  $region24: #{clip_vitb16_forward.29} parent=0 // pred_region
    _
  $region25: #{clip_vitb16_forward.29} parent=0 // pred_fallthru
    _

// kernel: clip_vitb16_forward.49
$region0: #{clip_vitb16_forward.49}
  #allocation0 [shape = 'u32[]', space=smem, size = 0x4, offset = 0x4, fixed_abs, tag = 'smem constant byte address 0x4 - core index']
  #allocation1 [shape = 'u32[144,128]{1,0:T(1,128)}', space=vmem, size = 0x12000, scoped, tag = 'internal scratch']
  #allocation2 [shape = 'f32[1,1]{1,0:T(1,128)S(1)}', space=vmem, size = 0x200, scoped, tag = 'scoped memory for clip_vitb16_forward.49']
  %s0 = inlined_call_operand.vmem [shape: f32[2,16], index: 0, kind: input, shape index: {}]
  %s1 = inlined_call_operand.vmem [shape: f32[2,16], index: 1, kind: input, shape index: {}]
  %s2 = inlined_call_operand.<no memory space> [shape: f32[1,1], index: 2, kind: input, shape index: {}]
  %s3 = inlined_call_operand.vmem [shape: f32[2,2], index: 3, kind: output, shape index: {}]
  %s4 = sld [smem:[#allocation0]]
  $region22: #{clip_vitb16_forward.49} parent=0
    _
  %s6 = ssub.s32 1, %s4
  %s7 = scalar_select 0, %s6, %s4
  %v8 = vstv %s2
  %9 = vst [vmem:[#allocation2] sm:$0x1] %v8
  // Predicated region
  $region2: #{clip_vitb16_forward.49} parent=0 // pred_check
    _
  $region3: #{clip_vitb16_forward.49} parent=0 // pred_check_branch
    %11 = sbr.rel (0) target = $region5
  $region4: #{clip_vitb16_forward.49} parent=0 // pred_region
    _
  $region5: #{clip_vitb16_forward.49} parent=0 // pred_fallthru
    _
  // Predicated region
  $region6: #{clip_vitb16_forward.49} parent=0 // pred_check
    _
  $region7: #{clip_vitb16_forward.49} parent=0 // pred_check_branch
    %13 = sbr.rel (0) target = $region9
  $region8: #{clip_vitb16_forward.49} parent=0 // pred_region
    _
  $region9: #{clip_vitb16_forward.49} parent=0 // pred_fallthru
    _
  // Predicated region
  $region10: #{clip_vitb16_forward.49} parent=0 // pred_check
    _
  $region11: #{clip_vitb16_forward.49} parent=0 // pred_check_branch
    %15 = sbr.rel (0) target = $region13
  $region12: #{clip_vitb16_forward.49} parent=0 // pred_region
    _
  $region13: #{clip_vitb16_forward.49} parent=0 // pred_fallthru
    _
  %v16 = vld [vmem:[%s0] sm:$0x3]
  %v17 = vld [vmem:[%s1] sm:$0x3]
  %v18 = vmul.f32 %v16, %v16
  %vm19 = vcmask 123904
  %v20 = vsel %vm19, %v18, 0.0
  %21 = vadd.xlane.f32.xlu0 %v20
  %v22 = vpop.xlane.xlu0 %21
  %v23 = vadd.f32 %v22, 1e-12
  %v24 = vrsqrt.pop %v23
  %v25 = vmul.f32 %v16, %v24
  %v26 = vmul.f32 %v17, %v17
  %v27 = vsel %vm19, %v26, 0.0
  %28 = vadd.xlane.f32.xlu0 %v27
  %v29 = vpop.xlane.xlu0 %28
  %v30 = vadd.f32 %v29, 1e-12
  %v31 = vrsqrt.pop %v30
  %v32 = vmul.f32 %v17, %v31
  %vm33 = vcmask 130048
  %v35 = vsel %vm33, %v25, 0
  %v38 = vsel %vm33, %v32, 0
  %40 = vmatprep.subr.mxu0 0.0
  %41 = vmatpush1.xpose.msra.mxu0 %v38
  %42 = vmatprep.subr.mxu0 0.0
  %43 = vmatpush1.xpose.msra.mxu0 0.0
  %44 = vmatprep.subr.mxu0 0.0
  %45 = vmatpush1.xpose.msra.mxu0 0.0
  %46 = vmatprep.subr.mxu0 0.0
  %47 = vmatpush1.xpose.msra.mxu0 0.0
  %48 = vmatprep.subr.mxu0 0.0
  %49 = vmatpush1.xpose.msra.mxu0 0.0
  %50 = vmatprep.subr.mxu0 0.0
  %51 = vmatpush1.xpose.msra.mxu0 0.0
  %52 = vmatprep.subr.mxu0 0.0
  %53 = vmatpush1.xpose.msra.mxu0 0.0
  %54 = vmatprep.subr.mxu0 0.0
  %55 = vmatpush1.xpose.msra.mxu0 0.0
  %56 = vmatprep.subr.mxu0 0.0
  %57 = vmatpush1.xpose.msra.mxu0 0.0
  %58 = vmatprep.subr.mxu0 0.0
  %59 = vmatpush1.xpose.msra.mxu0 0.0
  %60 = vmatprep.subr.mxu0 0.0
  %61 = vmatpush1.xpose.msra.mxu0 0.0
  %62 = vmatprep.subr.mxu0 0.0
  %63 = vmatpush1.xpose.msra.mxu0 0.0
  %64 = vmatprep.subr.mxu0 0.0
  %65 = vmatpush1.xpose.msra.mxu0 0.0
  %66 = vmatprep.subr.mxu0 0.0
  %67 = vmatpush1.xpose.msra.mxu0 0.0
  %68 = vmatprep.subr.mxu0 0.0
  %69 = vmatpush1.xpose.msra.mxu0 0.0
  %70 = vmatprep.subr.mxu0 0.0
  %71 = vmatpush1.xpose.msra.mxu0 0.0
  %72 = vmatprep.subr.mxu0 0.0
  %73 = vmatpush1.xpose.msra.mxu0 0.0
  %74 = vmatprep.subr.mxu0 0.0
  %75 = vmatpush1.xpose.msra.mxu0 0.0
  %76 = vmatprep.subr.mxu0 0.0
  %77 = vmatpush1.xpose.msra.mxu0 0.0
  %78 = vmatprep.subr.mxu0 0.0
  %79 = vmatpush1.xpose.msra.mxu0 0.0
  %80 = vmatprep.subr.mxu0 0.0
  %81 = vmatpush1.xpose.msra.mxu0 0.0
  %82 = vmatprep.subr.mxu0 0.0
  %83 = vmatpush1.xpose.msra.mxu0 0.0
  %84 = vmatprep.subr.mxu0 0.0
  %85 = vmatpush1.xpose.msra.mxu0 0.0
  %86 = vmatprep.subr.mxu0 0.0
  %87 = vmatpush1.xpose.msra.mxu0 0.0
  %88 = vmatprep.subr.mxu0 0.0
  %89 = vmatpush1.xpose.msra.mxu0 0.0
  %90 = vmatprep.subr.mxu0 0.0
  %91 = vmatpush1.xpose.msra.mxu0 0.0
  %92 = vmatprep.subr.mxu0 0.0
  %93 = vmatpush1.xpose.msra.mxu0 0.0
  %94 = vmatprep.subr.mxu0 0.0
  %95 = vmatpush1.xpose.msra.mxu0 0.0
  %96 = vmatprep.subr.mxu0 0.0
  %97 = vmatpush1.xpose.msra.mxu0 0.0
  %98 = vmatprep.subr.mxu0 0.0
  %99 = vmatpush1.xpose.msra.mxu0 0.0
  %100 = vmatprep.subr.mxu0 0.0
  %101 = vmatpush1.xpose.msra.mxu0 0.0
  %102 = vmatprep.subr.mxu0 0.0
  %103 = vmatpush1.xpose.msra.mxu0 0.0
  %104 = vmatprep.mubr.f32.mxu0 0.0
  %105 = vmatmul.mubr.f32.gmra.mrb[0].mxu0 %v35
  %v106 = vpop.f32.mrb[0].mxu0
  %v107 = vadd.f32 0.0, %v106
  %v108 = vpop.f32.mrb[0].mxu0
  %109 = vdwg.mxu0
  %v110 = vld [vmem:[#allocation2] sm:$0x1]
  %v111 = vmul.f32 %v110, 1.442695
  %v112 = vpow.pop %v111
  %v114 = vlaneseq
  %v115 = vshrl.u32 %v114, 7
  %v116 = vsub.s32 0, %v115
  %v117 = vrot.slane %v112, %v116
  %118 = vset.pattern.permute.xlu0 0
  %119 = vperm.xlu0 %118, %v117
  %v120 = vpop.permute.xlu0 %119
  %v122 = vmul.f32 %v107, %v120
  %vm123 = vcmask 9216
  %124 = vst.msk [vmem:[%s3] sm:$0x3] %vm123, %v122
  // Predicated region
  $region14: #{clip_vitb16_forward.49} parent=0 // pred_check
    _
  $region15: #{clip_vitb16_forward.49} parent=0 // pred_check_branch
    %126 = sbr.rel (0) target = $region17
  $region16: #{clip_vitb16_forward.49} parent=0 // pred_region
    _
  $region17: #{clip_vitb16_forward.49} parent=0 // pred_fallthru
    _
  // Predicated region
  $region18: #{clip_vitb16_forward.49} parent=0 // pred_check
    _
  $region19: #{clip_vitb16_forward.49} parent=0 // pred_check_branch
    %128 = sbr.rel (0) target = $region21
  $region20: #{clip_vitb16_forward.49} parent=0 // pred_region
    _
  $region21: #{clip_vitb16_forward.49} parent=0 // pred_fallthru
    _

// kernel: clip_vitb16_forward.37
$region0: #{clip_vitb16_forward.37}
  #allocation0 [shape = 'u32[]', space=smem, size = 0x4, offset = 0x4, fixed_abs, tag = 'smem constant byte address 0x4 - core index']
  #allocation1 [shape = 'u32[144,128]{1,0:T(1,128)}', space=vmem, size = 0x12000, scoped, tag = 'internal scratch']
  %s0 = inlined_call_operand.vmem [shape: bf16[8,32], index: 0, kind: input, shape index: {}]
  %s1 = inlined_call_operand.vmem [shape: f32[1,32], index: 1, kind: input, shape index: {}]
  %s2 = inlined_call_operand.vmem [shape: f32[1,32], index: 2, kind: input, shape index: {}]
  %s3 = inlined_call_operand.vmem [shape: bf16[32,16], index: 3, kind: input, shape index: {}]
  %s4 = inlined_call_operand.vmem [shape: f32[1,16], index: 4, kind: input, shape index: {}]
  %s5 = inlined_call_operand.vmem [shape: f32[8,16], index: 5, kind: output, shape index: {}]
  %s6 = sld [smem:[#allocation0]]
  $region30: #{clip_vitb16_forward.37} parent=0
    _
  %s8 = ssub.s32 1, %s6
  %s9 = scalar_select 0, %s8, %s6
  // Predicated region
  $region2: #{clip_vitb16_forward.37} parent=0 // pred_check
    _
  $region3: #{clip_vitb16_forward.37} parent=0 // pred_check_branch
    %11 = sbr.rel (0) target = $region5
  $region4: #{clip_vitb16_forward.37} parent=0 // pred_region
    _
  $region5: #{clip_vitb16_forward.37} parent=0 // pred_fallthru
    _
  // Predicated region
  $region6: #{clip_vitb16_forward.37} parent=0 // pred_check
    _
  $region7: #{clip_vitb16_forward.37} parent=0 // pred_check_branch
    %13 = sbr.rel (0) target = $region9
  $region8: #{clip_vitb16_forward.37} parent=0 // pred_region
    _
  $region9: #{clip_vitb16_forward.37} parent=0 // pred_fallthru
    _
  // Predicated region
  $region10: #{clip_vitb16_forward.37} parent=0 // pred_check
    _
  $region11: #{clip_vitb16_forward.37} parent=0 // pred_check_branch
    %15 = sbr.rel (0) target = $region13
  $region12: #{clip_vitb16_forward.37} parent=0 // pred_region
    _
  $region13: #{clip_vitb16_forward.37} parent=0 // pred_fallthru
    _
  // Predicated region
  $region14: #{clip_vitb16_forward.37} parent=0 // pred_check
    _
  $region15: #{clip_vitb16_forward.37} parent=0 // pred_check_branch
    %17 = sbr.rel (0) target = $region17
  $region16: #{clip_vitb16_forward.37} parent=0 // pred_region
    _
  $region17: #{clip_vitb16_forward.37} parent=0 // pred_fallthru
    _
  // Predicated region
  $region18: #{clip_vitb16_forward.37} parent=0 // pred_check
    _
  $region19: #{clip_vitb16_forward.37} parent=0 // pred_check_branch
    %19 = sbr.rel (0) target = $region21
  $region20: #{clip_vitb16_forward.37} parent=0 // pred_region
    _
  $region21: #{clip_vitb16_forward.37} parent=0 // pred_fallthru
    _
  %v21 = vld [vmem:[%s0] sm:$0xf]
  %v22 = vunpack.c.l.bf16 %v21
  %vm23 = vcmask 261120
  %v24 = vsel %vm23, %v22, 0.0
  %25 = vadd.xlane.f32.xlu0 %v24
  %v26 = vpop.xlane.xlu0 %25
  %v27 = vrcp.pop 32.0
  %v28 = vmul.f32 %v26, %v27
  %v29 = vsub.f32 %v22, %v28
  %v30 = vmul.f32 %v29, %v29
  %v31 = vsel %vm23, %v30, 0.0
  %32 = vadd.xlane.f32.xlu0 %v31
  %v33 = vpop.xlane.xlu0 %32
  %v34 = vmul.f32 %v33, %v27
  %v35 = vadd.f32 %v34, 1e-05
  %v36 = vrsqrt.pop %v35
  %v37 = vmul.f32 %v29, %v36
  %v38 = vld [vmem:[%s1] sm:$0x1]
  %v40 = vlaneseq
  %v41 = vshrl.u32 %v40, 7
  %v42 = vsub.s32 0, %v41
  %v43 = vrot.slane %v38, %v42
  %v45 = vmul.f32 %v37, %v43
  %v46 = vld [vmem:[%s2] sm:$0x1]
  %v48 = vlaneseq
  %v49 = vshrl.u32 %v48, 7
  %v50 = vsub.s32 0, %v49
  %v51 = vrot.slane %v46, %v50
  %v53 = vadd.f32 %v45, %v51
  %v54 = vpack.c.bf16 %v53, %v53
  %v55 = vld [vmem:[%s3] sm:$0xf]
  %v56 = vld [vmem:[%s3 + $0x4] sm:$0xf]
  %v57 = vld [vmem:[%s3 + $0x8] sm:$0xf]
  %v58 = vld [vmem:[%s3 + $0xc] sm:$0xf]
  %v59 = vld [vmem:[%s4] sm:$0x1]
  %v61 = vlaneseq
  %v62 = vshrl.u32 %v61, 7
  %v63 = vsub.s32 0, %v62
  %v64 = vrot.slane %v59, %v63
  %v70 = vunpack.c.l.b16 %v55
  %v71 = vunpack.c.l.b16 %v56
  %v72 = vunpack.c.l.b16 %v57
  %v73 = vunpack.c.l.b16 %v58
  %v74 = vpack.c.b16 %v71, %v70
  %v75 = vpack.c.b16 %v73, %v72
  %v79 = vsel %vm23, %v54, 0
  %81 = vmatprep.subr.bf16.mxu0 0
  %82 = vmatpush1.bf16.msra.mxu0 %v74
  %83 = vmatprep.subr.bf16.mxu0 0
  %84 = vmatpush1.bf16.msra.mxu0 %v75
  %85 = vmatprep.subr.bf16.mxu0 0
  %86 = vmatpush1.bf16.msra.mxu0 0
  %87 = vmatprep.subr.bf16.mxu0 0
  %88 = vmatpush1.bf16.msra.mxu0 0
  %89 = vmatprep.subr.bf16.mxu0 0
  %90 = vmatpush1.bf16.msra.mxu0 0
  %91 = vmatprep.subr.bf16.mxu0 0
  %92 = vmatpush1.bf16.msra.mxu0 0
  %93 = vmatprep.subr.bf16.mxu0 0
  %94 = vmatpush1.bf16.msra.mxu0 0
  %95 = vmatprep.subr.bf16.mxu0 0
  %96 = vmatpush1.bf16.msra.mxu0 0
  %97 = vmatprep.subr.bf16.mxu0 0
  %98 = vmatpush1.bf16.msra.mxu0 0
  %99 = vmatprep.subr.bf16.mxu0 0
  %100 = vmatpush1.bf16.msra.mxu0 0
  %101 = vmatprep.subr.bf16.mxu0 0
  %102 = vmatpush1.bf16.msra.mxu0 0
  %103 = vmatprep.subr.bf16.mxu0 0
  %104 = vmatpush1.bf16.msra.mxu0 0
  %105 = vmatprep.subr.bf16.mxu0 0
  %106 = vmatpush1.bf16.msra.mxu0 0
  %107 = vmatprep.subr.bf16.mxu0 0
  %108 = vmatpush1.bf16.msra.mxu0 0
  %109 = vmatprep.subr.bf16.mxu0 0
  %110 = vmatpush1.bf16.msra.mxu0 0
  %111 = vmatprep.subr.bf16.mxu0 0
  %112 = vmatpush1.bf16.msra.mxu0 0
  %113 = vmatprep.mubr.bf16.mxu0 0
  %114 = vmatmul.mubr.bf16.gmra.mrb[0].mxu0 %v79
  %v115 = vpop.f32.mrb[0].mxu0
  %v116 = vadd.f32 %v64, %v115
  %v117 = vpop.f32.mrb[0].mxu0
  %v118 = vpop.f32.mrb[0].mxu0
  %v119 = vpop.f32.mrb[0].mxu0
  %120 = vdwg.mxu0
  %vm121 = vcmask 130048
  %122 = vst.msk [vmem:[%s5] sm:$0xff] %vm121, %v116
  // Predicated region
  $region22: #{clip_vitb16_forward.37} parent=0 // pred_check
    _
  $region23: #{clip_vitb16_forward.37} parent=0 // pred_check_branch
    %124 = sbr.rel (0) target = $region25
  $region24: #{clip_vitb16_forward.37} parent=0 // pred_region
    _
  $region25: #{clip_vitb16_forward.37} parent=0 // pred_fallthru
    _
  // Predicated region
  $region26: #{clip_vitb16_forward.37} parent=0 // pred_check
    _
  $region27: #{clip_vitb16_forward.37} parent=0 // pred_check_branch
    %126 = sbr.rel (0) target = $region29
  $region28: #{clip_vitb16_forward.37} parent=0 // pred_region
    _
  $region29: #{clip_vitb16_forward.37} parent=0 // pred_fallthru
    _

// kernel: clip_vitb16_forward.39
$region0: #{clip_vitb16_forward.39}
  #allocation0 [shape = 'u32[]', space=smem, size = 0x4, offset = 0x4, fixed_abs, tag = 'smem constant byte address 0x4 - core index']
  #allocation1 [shape = 'u32[144,128]{1,0:T(1,128)}', space=vmem, size = 0x12000, scoped, tag = 'internal scratch']
  %s0 = inlined_call_operand.vmem [shape: bf16[2,8,96], index: 0, kind: input, shape index: {}]
  %s1 = inlined_call_operand.vmem [shape: bf16[2,8,32], index: 1, kind: output, shape index: {}]
  %s2 = sld [smem:[#allocation0]]
  $region37: #{clip_vitb16_forward.39} parent=0
    _
  %s4 = ssub.s32 1, %s2
  %s5 = scalar_select 0, %s4, %s2
  loop: start=0, step=1, limit=4
  $region2: #{clip_vitb16_forward.39} parent=0 // loop_pre_header
    _
  $region3: #{clip_vitb16_forward.39} parent=0 // loop_header
    %s7 = sphi 0, %s11
    %p8 = scmp.ge.s32.totalorder %s7, 4
    %s17 = sphi 0, %s19
    %s20 = sphi 0, %s17
    %s21 = sphi 0, %s20
    %s37 = sphi 0, %s21
    %s43 = sphi 0, %s45
    %s46 = sphi 0, %s43
    %s47 = sphi 0, %s46
    %s63 = sphi 0, %s47
  $region4: #{clip_vitb16_forward.39} parent=0 // loop_header_branch
    %10 = sbr.rel (%p8) target = $region8
  $region5: #{clip_vitb16_forward.39} parent=0 // loop_body
    %s12 = ssub.s32 %s7, 1
    %s13 = ssub.s32 %s7, 2
    %s14 = sadd.s32 %s7, 1
    %s15 = ssub.s32 %s7, %s14
    %p16 = scmp.eq.s32.totalorder %s15, 0
    %s18 = sadd.s32 %s17, 1
    %s19 = scalar_select %p16, %s17, %s18
    %p22 = pneg %p16
    %p23 = scmp.eq.s32.totalorder %s7, 1
    %p24 = por %p22, %p23
    %p25 = scmp.ne.s32.totalorder %s17, %s20
    %p26 = scmp.eq.s32.totalorder %s7, 0
    %p27 = por %p25, %p26
    %p28 = scmp.ne.s32.totalorder %s17, %s20
    %p29 = scmp.eq.s32.totalorder %s12, 1
    %p30 = por %p28, %p29
    %p31 = scmp.ne.s32.totalorder %s20, %s21
    %p32 = scmp.eq.s32.totalorder %s12, 0
    %p33 = por %p31, %p32
    %p34 = scmp.ne.s32.totalorder %s20, %s21
    %p35 = scmp.eq.s32.totalorder %s13, 1
    %p36 = por %p34, %p35
    %p38 = scmp.ne.s32.totalorder %s21, %s37
    %p39 = scmp.eq.s32.totalorder %s13, 0
    %p40 = por %p38, %p39
    %s41 = ssub.s32 %s7, %s14
    %p42 = scmp.eq.s32.totalorder %s41, 0
    %s44 = sadd.s32 %s43, 1
    %s45 = scalar_select %p42, %s43, %s44
    %p48 = pneg %p42
    %p49 = scmp.eq.s32.totalorder %s7, 1
    %p50 = por %p48, %p49
    %p51 = scmp.ne.s32.totalorder %s43, %s46
    %p52 = scmp.eq.s32.totalorder %s7, 0
    %p53 = por %p51, %p52
    %p54 = scmp.ne.s32.totalorder %s43, %s46
    %p55 = scmp.eq.s32.totalorder %s12, 1
    %p56 = por %p54, %p55
    %p57 = scmp.ne.s32.totalorder %s46, %s47
    %p58 = scmp.eq.s32.totalorder %s12, 0
    %p59 = por %p57, %p58
    %p60 = scmp.ne.s32.totalorder %s46, %s47
    %p61 = scmp.eq.s32.totalorder %s13, 1
    %p62 = por %p60, %p61
    %p64 = scmp.ne.s32.totalorder %s47, %s63
    %p65 = scmp.eq.s32.totalorder %s13, 0
    %p66 = por %p64, %p65
    %p67 = scmp.le.s32.totalorder 1, %s7
    %p68 = scmp.lt.s32.totalorder %s7, 3
    %p69 = pnand %p67, %p68
    %p70 = pneg %p69
    // Predicated region
    $region9: #{clip_vitb16_forward.39} parent=5 // pred_check
      _
    $region10: #{clip_vitb16_forward.39} parent=5 // pred_check_branch
      %72 = sbr.rel (%p69) target = $region12
    $region11: #{clip_vitb16_forward.39} parent=5 // pred_region
      %s73 = ssub.s32 %s7, 1
    $region12: #{clip_vitb16_forward.39} parent=5 // pred_fallthru
      _
    %p74 = scmp.lt.s32.totalorder %s7, 2
    // Predicated region
    $region13: #{clip_vitb16_forward.39} parent=5 // pred_check
      %p75 = pneg %p74
    $region14: #{clip_vitb16_forward.39} parent=5 // pred_check_branch
      %77 = sbr.rel (%p75) target = $region16
    $region15: #{clip_vitb16_forward.39} parent=5 // pred_region
      // Predicated region
      $region17: #{clip_vitb16_forward.39} parent=15 // pred_check
        %p78 = pneg %p27
      $region18: #{clip_vitb16_forward.39} parent=15 // pred_check_branch
        %80 = sbr.rel (%p78) target = $region20
      $region19: #{clip_vitb16_forward.39} parent=15 // pred_region
        %p81 = scmp.lt.s32.totalorder %s7, 1
        %s82 = scalar_select %p81, %s7, 1
        %s83 = smul.addr %s82, 4
        %s84 = scalar_lea.vmem %s0, %s83
      $region20: #{clip_vitb16_forward.39} parent=15 // pred_fallthru
        _
    $region16: #{clip_vitb16_forward.39} parent=5 // pred_fallthru
      _
    %p85 = scmp.le.s32.totalorder 1, %s7
    %p86 = scmp.lt.s32.totalorder %s7, 3
    %p87 = pnand %p85, %p86
    %p88 = pneg %p87
    // Predicated region
    $region21: #{clip_vitb16_forward.39} parent=5 // pred_check
      _
    $region22: #{clip_vitb16_forward.39} parent=5 // pred_check_branch
      %90 = sbr.rel (%p87) target = $region24
    $region23: #{clip_vitb16_forward.39} parent=5 // pred_region
      %s91 = ssub.s32 %s7, 1
      %p92 = scmp.lt.s32.totalorder %s12, 1
      %s93 = scalar_select %p92, %s12, 1
      %s94 = smul.addr %s93, 4
      %s95 = scalar_lea.vmem %s0, %s94
      %p96 = pneg %p33
      %p97 = pneg %p30
      %p98 = pneg %p59
      %p99 = pneg %p56
      %p100 = scmp.lt.s32.totalorder %s12, 1
      %s101 = scalar_select %p100, %s12, 1
      %s102 = smul.addr %s101, 4
      %s103 = scalar_lea.vmem %s1, %s102
      %p104 = scmp.lt.s32.totalorder %s12, 1
      %s105 = scalar_select %p104, %s12, 1
      %s106 = smul.addr %s105, 4
      %s107 = scalar_lea.vmem %s0, %s106
      %p108 = scmp.lt.s32.totalorder %s12, 1
      %s109 = scalar_select %p108, %s12, 1
      %s110 = smul.addr %s109, 4
      %s111 = scalar_lea.vmem %s1, %s110
      %v113 = vld [vmem:[%s107] sm:$0xf]
      %v114 = vlaneseq
      %v115 = vshrl.u32 %v114, 7
      %v116 = vlaneseq
      %v117 = vand.u32 %v116, 127
      %vm118 = vcmp.le.s32.totalorder %v117, %v115
      %v120 = vunpack.c.l.b16 %v113
      %v121 = vpack.c.b16 %v120, %v120
      %122 = vrot.lane.b32.xlu0 %v121, 96
      %v123 = vpop.permute.xlu0 %122
      %vm124 = vcmask 64512
      %v126 = vsel %vm124, %v113, 0
      %v129 = vsel %vm124, %v123, 0
      %131 = vmatprep.subr.bf16.mxu0 0
      %132 = vmatpush1.bf16.xpose.msra.mxu0 %v129
      %133 = vmatprep.subr.bf16.mxu0 0
      %134 = vmatpush1.bf16.xpose.msra.mxu0 0
      %135 = vmatprep.subr.bf16.mxu0 0
      %136 = vmatpush1.bf16.xpose.msra.mxu0 0
      %137 = vmatprep.subr.bf16.mxu0 0
      %138 = vmatpush1.bf16.xpose.msra.mxu0 0
      %139 = vmatprep.subr.bf16.mxu0 0
      %140 = vmatpush1.bf16.xpose.msra.mxu0 0
      %141 = vmatprep.subr.bf16.mxu0 0
      %142 = vmatpush1.bf16.xpose.msra.mxu0 0
      %143 = vmatprep.subr.bf16.mxu0 0
      %144 = vmatpush1.bf16.xpose.msra.mxu0 0
      %145 = vmatprep.subr.bf16.mxu0 0
      %146 = vmatpush1.bf16.xpose.msra.mxu0 0
      %147 = vmatprep.subr.bf16.mxu0 0
      %148 = vmatpush1.bf16.xpose.msra.mxu0 0
      %149 = vmatprep.subr.bf16.mxu0 0
      %150 = vmatpush1.bf16.xpose.msra.mxu0 0
      %151 = vmatprep.subr.bf16.mxu0 0
      %152 = vmatpush1.bf16.xpose.msra.mxu0 0
      %153 = vmatprep.subr.bf16.mxu0 0
      %154 = vmatpush1.bf16.xpose.msra.mxu0 0
      %155 = vmatprep.subr.bf16.mxu0 0
      %156 = vmatpush1.bf16.xpose.msra.mxu0 0
      %157 = vmatprep.subr.bf16.mxu0 0
      %158 = vmatpush1.bf16.xpose.msra.mxu0 0
      %159 = vmatprep.subr.bf16.mxu0 0
      %160 = vmatpush1.bf16.xpose.msra.mxu0 0
      %161 = vmatprep.subr.bf16.mxu0 0
      %162 = vmatpush1.bf16.xpose.msra.mxu0 0
      %163 = vmatprep.mubr.bf16.mxu0 0
      %164 = vmatmul.mubr.bf16.gmra.mrb[0].mxu0 %v126
      %v165 = vpop.f32.mrb[0].mxu0
      %v166 = vadd.f32 0.0, %v165
      %v167 = vpop.f32.mrb[0].mxu0
      %v168 = vpop.f32.mrb[0].mxu0
      %v169 = vpop.f32.mrb[0].mxu0
      %170 = vdwg.mxu0
      %v171 = vmul.f32 %v166, 0.35355338
      %v172 = vsel %vm118, %v171, -1e+30
      %v173 = vsel %vm124, %v172, -inf
      %174 = vmax.xlane.f32.xlu0 %v173
      %v175 = vpop.xlane.xlu0 %174
      %v176 = vsub.f32 %v172, %v175
      %v177 = vmul.f32 %v176, 1.442695
      %v178 = vpow.pop %v177
      %v179 = vsel %vm124, %v178, 0.0
      %180 = vadd.xlane.f32.xlu0 %v179
      %v181 = vpop.xlane.xlu0 %180
      %v182 = vrcp.pop %v181
      %v183 = vmul.f32 %v178, %v182
      %v184 = vpack.c.bf16 %v183, %v183
      %185 = vrot.lane.b32.xlu0 %v121, 64
      %v186 = vpop.permute.xlu0 %185
      %v188 = vsel %vm124, %v184, 0
      %vm190 = vcmask 1043456
      %v192 = vsel %vm190, %v186, 0
      %194 = vmatprep.subr.bf16.mxu0 0
      %195 = vmatpush1.bf16.msra.mxu0 %v192
      %196 = vmatprep.subr.bf16.mxu0 0
      %197 = vmatpush1.bf16.msra.mxu0 0
      %198 = vmatprep.subr.bf16.mxu0 0
      %199 = vmatpush1.bf16.msra.mxu0 0
      %200 = vmatprep.subr.bf16.mxu0 0
      %201 = vmatpush1.bf16.msra.mxu0 0
      %202 = vmatprep.subr.bf16.mxu0 0
      %203 = vmatpush1.bf16.msra.mxu0 0
      %204 = vmatprep.subr.bf16.mxu0 0
      %205 = vmatpush1.bf16.msra.mxu0 0
      %206 = vmatprep.subr.bf16.mxu0 0
      %207 = vmatpush1.bf16.msra.mxu0 0
      %208 = vmatprep.subr.bf16.mxu0 0
      %209 = vmatpush1.bf16.msra.mxu0 0
      %210 = vmatprep.subr.bf16.mxu0 0
      %211 = vmatpush1.bf16.msra.mxu0 0
      %212 = vmatprep.subr.bf16.mxu0 0
      %213 = vmatpush1.bf16.msra.mxu0 0
      %214 = vmatprep.subr.bf16.mxu0 0
      %215 = vmatpush1.bf16.msra.mxu0 0
      %216 = vmatprep.subr.bf16.mxu0 0
      %217 = vmatpush1.bf16.msra.mxu0 0
      %218 = vmatprep.subr.bf16.mxu0 0
      %219 = vmatpush1.bf16.msra.mxu0 0
      %220 = vmatprep.subr.bf16.mxu0 0
      %221 = vmatpush1.bf16.msra.mxu0 0
      %222 = vmatprep.subr.bf16.mxu0 0
      %223 = vmatpush1.bf16.msra.mxu0 0
      %224 = vmatprep.subr.bf16.mxu0 0
      %225 = vmatpush1.bf16.msra.mxu0 0
      %226 = vmatprep.mubr.bf16.mxu0 0
      %227 = vmatmul.mubr.bf16.gmra.mrb[0].mxu0 %v188
      %v228 = vpop.f32.mrb[0].mxu0
      %v229 = vadd.f32 0.0, %v228
      %v230 = vpop.f32.mrb[0].mxu0
      %v231 = vpop.f32.mrb[0].mxu0
      %v232 = vpop.f32.mrb[0].mxu0
      %233 = vdwg.mxu0
      %v234 = vpack.c.bf16 %v229, %v229
      %vm235 = vcmask 60416
      %236 = vst.msk [vmem:[%s111] sm:$0xf] %vm235, %v234
      %237 = vrot.lane.b32.xlu0 %v121, 120
      %v238 = vpop.permute.xlu0 %237
      %239 = vrot.lane.b32.xlu0 %v121, 88
      %v240 = vpop.permute.xlu0 %239
      %v242 = vsel %vm124, %v238, 0
      %v245 = vsel %vm124, %v240, 0
      %247 = vmatprep.subr.bf16.mxu0 0
      %248 = vmatpush1.bf16.xpose.msra.mxu0 %v245
      %249 = vmatprep.subr.bf16.mxu0 0
      %250 = vmatpush1.bf16.xpose.msra.mxu0 0
      %251 = vmatprep.subr.bf16.mxu0 0
      %252 = vmatpush1.bf16.xpose.msra.mxu0 0
      %253 = vmatprep.subr.bf16.mxu0 0
      %254 = vmatpush1.bf16.xpose.msra.mxu0 0
      %255 = vmatprep.subr.bf16.mxu0 0
      %256 = vmatpush1.bf16.xpose.msra.mxu0 0
      %257 = vmatprep.subr.bf16.mxu0 0
      %258 = vmatpush1.bf16.xpose.msra.mxu0 0
      %259 = vmatprep.subr.bf16.mxu0 0
      %260 = vmatpush1.bf16.xpose.msra.mxu0 0
      %261 = vmatprep.subr.bf16.mxu0 0
      %262 = vmatpush1.bf16.xpose.msra.mxu0 0
      %263 = vmatprep.subr.bf16.mxu0 0
      %264 = vmatpush1.bf16.xpose.msra.mxu0 0
      %265 = vmatprep.subr.bf16.mxu0 0
      %266 = vmatpush1.bf16.xpose.msra.mxu0 0
      %267 = vmatprep.subr.bf16.mxu0 0
      %268 = vmatpush1.bf16.xpose.msra.mxu0 0
      %269 = vmatprep.subr.bf16.mxu0 0
      %270 = vmatpush1.bf16.xpose.msra.mxu0 0
      %271 = vmatprep.subr.bf16.mxu0 0
      %272 = vmatpush1.bf16.xpose.msra.mxu0 0
      %273 = vmatprep.subr.bf16.mxu0 0
      %274 = vmatpush1.bf16.xpose.msra.mxu0 0
      %275 = vmatprep.subr.bf16.mxu0 0
      %276 = vmatpush1.bf16.xpose.msra.mxu0 0
      %277 = vmatprep.subr.bf16.mxu0 0
      %278 = vmatpush1.bf16.xpose.msra.mxu0 0
      %279 = vmatprep.mubr.bf16.mxu0 0
      %280 = vmatmul.mubr.bf16.gmra.mrb[0].mxu0 %v242
      %v281 = vpop.f32.mrb[0].mxu0
      %v282 = vadd.f32 0.0, %v281
      %v283 = vpop.f32.mrb[0].mxu0
      %v284 = vpop.f32.mrb[0].mxu0
      %v285 = vpop.f32.mrb[0].mxu0
      %286 = vdwg.mxu0
      %v287 = vmul.f32 %v282, 0.35355338
      %v288 = vsel %vm118, %v287, -1e+30
      %v289 = vsel %vm124, %v288, -inf
      %290 = vmax.xlane.f32.xlu0 %v289
      %v291 = vpop.xlane.xlu0 %290
      %v292 = vsub.f32 %v288, %v291
      %v293 = vmul.f32 %v292, 1.442695
      %v294 = vpow.pop %v293
      %v295 = vsel %vm124, %v294, 0.0
      %296 = vadd.xlane.f32.xlu0 %v295
      %v297 = vpop.xlane.xlu0 %296
      %v298 = vrcp.pop %v297
      %v299 = vmul.f32 %v294, %v298
      %v300 = vpack.c.bf16 %v299, %v299
      %301 = vrot.lane.b32.xlu0 %v121, 56
      %v302 = vpop.permute.xlu0 %301
      %v304 = vsel %vm124, %v300, 0
      %v307 = vsel %vm190, %v302, 0
      %309 = vmatprep.subr.bf16.mxu0 0
      %310 = vmatpush1.bf16.msra.mxu0 %v307
      %311 = vmatprep.subr.bf16.mxu0 0
      %312 = vmatpush1.bf16.msra.mxu0 0
      %313 = vmatprep.subr.bf16.mxu0 0
      %314 = vmatpush1.bf16.msra.mxu0 0
      %315 = vmatprep.subr.bf16.mxu0 0
      %316 = vmatpush1.bf16.msra.mxu0 0
      %317 = vmatprep.subr.bf16.mxu0 0
      %318 = vmatpush1.bf16.msra.mxu0 0
      %319 = vmatprep.subr.bf16.mxu0 0
      %320 = vmatpush1.bf16.msra.mxu0 0
      %321 = vmatprep.subr.bf16.mxu0 0
      %322 = vmatpush1.bf16.msra.mxu0 0
      %323 = vmatprep.subr.bf16.mxu0 0
      %324 = vmatpush1.bf16.msra.mxu0 0
      %325 = vmatprep.subr.bf16.mxu0 0
      %326 = vmatpush1.bf16.msra.mxu0 0
      %327 = vmatprep.subr.bf16.mxu0 0
      %328 = vmatpush1.bf16.msra.mxu0 0
      %329 = vmatprep.subr.bf16.mxu0 0
      %330 = vmatpush1.bf16.msra.mxu0 0
      %331 = vmatprep.subr.bf16.mxu0 0
      %332 = vmatpush1.bf16.msra.mxu0 0
      %333 = vmatprep.subr.bf16.mxu0 0
      %334 = vmatpush1.bf16.msra.mxu0 0
      %335 = vmatprep.subr.bf16.mxu0 0
      %336 = vmatpush1.bf16.msra.mxu0 0
      %337 = vmatprep.subr.bf16.mxu0 0
      %338 = vmatpush1.bf16.msra.mxu0 0
      %339 = vmatprep.subr.bf16.mxu0 0
      %340 = vmatpush1.bf16.msra.mxu0 0
      %341 = vmatprep.mubr.bf16.mxu0 0
      %342 = vmatmul.mubr.bf16.gmra.mrb[0].mxu0 %v304
      %v343 = vpop.f32.mrb[0].mxu0
      %v344 = vadd.f32 0.0, %v343
      %v345 = vpop.f32.mrb[0].mxu0
      %v346 = vpop.f32.mrb[0].mxu0
      %v347 = vpop.f32.mrb[0].mxu0
      %348 = vdwg.mxu0
      %v349 = vpack.c.bf16 %v344, %v344
      %v351 = vunpack.c.l.b16 %v349
      %v352 = vpack.c.b16 %v351, %v351
      %353 = vrot.lane.b32.xlu0 %v352, 8
      %v354 = vpop.permute.xlu0 %353
      %vm356 = vcmask 126016
      %357 = vst.msk [vmem:[%s111] sm:$0xf] %vm356, %v354
      %358 = vrot.lane.b32.xlu0 %v121, 112
      %v359 = vpop.permute.xlu0 %358
      %360 = vrot.lane.b32.xlu0 %v121, 80
      %v361 = vpop.permute.xlu0 %360
      %v363 = vsel %vm124, %v359, 0
      %v366 = vsel %vm124, %v361, 0
      %368 = vmatprep.subr.bf16.mxu0 0
      %369 = vmatpush1.bf16.xpose.msra.mxu0 %v366
      %370 = vmatprep.subr.bf16.mxu0 0
      %371 = vmatpush1.bf16.xpose.msra.mxu0 0
      %372 = vmatprep.subr.bf16.mxu0 0
      %373 = vmatpush1.bf16.xpose.msra.mxu0 0
      %374 = vmatprep.subr.bf16.mxu0 0
      %375 = vmatpush1.bf16.xpose.msra.mxu0 0
      %376 = vmatprep.subr.bf16.mxu0 0
      %377 = vmatpush1.bf16.xpose.msra.mxu0 0
      %378 = vmatprep.subr.bf16.mxu0 0
      %379 = vmatpush1.bf16.xpose.msra.mxu0 0
      %380 = vmatprep.subr.bf16.mxu0 0
      %381 = vmatpush1.bf16.xpose.msra.mxu0 0
      %382 = vmatprep.subr.bf16.mxu0 0
      %383 = vmatpush1.bf16.xpose.msra.mxu0 0
      %384 = vmatprep.subr.bf16.mxu0 0
      %385 = vmatpush1.bf16.xpose.msra.mxu0 0
      %386 = vmatprep.subr.bf16.mxu0 0
      %387 = vmatpush1.bf16.xpose.msra.mxu0 0
      %388 = vmatprep.subr.bf16.mxu0 0
      %389 = vmatpush1.bf16.xpose.msra.mxu0 0
      %390 = vmatprep.subr.bf16.mxu0 0
      %391 = vmatpush1.bf16.xpose.msra.mxu0 0
      %392 = vmatprep.subr.bf16.mxu0 0
      %393 = vmatpush1.bf16.xpose.msra.mxu0 0
      %394 = vmatprep.subr.bf16.mxu0 0
      %395 = vmatpush1.bf16.xpose.msra.mxu0 0
      %396 = vmatprep.subr.bf16.mxu0 0
      %397 = vmatpush1.bf16.xpose.msra.mxu0 0
      %398 = vmatprep.subr.bf16.mxu0 0
      %399 = vmatpush1.bf16.xpose.msra.mxu0 0
      %400 = vmatprep.mubr.bf16.mxu0 0
      %401 = vmatmul.mubr.bf16.gmra.mrb[0].mxu0 %v363
      %v402 = vpop.f32.mrb[0].mxu0
      %v403 = vadd.f32 0.0, %v402
      %v404 = vpop.f32.mrb[0].mxu0
      %v405 = vpop.f32.mrb[0].mxu0
      %v406 = vpop.f32.mrb[0].mxu0
      %407 = vdwg.mxu0
      %v408 = vmul.f32 %v403, 0.35355338
      %v409 = vsel %vm118, %v408, -1e+30
      %v410 = vsel %vm124, %v409, -inf
      %411 = vmax.xlane.f32.xlu0 %v410
      %v412 = vpop.xlane.xlu0 %411
      %v413 = vsub.f32 %v409, %v412
      %v414 = vmul.f32 %v413, 1.442695
      %v415 = vpow.pop %v414
      %v416 = vsel %vm124, %v415, 0.0
      %417 = vadd.xlane.f32.xlu0 %v416
      %v418 = vpop.xlane.xlu0 %417
      %v419 = vrcp.pop %v418
      %v420 = vmul.f32 %v415, %v419
      %v421 = vpack.c.bf16 %v420, %v420
      %422 = vrot.lane.b32.xlu0 %v121, 48
      %v423 = vpop.permute.xlu0 %422
      %v425 = vsel %vm124, %v421, 0
      %v428 = vsel %vm190, %v423, 0
      %430 = vmatprep.subr.bf16.mxu0 0
      %431 = vmatpush1.bf16.msra.mxu0 %v428
      %432 = vmatprep.subr.bf16.mxu0 0
      %433 = vmatpush1.bf16.msra.mxu0 0
      %434 = vmatprep.subr.bf16.mxu0 0
      %435 = vmatpush1.bf16.msra.mxu0 0
      %436 = vmatprep.subr.bf16.mxu0 0
      %437 = vmatpush1.bf16.msra.mxu0 0
      %438 = vmatprep.subr.bf16.mxu0 0
      %439 = vmatpush1.bf16.msra.mxu0 0
      %440 = vmatprep.subr.bf16.mxu0 0
      %441 = vmatpush1.bf16.msra.mxu0 0
      %442 = vmatprep.subr.bf16.mxu0 0
      %443 = vmatpush1.bf16.msra.mxu0 0
      %444 = vmatprep.subr.bf16.mxu0 0
      %445 = vmatpush1.bf16.msra.mxu0 0
      %446 = vmatprep.subr.bf16.mxu0 0
      %447 = vmatpush1.bf16.msra.mxu0 0
      %448 = vmatprep.subr.bf16.mxu0 0
      %449 = vmatpush1.bf16.msra.mxu0 0
      %450 = vmatprep.subr.bf16.mxu0 0
      %451 = vmatpush1.bf16.msra.mxu0 0
      %452 = vmatprep.subr.bf16.mxu0 0
      %453 = vmatpush1.bf16.msra.mxu0 0
      %454 = vmatprep.subr.bf16.mxu0 0
      %455 = vmatpush1.bf16.msra.mxu0 0
      %456 = vmatprep.subr.bf16.mxu0 0
      %457 = vmatpush1.bf16.msra.mxu0 0
      %458 = vmatprep.subr.bf16.mxu0 0
      %459 = vmatpush1.bf16.msra.mxu0 0
      %460 = vmatprep.subr.bf16.mxu0 0
      %461 = vmatpush1.bf16.msra.mxu0 0
      %462 = vmatprep.mubr.bf16.mxu0 0
      %463 = vmatmul.mubr.bf16.gmra.mrb[0].mxu0 %v425
      %v464 = vpop.f32.mrb[0].mxu0
      %v465 = vadd.f32 0.0, %v464
      %v466 = vpop.f32.mrb[0].mxu0
      %v467 = vpop.f32.mrb[0].mxu0
      %v468 = vpop.f32.mrb[0].mxu0
      %469 = vdwg.mxu0
      %v470 = vpack.c.bf16 %v465, %v465
      %v472 = vunpack.c.l.b16 %v470
      %v473 = vpack.c.b16 %v472, %v472
      %474 = vrot.lane.b32.xlu0 %v473, 16
      %v475 = vpop.permute.xlu0 %474
      %vm477 = vcmask 191616
      %478 = vst.msk [vmem:[%s111] sm:$0xf] %vm477, %v475
      %479 = vrot.lane.b32.xlu0 %v121, 104
      %v480 = vpop.permute.xlu0 %479
      %481 = vrot.lane.b32.xlu0 %v121, 72
      %v482 = vpop.permute.xlu0 %481
      %v484 = vsel %vm124, %v480, 0
      %v487 = vsel %vm124, %v482, 0
      %489 = vmatprep.subr.bf16.mxu0 0
      %490 = vmatpush1.bf16.xpose.msra.mxu0 %v487
      %491 = vmatprep.subr.bf16.mxu0 0
      %492 = vmatpush1.bf16.xpose.msra.mxu0 0
      %493 = vmatprep.subr.bf16.mxu0 0
      %494 = vmatpush1.bf16.xpose.msra.mxu0 0
      %495 = vmatprep.subr.bf16.mxu0 0
      %496 = vmatpush1.bf16.xpose.msra.mxu0 0
      %497 = vmatprep.subr.bf16.mxu0 0
      %498 = vmatpush1.bf16.xpose.msra.mxu0 0
      %499 = vmatprep.subr.bf16.mxu0 0
      %500 = vmatpush1.bf16.xpose.msra.mxu0 0
      %501 = vmatprep.subr.bf16.mxu0 0
      %502 = vmatpush1.bf16.xpose.msra.mxu0 0
      %503 = vmatprep.subr.bf16.mxu0 0
      %504 = vmatpush1.bf16.xpose.msra.mxu0 0
      %505 = vmatprep.subr.bf16.mxu0 0
      %506 = vmatpush1.bf16.xpose.msra.mxu0 0
      %507 = vmatprep.subr.bf16.mxu0 0
      %508 = vmatpush1.bf16.xpose.msra.mxu0 0
      %509 = vmatprep.subr.bf16.mxu0 0
      %510 = vmatpush1.bf16.xpose.msra.mxu0 0
      %511 = vmatprep.subr.bf16.mxu0 0
      %512 = vmatpush1.bf16.xpose.msra.mxu0 0
      %513 = vmatprep.subr.bf16.mxu0 0
      %514 = vmatpush1.bf16.xpose.msra.mxu0 0
      %515 = vmatprep.subr.bf16.mxu0 0
      %516 = vmatpush1.bf16.xpose.msra.mxu0 0
      %517 = vmatprep.subr.bf16.mxu0 0
      %518 = vmatpush1.bf16.xpose.msra.mxu0 0
      %519 = vmatprep.subr.bf16.mxu0 0
      %520 = vmatpush1.bf16.xpose.msra.mxu0 0
      %521 = vmatprep.mubr.bf16.mxu0 0
      %522 = vmatmul.mubr.bf16.gmra.mrb[0].mxu0 %v484
      %v523 = vpop.f32.mrb[0].mxu0
      %v524 = vadd.f32 0.0, %v523
      %v525 = vpop.f32.mrb[0].mxu0
      %v526 = vpop.f32.mrb[0].mxu0
      %v527 = vpop.f32.mrb[0].mxu0
      %528 = vdwg.mxu0
      %v529 = vmul.f32 %v524, 0.35355338
      %v530 = vsel %vm118, %v529, -1e+30
      %v531 = vsel %vm124, %v530, -inf
      %532 = vmax.xlane.f32.xlu0 %v531
      %v533 = vpop.xlane.xlu0 %532
      %v534 = vsub.f32 %v530, %v533
      %v535 = vmul.f32 %v534, 1.442695
      %v536 = vpow.pop %v535
      %v537 = vsel %vm124, %v536, 0.0
      %538 = vadd.xlane.f32.xlu0 %v537
      %v539 = vpop.xlane.xlu0 %538
      %v540 = vrcp.pop %v539
      %v541 = vmul.f32 %v536, %v540
      %v542 = vpack.c.bf16 %v541, %v541
      %543 = vrot.lane.b32.xlu0 %v121, 40
      %v544 = vpop.permute.xlu0 %543
      %v546 = vsel %vm124, %v542, 0
      %v549 = vsel %vm190, %v544, 0
      %551 = vmatprep.subr.bf16.mxu0 0
      %552 = vmatpush1.bf16.msra.mxu0 %v549
      %553 = vmatprep.subr.bf16.mxu0 0
      %554 = vmatpush1.bf16.msra.mxu0 0
      %555 = vmatprep.subr.bf16.mxu0 0
      %556 = vmatpush1.bf16.msra.mxu0 0
      %557 = vmatprep.subr.bf16.mxu0 0
      %558 = vmatpush1.bf16.msra.mxu0 0
      %559 = vmatprep.subr.bf16.mxu0 0
      %560 = vmatpush1.bf16.msra.mxu0 0
      %561 = vmatprep.subr.bf16.mxu0 0
      %562 = vmatpush1.bf16.msra.mxu0 0
      %563 = vmatprep.subr.bf16.mxu0 0
      %564 = vmatpush1.bf16.msra.mxu0 0
      %565 = vmatprep.subr.bf16.mxu0 0
      %566 = vmatpush1.bf16.msra.mxu0 0
      %567 = vmatprep.subr.bf16.mxu0 0
      %568 = vmatpush1.bf16.msra.mxu0 0
      %569 = vmatprep.subr.bf16.mxu0 0
      %570 = vmatpush1.bf16.msra.mxu0 0
      %571 = vmatprep.subr.bf16.mxu0 0
      %572 = vmatpush1.bf16.msra.mxu0 0
      %573 = vmatprep.subr.bf16.mxu0 0
      %574 = vmatpush1.bf16.msra.mxu0 0
      %575 = vmatprep.subr.bf16.mxu0 0
      %576 = vmatpush1.bf16.msra.mxu0 0
      %577 = vmatprep.subr.bf16.mxu0 0
      %578 = vmatpush1.bf16.msra.mxu0 0
      %579 = vmatprep.subr.bf16.mxu0 0
      %580 = vmatpush1.bf16.msra.mxu0 0
      %581 = vmatprep.subr.bf16.mxu0 0
      %582 = vmatpush1.bf16.msra.mxu0 0
      %583 = vmatprep.mubr.bf16.mxu0 0
      %584 = vmatmul.mubr.bf16.gmra.mrb[0].mxu0 %v546
      %v585 = vpop.f32.mrb[0].mxu0
      %v586 = vadd.f32 0.0, %v585
      %v587 = vpop.f32.mrb[0].mxu0
      %v588 = vpop.f32.mrb[0].mxu0
      %v589 = vpop.f32.mrb[0].mxu0
      %590 = vdwg.mxu0
      %v591 = vpack.c.bf16 %v586, %v586
      %v593 = vunpack.c.l.b16 %v591
      %v594 = vpack.c.b16 %v593, %v593
      %595 = vrot.lane.b32.xlu0 %v594, 24
      %v596 = vpop.permute.xlu0 %595
      %vm598 = vcmask 257216
      %599 = vst.msk [vmem:[%s111] sm:$0xf] %vm598, %v596
      %p600 = scmp.lt.s32.totalorder %s12, 1
      %s601 = scalar_select %p600, %s12, 1
      %s602 = smul.addr %s601, 4
      %s603 = scalar_lea.vmem %s1, %s602
      // Predicated region
      $region25: #{clip_vitb16_forward.39} parent=23 // pred_check
        %p604 = pneg %p56
      $region26: #{clip_vitb16_forward.39} parent=23 // pred_check_branch
        %606 = sbr.rel (%p604) target = $region28
      $region27: #{clip_vitb16_forward.39} parent=23 // pred_region
        _
      $region28: #{clip_vitb16_forward.39} parent=23 // pred_fallthru
        _
    $region24: #{clip_vitb16_forward.39} parent=5 // pred_fallthru
      _
    %p607 = scmp.le.s32.totalorder 2, %s7
    // Predicated region
    $region29: #{clip_vitb16_forward.39} parent=5 // pred_check
      %p608 = pneg %p607
    $region30: #{clip_vitb16_forward.39} parent=5 // pred_check_branch
      %610 = sbr.rel (%p608) target = $region32
    $region31: #{clip_vitb16_forward.39} parent=5 // pred_region
      %s611 = ssub.s32 %s7, 2
      // Predicated region
      $region33: #{clip_vitb16_forward.39} parent=31 // pred_check
        %p612 = pneg %p62
      $region34: #{clip_vitb16_forward.39} parent=31 // pred_check_branch
        %614 = sbr.rel (%p612) target = $region36
      $region35: #{clip_vitb16_forward.39} parent=31 // pred_region
        %p615 = scmp.lt.s32.totalorder %s13, 1
        %s616 = scalar_select %p615, %s13, 1
        %s617 = smul.addr %s616, 4
        %s618 = scalar_lea.vmem %s1, %s617
      $region36: #{clip_vitb16_forward.39} parent=31 // pred_fallthru
        _
    $region32: #{clip_vitb16_forward.39} parent=5 // pred_fallthru
      _
  $region6: #{clip_vitb16_forward.39} parent=0 // loop_footer
    %s11 = sadd.s32 1, %s7
  $region7: #{clip_vitb16_forward.39} parent=0 // loop_footer_branch
    %6 = sbr.rel target = $region3
  $region8: #{clip_vitb16_forward.39} parent=0 // loop_exit
    _

</llo_original>
